<compile_context>
chip_gen: v5e
topology: v5e:2x2
jax: 0.10.0
libtpu: 0.0.40
codegen_flags: <defaults>
</compile_context>

<pallas_src>
import functools

import jax
import jax.numpy as jnp
from jax import lax
from jax.experimental import pallas as pl
from jax.experimental.pallas import tpu as pltpu

EMB = 128      # embedding dim (LSTM input size)
HID = 256      # LSTM hidden size
OUT = 2        # number of classes
OUT_PAD = 128  # lane-dense padded logits width


def _names_classifier_kernel(ids_ref, emb_ref, wih_ref, whh_ref, b_ref,
                             w1_ref, b1_ref, w2p_ref, b2p_ref, out_ref,
                             *, T, B, vocab):
    # ---- fused embedding gather: one-hot @ table on the MXU ------------------
    ids = ids_ref[...]                                          # (T*B, 1) int32
    iota = lax.broadcasted_iota(jnp.int32, (T * B, vocab), 1)   # (T*B, vocab)
    onehot = (ids == iota).astype(jnp.float32)                  # (T*B, vocab)
    x_all = jnp.dot(onehot, emb_ref[...],
                    preferred_element_type=jnp.float32)         # (T*B, EMB)

    # ---- hoisted input projection: one batched matmul for all timesteps ------
    xproj = (jnp.dot(x_all, wih_ref[...], preferred_element_type=jnp.float32)
             + b_ref[...])                                      # (T*B, 4*HID)

    # ---- LSTM recurrence, fully unrolled inside one invocation ---------------
    def sigmoid(z):  # single EUP tanh instead of exp + divide
        return 0.5 * (jnp.tanh(0.5 * z) + 1.0)

    whh = whh_ref[...]
    h = jnp.zeros((B, HID), jnp.float32)
    c = jnp.zeros((B, HID), jnp.float32)
    for t in range(T):                                          # static unroll (T small)
        # gates order [i, f, g, o], matching torch.nn.LSTM
        g = xproj[t * B:(t + 1) * B, :] + jnp.dot(
            h, whh, preferred_element_type=jnp.float32)         # (B, 4*HID)
        i_g = sigmoid(g[:, 0 * HID:1 * HID])
        f_g = sigmoid(g[:, 1 * HID:2 * HID])
        g_g = jnp.tanh(g[:, 2 * HID:3 * HID])
        o_g = sigmoid(g[:, 3 * HID:4 * HID])
        c = f_g * c + i_g * g_g
        h = o_g * jnp.tanh(c)

    # ---- classifier head on the final hidden state (lane-dense padded) -------
    z1 = jnp.dot(h, w1_ref[...], preferred_element_type=jnp.float32) + b1_ref[...]
    z1 = jnp.maximum(z1, 0.0)
    out_ref[...] = (jnp.dot(z1, w2p_ref[...], preferred_element_type=jnp.float32)
                    + b2p_ref[...]).astype(out_ref.dtype)


def names_classifier_forward(ip, params):
    """ip: (T, B) int32 token ids (seq-major, like torch nn.LSTM default).
    Returns (1, B, 2) float32, matching `linear2(relu(linear1(h_n)))`."""
    T, B = ip.shape
    vocab, _ = params["embedding"].shape
    ids = ip.reshape(T * B, 1).astype(jnp.int32)

    # pad the tiny 2-wide head to a full 128-lane tile (sliced back below)
    w2p = jnp.zeros((HID, OUT_PAD), jnp.float32).at[:, :OUT].set(params["w2_t"])
    b2p = jnp.zeros((1, OUT_PAD), jnp.float32).at[:, :OUT].set(params["b2"])

    kernel = functools.partial(_names_classifier_kernel, T=T, B=B, vocab=vocab)

    def full(shape):
        return pl.BlockSpec(shape, lambda i, _s=shape: (0,) * len(_s))

    out = pl.pallas_call(
        kernel,
        out_shape=jax.ShapeDtypeStruct((B, OUT_PAD), jnp.float32),
        grid_spec=pltpu.PrefetchScalarGridSpec(
            num_scalar_prefetch=0,
            grid=(1,),                              # single invocation
            in_specs=[
                full((T * B, 1)),                   # token ids
                full((vocab, EMB)),                 # embedding table
                full((EMB, 4 * HID)),               # W_ih^T
                full((HID, 4 * HID)),               # W_hh^T
                full((1, 4 * HID)),                 # b_ih + b_hh
                full((HID, HID)),                   # W1^T
                full((1, HID)),                     # b1
                full((HID, OUT_PAD)),               # W2^T (padded)
                full((1, OUT_PAD)),                 # b2   (padded)
            ],
            out_specs=full((B, OUT_PAD)),
        ),
        compiler_params=pltpu.CompilerParams(
            dimension_semantics=("arbitrary",)),
    )(ids, params["embedding"], params["w_ih_t"], params["w_hh_t"],
      params["b_gates"], params["w1_t"], params["b1"], w2p, b2p)

    return out[:, :OUT][None]                       # (1, B, 2)


def names_classifier_ref(ip, params):
    """Pure-JAX reference (mirrors PyTorch forward), for correctness checking."""
    hp = jax.lax.Precision.HIGHEST
    emb = jnp.take(params["embedding"], ip, axis=0)             # (T, B, EMB)
    T, B, _ = emb.shape
    h = jnp.zeros((B, HID), jnp.float32)
    c = jnp.zeros((B, HID), jnp.float32)
    for t in range(T):
        g = (jnp.dot(emb[t], params["w_ih_t"], precision=hp)
             + jnp.dot(h, params["w_hh_t"], precision=hp) + params["b_gates"])
        i_g = jax.nn.sigmoid(g[:, 0 * HID:1 * HID])
        f_g = jax.nn.sigmoid(g[:, 1 * HID:2 * HID])
        g_g = jnp.tanh(g[:, 2 * HID:3 * HID])
        o_g = jax.nn.sigmoid(g[:, 3 * HID:4 * HID])
        c = f_g * c + i_g * g_g
        h = o_g * jnp.tanh(c)
    z1 = jnp.maximum(jnp.dot(h, params["w1_t"], precision=hp) + params["b1"], 0.0)
    return (jnp.dot(z1, params["w2_t"], precision=hp) + params["b2"])[None]


def init_params(key, vocab_size):
    ks = jax.random.split(key, 9)
    u = lambda k, shape, scale: jax.random.uniform(k, shape, jnp.float32, -scale, scale)
    kh = 1.0 / (HID ** 0.5)
    return {
        "embedding": jax.random.normal(ks[0], (vocab_size, EMB), jnp.float32),
        # PyTorch weight_ih_l0: (4H, E); stored transposed for x @ W^T
        "w_ih_t": u(ks[1], (EMB, 4 * HID), kh),
        "w_hh_t": u(ks[2], (HID, 4 * HID), kh),
        "b_gates": u(ks[3], (1, 4 * HID), kh) + u(ks[4], (1, 4 * HID), kh),  # b_ih + b_hh
        "w1_t": u(ks[5], (HID, HID), kh),
        "b1": u(ks[6], (1, HID), kh),
        "w2_t": u(ks[7], (HID, 2), kh),
        "b2": u(ks[8], (1, 2), kh),
    }


if __name__ == "__main__":
    key = jax.random.PRNGKey(0)
    k_param, k_ip = jax.random.split(key)

    VOCAB = 32
    T, B = 8, 8                                   # seq_len=8, batch=8
    params = init_params(k_param, VOCAB)
    ip = jax.random.randint(k_ip, (T, B), 0, VOCAB, dtype=jnp.int32)

    out = names_classifier_forward(ip, params)
    out = jax.block_until_ready(out)
    assert out.shape == (1, B, 2), out.shape

    ref = names_classifier_ref(ip, params)
    max_err = float(jnp.max(jnp.abs(out - ref)))
    assert jnp.allclose(out, ref, rtol=1e-2, atol=1e-2), max_err

    print("KERNEL_OK")
</pallas_src>

<mosaic_0001>
module attributes {stable_mosaic.version = 11 : i64} {
  func.func @_names_classifier_kernel(%arg0: i32, %arg1: memref<64x1xi32, #tpu.memory_space<vmem>>, %arg2: memref<32x128xf32, #tpu.memory_space<vmem>>, %arg3: memref<128x1024xf32, #tpu.memory_space<vmem>>, %arg4: memref<256x1024xf32, #tpu.memory_space<vmem>>, %arg5: memref<1x1024xf32, #tpu.memory_space<vmem>>, %arg6: memref<256x256xf32, #tpu.memory_space<vmem>>, %arg7: memref<1x256xf32, #tpu.memory_space<vmem>>, %arg8: memref<256x128xf32, #tpu.memory_space<vmem>>, %arg9: memref<1x128xf32, #tpu.memory_space<vmem>>, %arg10: memref<8x128xf32, #tpu.memory_space<vmem>>) attributes {dimension_semantics = [#tpu.dimension_semantics<arbitrary>], iteration_bounds = array<i64: 1>, scalar_prefetch = 0 : i64, scratch_operands = 0 : i64, tpu.core_type = #tpu.core_type<tc>, window_params = [{pipeline_mode = #tpu.pipeline_mode<synchronous>, transform_indices = @transform_0, window_bounds = array<i64: 64, 1>}, {pipeline_mode = #tpu.pipeline_mode<synchronous>, transform_indices = @transform_1, window_bounds = array<i64: 32, 128>}, {pipeline_mode = #tpu.pipeline_mode<synchronous>, transform_indices = @transform_2, window_bounds = array<i64: 128, 1024>}, {pipeline_mode = #tpu.pipeline_mode<synchronous>, transform_indices = @transform_3, window_bounds = array<i64: 256, 1024>}, {pipeline_mode = #tpu.pipeline_mode<synchronous>, transform_indices = @transform_4, window_bounds = array<i64: 1, 1024>}, {pipeline_mode = #tpu.pipeline_mode<synchronous>, transform_indices = @transform_5, window_bounds = array<i64: 256, 256>}, {pipeline_mode = #tpu.pipeline_mode<synchronous>, transform_indices = @transform_6, window_bounds = array<i64: 1, 256>}, {pipeline_mode = #tpu.pipeline_mode<synchronous>, transform_indices = @transform_7, window_bounds = array<i64: 256, 128>}, {pipeline_mode = #tpu.pipeline_mode<synchronous>, transform_indices = @transform_8, window_bounds = array<i64: 1, 128>}, {pipeline_mode = #tpu.pipeline_mode<synchronous>, transform_indices = @transform_9, window_bounds = array<i64: 8, 128>}]} {
    %c0 = arith.constant 0 : index
    %c0_0 = arith.constant 0 : index
    %0 = vector.load %arg1[%c0, %c0_0] : memref<64x1xi32, #tpu.memory_space<vmem>>, vector<64x1xi32>
    %1 = tpu.iota {dimensions = array<i32: 1>} : vector<64x32xi32>
    %2 = vector.broadcast %0 : vector<64x1xi32> to vector<64x32xi32>
    %3 = arith.cmpi eq, %2, %1 : vector<64x32xi32>
    %4 = arith.extui %3 : vector<64x32xi1> to vector<64x32xi32>
    %5 = arith.sitofp %4 : vector<64x32xi32> to vector<64x32xf32>
    %c0_1 = arith.constant 0 : index
    %c0_2 = arith.constant 0 : index
    %6 = vector.load %arg2[%c0_1, %c0_2] : memref<32x128xf32, #tpu.memory_space<vmem>>, vector<32x128xf32>
    %cst = arith.constant dense<0.000000e+00> : vector<64x128xf32>
    %7 = tpu.matmul %5, %6, %cst {dimension_numbers = #tpu.dot_dimension_numbers<[1], [0], [0], [1], [0, 0, 1, 1], [], []>} : vector<64x32xf32>, vector<32x128xf32>, vector<64x128xf32> -> vector<64x128xf32>
    %c0_3 = arith.constant 0 : index
    %c0_4 = arith.constant 0 : index
    %8 = vector.load %arg3[%c0_3, %c0_4] : memref<128x1024xf32, #tpu.memory_space<vmem>>, vector<128x1024xf32>
    %cst_5 = arith.constant dense<0.000000e+00> : vector<64x1024xf32>
    %9 = tpu.matmul %7, %8, %cst_5 {dimension_numbers = #tpu.dot_dimension_numbers<[1], [0], [0], [1], [0, 0, 1, 1], [], []>} : vector<64x128xf32>, vector<128x1024xf32>, vector<64x1024xf32> -> vector<64x1024xf32>
    %c0_6 = arith.constant 0 : index
    %c0_7 = arith.constant 0 : index
    %10 = vector.load %arg5[%c0_6, %c0_7] : memref<1x1024xf32, #tpu.memory_space<vmem>>, vector<1x1024xf32>
    %11 = vector.broadcast %10 : vector<1x1024xf32> to vector<64x1024xf32>
    %12 = arith.addf %9, %11 : vector<64x1024xf32>
    %c0_8 = arith.constant 0 : index
    %c0_9 = arith.constant 0 : index
    %13 = vector.load %arg4[%c0_8, %c0_9] : memref<256x1024xf32, #tpu.memory_space<vmem>>, vector<256x1024xf32>
    %cst_10 = arith.constant 0.000000e+00 : f32
    %14 = vector.broadcast %cst_10 : f32 to vector<8x256xf32>
    %cst_11 = arith.constant 0.000000e+00 : f32
    %15 = vector.broadcast %cst_11 : f32 to vector<8x256xf32>
    %16 = vector.extract_strided_slice %12 {offsets = [0, 0], sizes = [8, 1024], strides = [1, 1]} : vector<64x1024xf32> to vector<8x1024xf32>
    %cst_12 = arith.constant dense<0.000000e+00> : vector<8x1024xf32>
    %17 = tpu.matmul %14, %13, %cst_12 {dimension_numbers = #tpu.dot_dimension_numbers<[1], [0], [0], [1], [0, 0, 1, 1], [], []>} : vector<8x256xf32>, vector<256x1024xf32>, vector<8x1024xf32> -> vector<8x1024xf32>
    %18 = arith.addf %16, %17 : vector<8x1024xf32>
    %19 = vector.extract_strided_slice %18 {offsets = [0, 0], sizes = [8, 256], strides = [1, 1]} : vector<8x1024xf32> to vector<8x256xf32>
    %cst_13 = arith.constant 5.000000e-01 : f32
    %20 = vector.broadcast %cst_13 : f32 to vector<8x256xf32>
    %21 = arith.mulf %20, %19 : vector<8x256xf32>
    %22 = math.tanh %21 : vector<8x256xf32>
    %cst_14 = arith.constant 1.000000e+00 : f32
    %23 = vector.broadcast %cst_14 : f32 to vector<8x256xf32>
    %24 = arith.addf %22, %23 : vector<8x256xf32>
    %cst_15 = arith.constant 5.000000e-01 : f32
    %25 = vector.broadcast %cst_15 : f32 to vector<8x256xf32>
    %26 = arith.mulf %25, %24 : vector<8x256xf32>
    %27 = vector.extract_strided_slice %18 {offsets = [0, 256], sizes = [8, 256], strides = [1, 1]} : vector<8x1024xf32> to vector<8x256xf32>
    %cst_16 = arith.constant 5.000000e-01 : f32
    %28 = vector.broadcast %cst_16 : f32 to vector<8x256xf32>
    %29 = arith.mulf %28, %27 : vector<8x256xf32>
    %30 = math.tanh %29 : vector<8x256xf32>
    %cst_17 = arith.constant 1.000000e+00 : f32
    %31 = vector.broadcast %cst_17 : f32 to vector<8x256xf32>
    %32 = arith.addf %30, %31 : vector<8x256xf32>
    %cst_18 = arith.constant 5.000000e-01 : f32
    %33 = vector.broadcast %cst_18 : f32 to vector<8x256xf32>
    %34 = arith.mulf %33, %32 : vector<8x256xf32>
    %35 = vector.extract_strided_slice %18 {offsets = [0, 512], sizes = [8, 256], strides = [1, 1]} : vector<8x1024xf32> to vector<8x256xf32>
    %36 = math.tanh %35 : vector<8x256xf32>
    %37 = vector.extract_strided_slice %18 {offsets = [0, 768], sizes = [8, 256], strides = [1, 1]} : vector<8x1024xf32> to vector<8x256xf32>
    %cst_19 = arith.constant 5.000000e-01 : f32
    %38 = vector.broadcast %cst_19 : f32 to vector<8x256xf32>
    %39 = arith.mulf %38, %37 : vector<8x256xf32>
    %40 = math.tanh %39 : vector<8x256xf32>
    %cst_20 = arith.constant 1.000000e+00 : f32
    %41 = vector.broadcast %cst_20 : f32 to vector<8x256xf32>
    %42 = arith.addf %40, %41 : vector<8x256xf32>
    %cst_21 = arith.constant 5.000000e-01 : f32
    %43 = vector.broadcast %cst_21 : f32 to vector<8x256xf32>
    %44 = arith.mulf %43, %42 : vector<8x256xf32>
    %45 = arith.mulf %34, %15 : vector<8x256xf32>
    %46 = arith.mulf %26, %36 : vector<8x256xf32>
    %47 = arith.addf %45, %46 : vector<8x256xf32>
    %48 = math.tanh %47 : vector<8x256xf32>
    %49 = arith.mulf %44, %48 : vector<8x256xf32>
    %50 = vector.extract_strided_slice %12 {offsets = [8, 0], sizes = [8, 1024], strides = [1, 1]} : vector<64x1024xf32> to vector<8x1024xf32>
    %cst_22 = arith.constant dense<0.000000e+00> : vector<8x1024xf32>
    %51 = tpu.matmul %49, %13, %cst_22 {dimension_numbers = #tpu.dot_dimension_numbers<[1], [0], [0], [1], [0, 0, 1, 1], [], []>} : vector<8x256xf32>, vector<256x1024xf32>, vector<8x1024xf32> -> vector<8x1024xf32>
    %52 = arith.addf %50, %51 : vector<8x1024xf32>
    %53 = vector.extract_strided_slice %52 {offsets = [0, 0], sizes = [8, 256], strides = [1, 1]} : vector<8x1024xf32> to vector<8x256xf32>
    %cst_23 = arith.constant 5.000000e-01 : f32
    %54 = vector.broadcast %cst_23 : f32 to vector<8x256xf32>
    %55 = arith.mulf %54, %53 : vector<8x256xf32>
    %56 = math.tanh %55 : vector<8x256xf32>
    %cst_24 = arith.constant 1.000000e+00 : f32
    %57 = vector.broadcast %cst_24 : f32 to vector<8x256xf32>
    %58 = arith.addf %56, %57 : vector<8x256xf32>
    %cst_25 = arith.constant 5.000000e-01 : f32
    %59 = vector.broadcast %cst_25 : f32 to vector<8x256xf32>
    %60 = arith.mulf %59, %58 : vector<8x256xf32>
    %61 = vector.extract_strided_slice %52 {offsets = [0, 256], sizes = [8, 256], strides = [1, 1]} : vector<8x1024xf32> to vector<8x256xf32>
    %cst_26 = arith.constant 5.000000e-01 : f32
    %62 = vector.broadcast %cst_26 : f32 to vector<8x256xf32>
    %63 = arith.mulf %62, %61 : vector<8x256xf32>
    %64 = math.tanh %63 : vector<8x256xf32>
    %cst_27 = arith.constant 1.000000e+00 : f32
    %65 = vector.broadcast %cst_27 : f32 to vector<8x256xf32>
    %66 = arith.addf %64, %65 : vector<8x256xf32>
    %cst_28 = arith.constant 5.000000e-01 : f32
    %67 = vector.broadcast %cst_28 : f32 to vector<8x256xf32>
    %68 = arith.mulf %67, %66 : vector<8x256xf32>
    %69 = vector.extract_strided_slice %52 {offsets = [0, 512], sizes = [8, 256], strides = [1, 1]} : vector<8x1024xf32> to vector<8x256xf32>
    %70 = math.tanh %69 : vector<8x256xf32>
    %71 = vector.extract_strided_slice %52 {offsets = [0, 768], sizes = [8, 256], strides = [1, 1]} : vector<8x1024xf32> to vector<8x256xf32>
    %cst_29 = arith.constant 5.000000e-01 : f32
    %72 = vector.broadcast %cst_29 : f32 to vector<8x256xf32>
    %73 = arith.mulf %72, %71 : vector<8x256xf32>
    %74 = math.tanh %73 : vector<8x256xf32>
    %cst_30 = arith.constant 1.000000e+00 : f32
    %75 = vector.broadcast %cst_30 : f32 to vector<8x256xf32>
    %76 = arith.addf %74, %75 : vector<8x256xf32>
    %cst_31 = arith.constant 5.000000e-01 : f32
    %77 = vector.broadcast %cst_31 : f32 to vector<8x256xf32>
    %78 = arith.mulf %77, %76 : vector<8x256xf32>
    %79 = arith.mulf %68, %47 : vector<8x256xf32>
    %80 = arith.mulf %60, %70 : vector<8x256xf32>
    %81 = arith.addf %79, %80 : vector<8x256xf32>
    %82 = math.tanh %81 : vector<8x256xf32>
    %83 = arith.mulf %78, %82 : vector<8x256xf32>
    %84 = vector.extract_strided_slice %12 {offsets = [16, 0], sizes = [8, 1024], strides = [1, 1]} : vector<64x1024xf32> to vector<8x1024xf32>
    %cst_32 = arith.constant dense<0.000000e+00> : vector<8x1024xf32>
    %85 = tpu.matmul %83, %13, %cst_32 {dimension_numbers = #tpu.dot_dimension_numbers<[1], [0], [0], [1], [0, 0, 1, 1], [], []>} : vector<8x256xf32>, vector<256x1024xf32>, vector<8x1024xf32> -> vector<8x1024xf32>
    %86 = arith.addf %84, %85 : vector<8x1024xf32>
    %87 = vector.extract_strided_slice %86 {offsets = [0, 0], sizes = [8, 256], strides = [1, 1]} : vector<8x1024xf32> to vector<8x256xf32>
    %cst_33 = arith.constant 5.000000e-01 : f32
    %88 = vector.broadcast %cst_33 : f32 to vector<8x256xf32>
    %89 = arith.mulf %88, %87 : vector<8x256xf32>
    %90 = math.tanh %89 : vector<8x256xf32>
    %cst_34 = arith.constant 1.000000e+00 : f32
    %91 = vector.broadcast %cst_34 : f32 to vector<8x256xf32>
    %92 = arith.addf %90, %91 : vector<8x256xf32>
    %cst_35 = arith.constant 5.000000e-01 : f32
    %93 = vector.broadcast %cst_35 : f32 to vector<8x256xf32>
    %94 = arith.mulf %93, %92 : vector<8x256xf32>
    %95 = vector.extract_strided_slice %86 {offsets = [0, 256], sizes = [8, 256], strides = [1, 1]} : vector<8x1024xf32> to vector<8x256xf32>
    %cst_36 = arith.constant 5.000000e-01 : f32
    %96 = vector.broadcast %cst_36 : f32 to vector<8x256xf32>
    %97 = arith.mulf %96, %95 : vector<8x256xf32>
    %98 = math.tanh %97 : vector<8x256xf32>
    %cst_37 = arith.constant 1.000000e+00 : f32
    %99 = vector.broadcast %cst_37 : f32 to vector<8x256xf32>
    %100 = arith.addf %98, %99 : vector<8x256xf32>
    %cst_38 = arith.constant 5.000000e-01 : f32
    %101 = vector.broadcast %cst_38 : f32 to vector<8x256xf32>
    %102 = arith.mulf %101, %100 : vector<8x256xf32>
    %103 = vector.extract_strided_slice %86 {offsets = [0, 512], sizes = [8, 256], strides = [1, 1]} : vector<8x1024xf32> to vector<8x256xf32>
    %104 = math.tanh %103 : vector<8x256xf32>
    %105 = vector.extract_strided_slice %86 {offsets = [0, 768], sizes = [8, 256], strides = [1, 1]} : vector<8x1024xf32> to vector<8x256xf32>
    %cst_39 = arith.constant 5.000000e-01 : f32
    %106 = vector.broadcast %cst_39 : f32 to vector<8x256xf32>
    %107 = arith.mulf %106, %105 : vector<8x256xf32>
    %108 = math.tanh %107 : vector<8x256xf32>
    %cst_40 = arith.constant 1.000000e+00 : f32
    %109 = vector.broadcast %cst_40 : f32 to vector<8x256xf32>
    %110 = arith.addf %108, %109 : vector<8x256xf32>
    %cst_41 = arith.constant 5.000000e-01 : f32
    %111 = vector.broadcast %cst_41 : f32 to vector<8x256xf32>
    %112 = arith.mulf %111, %110 : vector<8x256xf32>
    %113 = arith.mulf %102, %81 : vector<8x256xf32>
    %114 = arith.mulf %94, %104 : vector<8x256xf32>
    %115 = arith.addf %113, %114 : vector<8x256xf32>
    %116 = math.tanh %115 : vector<8x256xf32>
    %117 = arith.mulf %112, %116 : vector<8x256xf32>
    %118 = vector.extract_strided_slice %12 {offsets = [24, 0], sizes = [8, 1024], strides = [1, 1]} : vector<64x1024xf32> to vector<8x1024xf32>
    %cst_42 = arith.constant dense<0.000000e+00> : vector<8x1024xf32>
    %119 = tpu.matmul %117, %13, %cst_42 {dimension_numbers = #tpu.dot_dimension_numbers<[1], [0], [0], [1], [0, 0, 1, 1], [], []>} : vector<8x256xf32>, vector<256x1024xf32>, vector<8x1024xf32> -> vector<8x1024xf32>
    %120 = arith.addf %118, %119 : vector<8x1024xf32>
    %121 = vector.extract_strided_slice %120 {offsets = [0, 0], sizes = [8, 256], strides = [1, 1]} : vector<8x1024xf32> to vector<8x256xf32>
    %cst_43 = arith.constant 5.000000e-01 : f32
    %122 = vector.broadcast %cst_43 : f32 to vector<8x256xf32>
    %123 = arith.mulf %122, %121 : vector<8x256xf32>
    %124 = math.tanh %123 : vector<8x256xf32>
    %cst_44 = arith.constant 1.000000e+00 : f32
    %125 = vector.broadcast %cst_44 : f32 to vector<8x256xf32>
    %126 = arith.addf %124, %125 : vector<8x256xf32>
    %cst_45 = arith.constant 5.000000e-01 : f32
    %127 = vector.broadcast %cst_45 : f32 to vector<8x256xf32>
    %128 = arith.mulf %127, %126 : vector<8x256xf32>
    %129 = vector.extract_strided_slice %120 {offsets = [0, 256], sizes = [8, 256], strides = [1, 1]} : vector<8x1024xf32> to vector<8x256xf32>
    %cst_46 = arith.constant 5.000000e-01 : f32
    %130 = vector.broadcast %cst_46 : f32 to vector<8x256xf32>
    %131 = arith.mulf %130, %129 : vector<8x256xf32>
    %132 = math.tanh %131 : vector<8x256xf32>
    %cst_47 = arith.constant 1.000000e+00 : f32
    %133 = vector.broadcast %cst_47 : f32 to vector<8x256xf32>
    %134 = arith.addf %132, %133 : vector<8x256xf32>
    %cst_48 = arith.constant 5.000000e-01 : f32
    %135 = vector.broadcast %cst_48 : f32 to vector<8x256xf32>
    %136 = arith.mulf %135, %134 : vector<8x256xf32>
    %137 = vector.extract_strided_slice %120 {offsets = [0, 512], sizes = [8, 256], strides = [1, 1]} : vector<8x1024xf32> to vector<8x256xf32>
    %138 = math.tanh %137 : vector<8x256xf32>
    %139 = vector.extract_strided_slice %120 {offsets = [0, 768], sizes = [8, 256], strides = [1, 1]} : vector<8x1024xf32> to vector<8x256xf32>
    %cst_49 = arith.constant 5.000000e-01 : f32
    %140 = vector.broadcast %cst_49 : f32 to vector<8x256xf32>
    %141 = arith.mulf %140, %139 : vector<8x256xf32>
    %142 = math.tanh %141 : vector<8x256xf32>
    %cst_50 = arith.constant 1.000000e+00 : f32
    %143 = vector.broadcast %cst_50 : f32 to vector<8x256xf32>
    %144 = arith.addf %142, %143 : vector<8x256xf32>
    %cst_51 = arith.constant 5.000000e-01 : f32
    %145 = vector.broadcast %cst_51 : f32 to vector<8x256xf32>
    %146 = arith.mulf %145, %144 : vector<8x256xf32>
    %147 = arith.mulf %136, %115 : vector<8x256xf32>
    %148 = arith.mulf %128, %138 : vector<8x256xf32>
    %149 = arith.addf %147, %148 : vector<8x256xf32>
    %150 = math.tanh %149 : vector<8x256xf32>
    %151 = arith.mulf %146, %150 : vector<8x256xf32>
    %152 = vector.extract_strided_slice %12 {offsets = [32, 0], sizes = [8, 1024], strides = [1, 1]} : vector<64x1024xf32> to vector<8x1024xf32>
    %cst_52 = arith.constant dense<0.000000e+00> : vector<8x1024xf32>
    %153 = tpu.matmul %151, %13, %cst_52 {dimension_numbers = #tpu.dot_dimension_numbers<[1], [0], [0], [1], [0, 0, 1, 1], [], []>} : vector<8x256xf32>, vector<256x1024xf32>, vector<8x1024xf32> -> vector<8x1024xf32>
    %154 = arith.addf %152, %153 : vector<8x1024xf32>
    %155 = vector.extract_strided_slice %154 {offsets = [0, 0], sizes = [8, 256], strides = [1, 1]} : vector<8x1024xf32> to vector<8x256xf32>
    %cst_53 = arith.constant 5.000000e-01 : f32
    %156 = vector.broadcast %cst_53 : f32 to vector<8x256xf32>
    %157 = arith.mulf %156, %155 : vector<8x256xf32>
    %158 = math.tanh %157 : vector<8x256xf32>
    %cst_54 = arith.constant 1.000000e+00 : f32
    %159 = vector.broadcast %cst_54 : f32 to vector<8x256xf32>
    %160 = arith.addf %158, %159 : vector<8x256xf32>
    %cst_55 = arith.constant 5.000000e-01 : f32
    %161 = vector.broadcast %cst_55 : f32 to vector<8x256xf32>
    %162 = arith.mulf %161, %160 : vector<8x256xf32>
    %163 = vector.extract_strided_slice %154 {offsets = [0, 256], sizes = [8, 256], strides = [1, 1]} : vector<8x1024xf32> to vector<8x256xf32>
    %cst_56 = arith.constant 5.000000e-01 : f32
    %164 = vector.broadcast %cst_56 : f32 to vector<8x256xf32>
    %165 = arith.mulf %164, %163 : vector<8x256xf32>
    %166 = math.tanh %165 : vector<8x256xf32>
    %cst_57 = arith.constant 1.000000e+00 : f32
    %167 = vector.broadcast %cst_57 : f32 to vector<8x256xf32>
    %168 = arith.addf %166, %167 : vector<8x256xf32>
    %cst_58 = arith.constant 5.000000e-01 : f32
    %169 = vector.broadcast %cst_58 : f32 to vector<8x256xf32>
    %170 = arith.mulf %169, %168 : vector<8x256xf32>
    %171 = vector.extract_strided_slice %154 {offsets = [0, 512], sizes = [8, 256], strides = [1, 1]} : vector<8x1024xf32> to vector<8x256xf32>
    %172 = math.tanh %171 : vector<8x256xf32>
    %173 = vector.extract_strided_slice %154 {offsets = [0, 768], sizes = [8, 256], strides = [1, 1]} : vector<8x1024xf32> to vector<8x256xf32>
    %cst_59 = arith.constant 5.000000e-01 : f32
    %174 = vector.broadcast %cst_59 : f32 to vector<8x256xf32>
    %175 = arith.mulf %174, %173 : vector<8x256xf32>
    %176 = math.tanh %175 : vector<8x256xf32>
    %cst_60 = arith.constant 1.000000e+00 : f32
    %177 = vector.broadcast %cst_60 : f32 to vector<8x256xf32>
    %178 = arith.addf %176, %177 : vector<8x256xf32>
    %cst_61 = arith.constant 5.000000e-01 : f32
    %179 = vector.broadcast %cst_61 : f32 to vector<8x256xf32>
    %180 = arith.mulf %179, %178 : vector<8x256xf32>
    %181 = arith.mulf %170, %149 : vector<8x256xf32>
    %182 = arith.mulf %162, %172 : vector<8x256xf32>
    %183 = arith.addf %181, %182 : vector<8x256xf32>
    %184 = math.tanh %183 : vector<8x256xf32>
    %185 = arith.mulf %180, %184 : vector<8x256xf32>
    %186 = vector.extract_strided_slice %12 {offsets = [40, 0], sizes = [8, 1024], strides = [1, 1]} : vector<64x1024xf32> to vector<8x1024xf32>
    %cst_62 = arith.constant dense<0.000000e+00> : vector<8x1024xf32>
    %187 = tpu.matmul %185, %13, %cst_62 {dimension_numbers = #tpu.dot_dimension_numbers<[1], [0], [0], [1], [0, 0, 1, 1], [], []>} : vector<8x256xf32>, vector<256x1024xf32>, vector<8x1024xf32> -> vector<8x1024xf32>
    %188 = arith.addf %186, %187 : vector<8x1024xf32>
    %189 = vector.extract_strided_slice %188 {offsets = [0, 0], sizes = [8, 256], strides = [1, 1]} : vector<8x1024xf32> to vector<8x256xf32>
    %cst_63 = arith.constant 5.000000e-01 : f32
    %190 = vector.broadcast %cst_63 : f32 to vector<8x256xf32>
    %191 = arith.mulf %190, %189 : vector<8x256xf32>
    %192 = math.tanh %191 : vector<8x256xf32>
    %cst_64 = arith.constant 1.000000e+00 : f32
    %193 = vector.broadcast %cst_64 : f32 to vector<8x256xf32>
    %194 = arith.addf %192, %193 : vector<8x256xf32>
    %cst_65 = arith.constant 5.000000e-01 : f32
    %195 = vector.broadcast %cst_65 : f32 to vector<8x256xf32>
    %196 = arith.mulf %195, %194 : vector<8x256xf32>
    %197 = vector.extract_strided_slice %188 {offsets = [0, 256], sizes = [8, 256], strides = [1, 1]} : vector<8x1024xf32> to vector<8x256xf32>
    %cst_66 = arith.constant 5.000000e-01 : f32
    %198 = vector.broadcast %cst_66 : f32 to vector<8x256xf32>
    %199 = arith.mulf %198, %197 : vector<8x256xf32>
    %200 = math.tanh %199 : vector<8x256xf32>
    %cst_67 = arith.constant 1.000000e+00 : f32
    %201 = vector.broadcast %cst_67 : f32 to vector<8x256xf32>
    %202 = arith.addf %200, %201 : vector<8x256xf32>
    %cst_68 = arith.constant 5.000000e-01 : f32
    %203 = vector.broadcast %cst_68 : f32 to vector<8x256xf32>
    %204 = arith.mulf %203, %202 : vector<8x256xf32>
    %205 = vector.extract_strided_slice %188 {offsets = [0, 512], sizes = [8, 256], strides = [1, 1]} : vector<8x1024xf32> to vector<8x256xf32>
    %206 = math.tanh %205 : vector<8x256xf32>
    %207 = vector.extract_strided_slice %188 {offsets = [0, 768], sizes = [8, 256], strides = [1, 1]} : vector<8x1024xf32> to vector<8x256xf32>
    %cst_69 = arith.constant 5.000000e-01 : f32
    %208 = vector.broadcast %cst_69 : f32 to vector<8x256xf32>
    %209 = arith.mulf %208, %207 : vector<8x256xf32>
    %210 = math.tanh %209 : vector<8x256xf32>
    %cst_70 = arith.constant 1.000000e+00 : f32
    %211 = vector.broadcast %cst_70 : f32 to vector<8x256xf32>
    %212 = arith.addf %210, %211 : vector<8x256xf32>
    %cst_71 = arith.constant 5.000000e-01 : f32
    %213 = vector.broadcast %cst_71 : f32 to vector<8x256xf32>
    %214 = arith.mulf %213, %212 : vector<8x256xf32>
    %215 = arith.mulf %204, %183 : vector<8x256xf32>
    %216 = arith.mulf %196, %206 : vector<8x256xf32>
    %217 = arith.addf %215, %216 : vector<8x256xf32>
    %218 = math.tanh %217 : vector<8x256xf32>
    %219 = arith.mulf %214, %218 : vector<8x256xf32>
    %220 = vector.extract_strided_slice %12 {offsets = [48, 0], sizes = [8, 1024], strides = [1, 1]} : vector<64x1024xf32> to vector<8x1024xf32>
    %cst_72 = arith.constant dense<0.000000e+00> : vector<8x1024xf32>
    %221 = tpu.matmul %219, %13, %cst_72 {dimension_numbers = #tpu.dot_dimension_numbers<[1], [0], [0], [1], [0, 0, 1, 1], [], []>} : vector<8x256xf32>, vector<256x1024xf32>, vector<8x1024xf32> -> vector<8x1024xf32>
    %222 = arith.addf %220, %221 : vector<8x1024xf32>
    %223 = vector.extract_strided_slice %222 {offsets = [0, 0], sizes = [8, 256], strides = [1, 1]} : vector<8x1024xf32> to vector<8x256xf32>
    %cst_73 = arith.constant 5.000000e-01 : f32
    %224 = vector.broadcast %cst_73 : f32 to vector<8x256xf32>
    %225 = arith.mulf %224, %223 : vector<8x256xf32>
    %226 = math.tanh %225 : vector<8x256xf32>
    %cst_74 = arith.constant 1.000000e+00 : f32
    %227 = vector.broadcast %cst_74 : f32 to vector<8x256xf32>
    %228 = arith.addf %226, %227 : vector<8x256xf32>
    %cst_75 = arith.constant 5.000000e-01 : f32
    %229 = vector.broadcast %cst_75 : f32 to vector<8x256xf32>
    %230 = arith.mulf %229, %228 : vector<8x256xf32>
    %231 = vector.extract_strided_slice %222 {offsets = [0, 256], sizes = [8, 256], strides = [1, 1]} : vector<8x1024xf32> to vector<8x256xf32>
    %cst_76 = arith.constant 5.000000e-01 : f32
    %232 = vector.broadcast %cst_76 : f32 to vector<8x256xf32>
    %233 = arith.mulf %232, %231 : vector<8x256xf32>
    %234 = math.tanh %233 : vector<8x256xf32>
    %cst_77 = arith.constant 1.000000e+00 : f32
    %235 = vector.broadcast %cst_77 : f32 to vector<8x256xf32>
    %236 = arith.addf %234, %235 : vector<8x256xf32>
    %cst_78 = arith.constant 5.000000e-01 : f32
    %237 = vector.broadcast %cst_78 : f32 to vector<8x256xf32>
    %238 = arith.mulf %237, %236 : vector<8x256xf32>
    %239 = vector.extract_strided_slice %222 {offsets = [0, 512], sizes = [8, 256], strides = [1, 1]} : vector<8x1024xf32> to vector<8x256xf32>
    %240 = math.tanh %239 : vector<8x256xf32>
    %241 = vector.extract_strided_slice %222 {offsets = [0, 768], sizes = [8, 256], strides = [1, 1]} : vector<8x1024xf32> to vector<8x256xf32>
    %cst_79 = arith.constant 5.000000e-01 : f32
    %242 = vector.broadcast %cst_79 : f32 to vector<8x256xf32>
    %243 = arith.mulf %242, %241 : vector<8x256xf32>
    %244 = math.tanh %243 : vector<8x256xf32>
    %cst_80 = arith.constant 1.000000e+00 : f32
    %245 = vector.broadcast %cst_80 : f32 to vector<8x256xf32>
    %246 = arith.addf %244, %245 : vector<8x256xf32>
    %cst_81 = arith.constant 5.000000e-01 : f32
    %247 = vector.broadcast %cst_81 : f32 to vector<8x256xf32>
    %248 = arith.mulf %247, %246 : vector<8x256xf32>
    %249 = arith.mulf %238, %217 : vector<8x256xf32>
    %250 = arith.mulf %230, %240 : vector<8x256xf32>
    %251 = arith.addf %249, %250 : vector<8x256xf32>
    %252 = math.tanh %251 : vector<8x256xf32>
    %253 = arith.mulf %248, %252 : vector<8x256xf32>
    %254 = vector.extract_strided_slice %12 {offsets = [56, 0], sizes = [8, 1024], strides = [1, 1]} : vector<64x1024xf32> to vector<8x1024xf32>
    %cst_82 = arith.constant dense<0.000000e+00> : vector<8x1024xf32>
    %255 = tpu.matmul %253, %13, %cst_82 {dimension_numbers = #tpu.dot_dimension_numbers<[1], [0], [0], [1], [0, 0, 1, 1], [], []>} : vector<8x256xf32>, vector<256x1024xf32>, vector<8x1024xf32> -> vector<8x1024xf32>
    %256 = arith.addf %254, %255 : vector<8x1024xf32>
    %257 = vector.extract_strided_slice %256 {offsets = [0, 0], sizes = [8, 256], strides = [1, 1]} : vector<8x1024xf32> to vector<8x256xf32>
    %cst_83 = arith.constant 5.000000e-01 : f32
    %258 = vector.broadcast %cst_83 : f32 to vector<8x256xf32>
    %259 = arith.mulf %258, %257 : vector<8x256xf32>
    %260 = math.tanh %259 : vector<8x256xf32>
    %cst_84 = arith.constant 1.000000e+00 : f32
    %261 = vector.broadcast %cst_84 : f32 to vector<8x256xf32>
    %262 = arith.addf %260, %261 : vector<8x256xf32>
    %cst_85 = arith.constant 5.000000e-01 : f32
    %263 = vector.broadcast %cst_85 : f32 to vector<8x256xf32>
    %264 = arith.mulf %263, %262 : vector<8x256xf32>
    %265 = vector.extract_strided_slice %256 {offsets = [0, 256], sizes = [8, 256], strides = [1, 1]} : vector<8x1024xf32> to vector<8x256xf32>
    %cst_86 = arith.constant 5.000000e-01 : f32
    %266 = vector.broadcast %cst_86 : f32 to vector<8x256xf32>
    %267 = arith.mulf %266, %265 : vector<8x256xf32>
    %268 = math.tanh %267 : vector<8x256xf32>
    %cst_87 = arith.constant 1.000000e+00 : f32
    %269 = vector.broadcast %cst_87 : f32 to vector<8x256xf32>
    %270 = arith.addf %268, %269 : vector<8x256xf32>
    %cst_88 = arith.constant 5.000000e-01 : f32
    %271 = vector.broadcast %cst_88 : f32 to vector<8x256xf32>
    %272 = arith.mulf %271, %270 : vector<8x256xf32>
    %273 = vector.extract_strided_slice %256 {offsets = [0, 512], sizes = [8, 256], strides = [1, 1]} : vector<8x1024xf32> to vector<8x256xf32>
    %274 = math.tanh %273 : vector<8x256xf32>
    %275 = vector.extract_strided_slice %256 {offsets = [0, 768], sizes = [8, 256], strides = [1, 1]} : vector<8x1024xf32> to vector<8x256xf32>
    %cst_89 = arith.constant 5.000000e-01 : f32
    %276 = vector.broadcast %cst_89 : f32 to vector<8x256xf32>
    %277 = arith.mulf %276, %275 : vector<8x256xf32>
    %278 = math.tanh %277 : vector<8x256xf32>
    %cst_90 = arith.constant 1.000000e+00 : f32
    %279 = vector.broadcast %cst_90 : f32 to vector<8x256xf32>
    %280 = arith.addf %278, %279 : vector<8x256xf32>
    %cst_91 = arith.constant 5.000000e-01 : f32
    %281 = vector.broadcast %cst_91 : f32 to vector<8x256xf32>
    %282 = arith.mulf %281, %280 : vector<8x256xf32>
    %283 = arith.mulf %272, %251 : vector<8x256xf32>
    %284 = arith.mulf %264, %274 : vector<8x256xf32>
    %285 = arith.addf %283, %284 : vector<8x256xf32>
    %286 = math.tanh %285 : vector<8x256xf32>
    %287 = arith.mulf %282, %286 : vector<8x256xf32>
    %c0_92 = arith.constant 0 : index
    %c0_93 = arith.constant 0 : index
    %288 = vector.load %arg6[%c0_92, %c0_93] : memref<256x256xf32, #tpu.memory_space<vmem>>, vector<256x256xf32>
    %cst_94 = arith.constant dense<0.000000e+00> : vector<8x256xf32>
    %289 = tpu.matmul %287, %288, %cst_94 {dimension_numbers = #tpu.dot_dimension_numbers<[1], [0], [0], [1], [0, 0, 1, 1], [], []>} : vector<8x256xf32>, vector<256x256xf32>, vector<8x256xf32> -> vector<8x256xf32>
    %c0_95 = arith.constant 0 : index
    %c0_96 = arith.constant 0 : index
    %290 = vector.load %arg7[%c0_95, %c0_96] : memref<1x256xf32, #tpu.memory_space<vmem>>, vector<1x256xf32>
    %291 = vector.broadcast %290 : vector<1x256xf32> to vector<8x256xf32>
    %292 = arith.addf %289, %291 : vector<8x256xf32>
    %cst_97 = arith.constant 0.000000e+00 : f32
    %293 = vector.broadcast %cst_97 : f32 to vector<8x256xf32>
    %294 = arith.maximumf %292, %293 : vector<8x256xf32>
    %c0_98 = arith.constant 0 : index
    %c0_99 = arith.constant 0 : index
    %295 = vector.load %arg8[%c0_98, %c0_99] : memref<256x128xf32, #tpu.memory_space<vmem>>, vector<256x128xf32>
    %cst_100 = arith.constant dense<0.000000e+00> : vector<8x128xf32>
    %296 = tpu.matmul %294, %295, %cst_100 {dimension_numbers = #tpu.dot_dimension_numbers<[1], [0], [0], [1], [0, 0, 1, 1], [], []>} : vector<8x256xf32>, vector<256x128xf32>, vector<8x128xf32> -> vector<8x128xf32>
    %c0_101 = arith.constant 0 : index
    %c0_102 = arith.constant 0 : index
    %297 = vector.load %arg9[%c0_101, %c0_102] : memref<1x128xf32, #tpu.memory_space<vmem>>, vector<1x128xf32>
    %298 = vector.broadcast %297 : vector<1x128xf32> to vector<8x128xf32>
    %299 = arith.addf %296, %298 : vector<8x128xf32>
    %c0_103 = arith.constant 0 : index
    %c0_104 = arith.constant 0 : index
    %300 = vector.load %arg10[%c0_103, %c0_104] : memref<8x128xf32, #tpu.memory_space<vmem>>, vector<8x128xf32>
    tpu.vector_store %arg10[%c0_103, %c0_104], %299 {strides = array<i32>} : memref<8x128xf32, #tpu.memory_space<vmem>>, vector<8x128xf32>,
    return
  }
  func.func @transform_0(%arg0: i32) -> (i32, i32) {
    %c0_i32 = arith.constant 0 : i32
    %c0_i32_0 = arith.constant 0 : i32
    %c0_i32_1 = arith.constant 0 : i32
    return %c0_i32, %c0_i32_0 : i32, i32
  }
  func.func @transform_1(%arg0: i32) -> (i32, i32) {
    %c0_i32 = arith.constant 0 : i32
    %c0_i32_0 = arith.constant 0 : i32
    %c0_i32_1 = arith.constant 0 : i32
    return %c0_i32, %c0_i32_0 : i32, i32
  }
  func.func @transform_2(%arg0: i32) -> (i32, i32) {
    %c0_i32 = arith.constant 0 : i32
    %c0_i32_0 = arith.constant 0 : i32
    %c0_i32_1 = arith.constant 0 : i32
    return %c0_i32, %c0_i32_0 : i32, i32
  }
  func.func @transform_3(%arg0: i32) -> (i32, i32) {
    %c0_i32 = arith.constant 0 : i32
    %c0_i32_0 = arith.constant 0 : i32
    %c0_i32_1 = arith.constant 0 : i32
    return %c0_i32, %c0_i32_0 : i32, i32
  }
  func.func @transform_4(%arg0: i32) -> (i32, i32) {
    %c0_i32 = arith.constant 0 : i32
    %c0_i32_0 = arith.constant 0 : i32
    %c0_i32_1 = arith.constant 0 : i32
    return %c0_i32, %c0_i32_0 : i32, i32
  }
  func.func @transform_5(%arg0: i32) -> (i32, i32) {
    %c0_i32 = arith.constant 0 : i32
    %c0_i32_0 = arith.constant 0 : i32
    %c0_i32_1 = arith.constant 0 : i32
    return %c0_i32, %c0_i32_0 : i32, i32
  }
  func.func @transform_6(%arg0: i32) -> (i32, i32) {
    %c0_i32 = arith.constant 0 : i32
    %c0_i32_0 = arith.constant 0 : i32
    %c0_i32_1 = arith.constant 0 : i32
    return %c0_i32, %c0_i32_0 : i32, i32
  }
  func.func @transform_7(%arg0: i32) -> (i32, i32) {
    %c0_i32 = arith.constant 0 : i32
    %c0_i32_0 = arith.constant 0 : i32
    %c0_i32_1 = arith.constant 0 : i32
    return %c0_i32, %c0_i32_0 : i32, i32
  }
  func.func @transform_8(%arg0: i32) -> (i32, i32) {
    %c0_i32 = arith.constant 0 : i32
    %c0_i32_0 = arith.constant 0 : i32
    %c0_i32_1 = arith.constant 0 : i32
    return %c0_i32, %c0_i32_0 : i32, i32
  }
  func.func @transform_9(%arg0: i32) -> (i32, i32) {
    %c0_i32 = arith.constant 0 : i32
    %c0_i32_0 = arith.constant 0 : i32
    %c0_i32_1 = arith.constant 0 : i32
    return %c0_i32, %c0_i32_0 : i32, i32
  }
}

</mosaic_0001>

<llo_original>
// kernel: tpu_custom_call.1
$region0: #{tpu_custom_call.1}
  #allocation0 [shape = 'u32[]', space=smem, size = 0x4, offset = 0x4, fixed_abs, tag = 'smem constant byte address 0x4 - core index']
  #allocation1 [shape = 'u32[72,128]{1,0:T(1,128)}', space=vmem, size = 0x9000, scoped, tag = 'internal scratch']
  %s0 = inlined_call_operand.vmem [shape: s32[64,1], index: 0, kind: input, shape index: {}]
  %s1 = inlined_call_operand.vmem [shape: f32[32,128], index: 1, kind: input, shape index: {}]
  %s2 = inlined_call_operand.hbm [shape: f32[128,1024], index: 2, kind: input, shape index: {}]
  %s3 = inlined_call_operand.hbm [shape: f32[256,1024], index: 3, kind: input, shape index: {}]
  %s4 = inlined_call_operand.vmem [shape: f32[1,1024], index: 4, kind: input, shape index: {}]
  %s5 = inlined_call_operand.hbm [shape: f32[256,256], index: 5, kind: input, shape index: {}]
  %s6 = inlined_call_operand.vmem [shape: f32[1,256], index: 6, kind: input, shape index: {}]
  %s7 = inlined_call_operand.hbm [shape: f32[256,128], index: 7, kind: input, shape index: {}]
  %s8 = inlined_call_operand.vmem [shape: f32[1,128], index: 8, kind: input, shape index: {}]
  %s9 = inlined_call_operand.hbm [shape: f32[8,128], index: 9, kind: output, shape index: {}]
  %s10 = sld [smem:[#allocation0]]
  $region62: #{tpu_custom_call.1} parent=0
    _
  %s12 = ssub.s32 1, %s10
  %s13 = scalar_select 0, %s12, %s10
  $region1: #{tpu_custom_call.1} parent=0
    #allocation2 [shape = 'u8[524288]{0}', space=vmem, size = 0x80000, scoped, tag = 'input window, operand 2, single buffered']
    #allocation3 [shape = 's32[1]{0}', space=sflag, size = 0x4, scoped, tag = 'scoped memory for tpu_custom_call.1']
    #allocation4 [shape = 's32[1]{0}', space=sflag, size = 0x4, scoped, tag = 'scoped memory for tpu_custom_call.1']
    #allocation5 [shape = 'u8[1048576]{0}', space=vmem, size = 0x100000, scoped, tag = 'input window, operand 3, single buffered']
    #allocation6 [shape = 's32[1]{0}', space=sflag, size = 0x4, scoped, tag = 'scoped memory for tpu_custom_call.1']
    #allocation7 [shape = 'u8[262144]{0}', space=vmem, size = 0x40000, scoped, tag = 'input window, operand 5, single buffered']
    #allocation8 [shape = 'u8[131072]{0}', space=vmem, size = 0x20000, scoped, tag = 'input window, operand 7, single buffered']
    #allocation9 [shape = 's32[1]{0}', space=sflag, size = 0x4, scoped, tag = 'scoped memory for tpu_custom_call.1']
    #allocation10 [shape = 'u8[4096]{0}', space=vmem, size = 0x1000, scoped, tag = 'output window, operand 0, single buffered']
    %14 = vsyncpa [#allocation3], 0
    %15 = vsyncpa [#allocation6], 0
    %16 = vsyncpa [#allocation9], 0
    %17 = vsyncpa [#allocation4], 0
    // Predicated region
    $region2: #{tpu_custom_call.1} parent=1 // pred_check
      _
    $region3: #{tpu_custom_call.1} parent=1 // pred_check_branch
      %19 = sbr.rel (0) target = $region5
    $region4: #{tpu_custom_call.1} parent=1 // pred_region
      _
    $region5: #{tpu_custom_call.1} parent=1 // pred_fallthru
      _
    // Predicated region
    $region6: #{tpu_custom_call.1} parent=1 // pred_check
      _
    $region7: #{tpu_custom_call.1} parent=1 // pred_check_branch
      %21 = sbr.rel (0) target = $region9
    $region8: #{tpu_custom_call.1} parent=1 // pred_region
      _
    $region9: #{tpu_custom_call.1} parent=1 // pred_fallthru
      _
    // Predicated region
    $region10: #{tpu_custom_call.1} parent=1 // pred_check
      _
    $region11: #{tpu_custom_call.1} parent=1 // pred_check_branch
      %23 = sbr.rel (0) target = $region13
    $region12: #{tpu_custom_call.1} parent=1 // pred_region
      %25 = vsyncadd [#allocation3], 0
      %s26 = sshll.u32 %s2, 4
      %s27 = int_to_ptr.hbm [resolvable:$true] %s26
      %s28 = sshll.u32 [#allocation2], 4
      %s29 = int_to_ptr.vmem [resolvable:$true] %s28
      %34 = dma.hbm_to_vmem [thread:$0]  %s27, 16384, %s29, [#allocation3], 1024, 1024, 64
    $region13: #{tpu_custom_call.1} parent=1 // pred_fallthru
      _
    // Predicated region
    $region14: #{tpu_custom_call.1} parent=1 // pred_check
      _
    $region15: #{tpu_custom_call.1} parent=1 // pred_check_branch
      %36 = sbr.rel (0) target = $region17
    $region16: #{tpu_custom_call.1} parent=1 // pred_region
      %38 = vsyncadd [#allocation6], 0
      %s39 = sshll.u32 %s3, 4
      %s40 = int_to_ptr.hbm [resolvable:$true] %s39
      %s41 = sshll.u32 [#allocation5], 4
      %s42 = int_to_ptr.vmem [resolvable:$true] %s41
      %47 = dma.hbm_to_vmem [thread:$0]  %s40, 32768, %s42, [#allocation6], 1024, 1024, 64
    $region17: #{tpu_custom_call.1} parent=1 // pred_fallthru
      _
    // Predicated region
    $region18: #{tpu_custom_call.1} parent=1 // pred_check
      _
    $region19: #{tpu_custom_call.1} parent=1 // pred_check_branch
      %49 = sbr.rel (0) target = $region21
    $region20: #{tpu_custom_call.1} parent=1 // pred_region
      _
    $region21: #{tpu_custom_call.1} parent=1 // pred_fallthru
      _
    // Predicated region
    $region22: #{tpu_custom_call.1} parent=1 // pred_check
      _
    $region23: #{tpu_custom_call.1} parent=1 // pred_check_branch
      %51 = sbr.rel (0) target = $region25
    $region24: #{tpu_custom_call.1} parent=1 // pred_region
      %53 = vsyncadd [#allocation6], 0
      %s54 = sshll.u32 %s5, 4
      %s55 = int_to_ptr.hbm [resolvable:$true] %s54
      %s56 = sshll.u32 [#allocation7], 4
      %s57 = int_to_ptr.vmem [resolvable:$true] %s56
      %62 = dma.hbm_to_vmem [thread:$0]  %s55, 8192, %s57, [#allocation6], 256, 256, 16
    $region25: #{tpu_custom_call.1} parent=1 // pred_fallthru
      _
    // Predicated region
    $region26: #{tpu_custom_call.1} parent=1 // pred_check
      _
    $region27: #{tpu_custom_call.1} parent=1 // pred_check_branch
      %64 = sbr.rel (0) target = $region29
    $region28: #{tpu_custom_call.1} parent=1 // pred_region
      _
    $region29: #{tpu_custom_call.1} parent=1 // pred_fallthru
      _
    // Predicated region
    $region30: #{tpu_custom_call.1} parent=1 // pred_check
      _
    $region31: #{tpu_custom_call.1} parent=1 // pred_check_branch
      %66 = sbr.rel (0) target = $region33
    $region32: #{tpu_custom_call.1} parent=1 // pred_region
      %68 = vsyncadd [#allocation9], 0
      %s69 = sshll.u32 %s7, 4
      %s70 = int_to_ptr.hbm [resolvable:$true] %s69
      %s71 = sshll.u32 [#allocation8], 4
      %s72 = int_to_ptr.vmem [resolvable:$true] %s71
      %77 = dma.hbm_to_vmem [thread:$0]  %s70, 4096, %s72, [#allocation9], 128, 128, 8
    $region33: #{tpu_custom_call.1} parent=1 // pred_fallthru
      _
    // Predicated region
    $region34: #{tpu_custom_call.1} parent=1 // pred_check
      _
    $region35: #{tpu_custom_call.1} parent=1 // pred_check_branch
      %79 = sbr.rel (0) target = $region37
    $region36: #{tpu_custom_call.1} parent=1 // pred_region
      _
    $region37: #{tpu_custom_call.1} parent=1 // pred_fallthru
      _
    // Predicated region
    $region38: #{tpu_custom_call.1} parent=1 // pred_check
      _
    $region39: #{tpu_custom_call.1} parent=1 // pred_check_branch
      %81 = sbr.rel (0) target = $region41
    $region40: #{tpu_custom_call.1} parent=1 // pred_region
      %83 = dma.done [#allocation3], 16384
    $region41: #{tpu_custom_call.1} parent=1 // pred_fallthru
      _
    // Predicated region
    $region42: #{tpu_custom_call.1} parent=1 // pred_check
      _
    $region43: #{tpu_custom_call.1} parent=1 // pred_check_branch
      %85 = sbr.rel (0) target = $region45
    $region44: #{tpu_custom_call.1} parent=1 // pred_region
      %87 = dma.done [#allocation6], 32768
    $region45: #{tpu_custom_call.1} parent=1 // pred_fallthru
      _
    // Predicated region
    $region46: #{tpu_custom_call.1} parent=1 // pred_check
      _
    $region47: #{tpu_custom_call.1} parent=1 // pred_check_branch
      %89 = sbr.rel (0) target = $region49
    $region48: #{tpu_custom_call.1} parent=1 // pred_region
      %91 = dma.done [#allocation6], 8192
    $region49: #{tpu_custom_call.1} parent=1 // pred_fallthru
      _
    // Predicated region
    $region50: #{tpu_custom_call.1} parent=1 // pred_check
      _
    $region51: #{tpu_custom_call.1} parent=1 // pred_check_branch
      %93 = sbr.rel (0) target = $region53
    $region52: #{tpu_custom_call.1} parent=1 // pred_region
      %95 = dma.done [#allocation9], 4096
    $region53: #{tpu_custom_call.1} parent=1 // pred_fallthru
      _
    %v96 = vld [vmem:[%s0] sm:$0xff]
    %v97 = vld [vmem:[%s0 + $0x8] sm:$0xff]
    %v98 = vld [vmem:[%s0 + $0x10] sm:$0xff]
    %v99 = vld [vmem:[%s0 + $0x18] sm:$0xff]
    %v100 = vld [vmem:[%s0 + $0x20] sm:$0xff]
    %v101 = vld [vmem:[%s0 + $0x28] sm:$0xff]
    %v102 = vld [vmem:[%s0 + $0x30] sm:$0xff]
    %v103 = vld [vmem:[%s0 + $0x38] sm:$0xff]
    %v104 = vlaneseq
    %v105 = vand.u32 %v104, 127
    %106 = vset.pattern.permute.xlu0 0
    %107 = vperm.xlu0 %106, %v96
    %v108 = vpop.permute.xlu0 %107
    %109 = vset.pattern.permute.xlu0 0
    %110 = vperm.xlu0 %109, %v97
    %v111 = vpop.permute.xlu0 %110
    %112 = vset.pattern.permute.xlu0 0
    %113 = vperm.xlu0 %112, %v98
    %v114 = vpop.permute.xlu0 %113
    %115 = vset.pattern.permute.xlu0 0
    %116 = vperm.xlu0 %115, %v99
    %v117 = vpop.permute.xlu0 %116
    %118 = vset.pattern.permute.xlu0 0
    %119 = vperm.xlu0 %118, %v100
    %v120 = vpop.permute.xlu0 %119
    %121 = vset.pattern.permute.xlu0 0
    %122 = vperm.xlu0 %121, %v101
    %v123 = vpop.permute.xlu0 %122
    %124 = vset.pattern.permute.xlu0 0
    %125 = vperm.xlu0 %124, %v102
    %v126 = vpop.permute.xlu0 %125
    %127 = vset.pattern.permute.xlu0 0
    %128 = vperm.xlu0 %127, %v103
    %v129 = vpop.permute.xlu0 %128
    %vm130 = vcmp.eq.s32.totalorder %v108, %v105
    %vm131 = vcmp.eq.s32.totalorder %v111, %v105
    %vm132 = vcmp.eq.s32.totalorder %v114, %v105
    %vm133 = vcmp.eq.s32.totalorder %v117, %v105
    %vm134 = vcmp.eq.s32.totalorder %v120, %v105
    %vm135 = vcmp.eq.s32.totalorder %v123, %v105
    %vm136 = vcmp.eq.s32.totalorder %v126, %v105
    %vm137 = vcmp.eq.s32.totalorder %v129, %v105
    %v138 = vsel %vm130, 1, 0
    %v139 = vsel %vm131, 1, 0
    %v140 = vsel %vm132, 1, 0
    %v141 = vsel %vm133, 1, 0
    %v142 = vsel %vm134, 1, 0
    %v143 = vsel %vm135, 1, 0
    %v144 = vsel %vm136, 1, 0
    %v145 = vsel %vm137, 1, 0
    %v146 = vcvt.s32.f32 %v138
    %v147 = vcvt.s32.f32 %v139
    %v148 = vcvt.s32.f32 %v140
    %v149 = vcvt.s32.f32 %v141
    %v150 = vcvt.s32.f32 %v142
    %v151 = vcvt.s32.f32 %v143
    %v152 = vcvt.s32.f32 %v144
    %v153 = vcvt.s32.f32 %v145
    %v154 = vld [vmem:[%s1] sm:$0xff]
    %v155 = vld [vmem:[%s1 + $0x8] sm:$0xff]
    %v156 = vld [vmem:[%s1 + $0x10] sm:$0xff]
    %v157 = vld [vmem:[%s1 + $0x18] sm:$0xff]
    %vm158 = vcmask 261120
    %v160 = vsel %vm158, %v146, 0
    %v163 = vsel %vm158, %v147, 0
    %v166 = vsel %vm158, %v148, 0
    %v169 = vsel %vm158, %v149, 0
    %v172 = vsel %vm158, %v150, 0
    %v175 = vsel %vm158, %v151, 0
    %v178 = vsel %vm158, %v152, 0
    %v181 = vsel %vm158, %v153, 0
    %183 = vmatpush.msra.mxu0 0.0
    %184 = vmatpush.msra.mxu0 0.0
    %185 = vmatpush.msra.mxu0 0.0
    %186 = vmatpush.msra.mxu0 0.0
    %187 = vmatpush.msra.mxu0 0.0
    %188 = vmatpush.msra.mxu0 0.0
    %189 = vmatpush.msra.mxu0 0.0
    %190 = vmatpush.msra.mxu0 0.0
    %191 = vmatpush.msra.mxu0 0.0
    %192 = vmatpush.msra.mxu0 0.0
    %193 = vmatpush.msra.mxu0 0.0
    %194 = vmatpush.msra.mxu0 0.0
    %195 = vmatpush.msra.mxu0 %v157
    %196 = vmatpush.msra.mxu0 %v156
    %197 = vmatpush.msra.mxu0 %v155
    %198 = vmatpush.msra.mxu0 %v154
    %199 = vmatmul.f32.gmra.mxu0 %v160
    %v200 = vpop.f32.mrf.mxu0
    %v201 = vadd.f32 0.0, %v200
    %202 = vmatmul.f32.gmra.mxu0 %v163
    %v203 = vpop.f32.mrf.mxu0
    %v204 = vadd.f32 0.0, %v203
    %205 = vmatmul.f32.gmra.mxu0 %v166
    %v206 = vpop.f32.mrf.mxu0
    %v207 = vadd.f32 0.0, %v206
    %208 = vmatmul.f32.gmra.mxu0 %v169
    %v209 = vpop.f32.mrf.mxu0
    %v210 = vadd.f32 0.0, %v209
    %211 = vmatmul.f32.gmra.mxu0 %v172
    %v212 = vpop.f32.mrf.mxu0
    %v213 = vadd.f32 0.0, %v212
    %214 = vmatmul.f32.gmra.mxu0 %v175
    %v215 = vpop.f32.mrf.mxu0
    %v216 = vadd.f32 0.0, %v215
    %217 = vmatmul.f32.gmra.mxu0 %v178
    %v218 = vpop.f32.mrf.mxu0
    %v219 = vadd.f32 0.0, %v218
    %220 = vmatmul.f32.gmra.mxu0 %v181
    %v221 = vpop.f32.mrf.mxu0
    %v222 = vadd.f32 0.0, %v221
    %223 = vdwg.mxu0
    %v224 = vld [vmem:[#allocation2] sm:$0xff]
    %v225 = vld [vmem:[#allocation2 + $0x8] sm:$0xff]
    %v226 = vld [vmem:[#allocation2 + $0x10] sm:$0xff]
    %v227 = vld [vmem:[#allocation2 + $0x18] sm:$0xff]
    %v228 = vld [vmem:[#allocation2 + $0x20] sm:$0xff]
    %v229 = vld [vmem:[#allocation2 + $0x28] sm:$0xff]
    %v230 = vld [vmem:[#allocation2 + $0x30] sm:$0xff]
    %v231 = vld [vmem:[#allocation2 + $0x38] sm:$0xff]
    %v232 = vld [vmem:[#allocation2 + $0x40] sm:$0xff]
    %v233 = vld [vmem:[#allocation2 + $0x48] sm:$0xff]
    %v234 = vld [vmem:[#allocation2 + $0x50] sm:$0xff]
    %v235 = vld [vmem:[#allocation2 + $0x58] sm:$0xff]
    %v236 = vld [vmem:[#allocation2 + $0x60] sm:$0xff]
    %v237 = vld [vmem:[#allocation2 + $0x68] sm:$0xff]
    %v238 = vld [vmem:[#allocation2 + $0x70] sm:$0xff]
    %v239 = vld [vmem:[#allocation2 + $0x78] sm:$0xff]
    %v240 = vld [vmem:[#allocation2 + $0x80] sm:$0xff]
    %v241 = vld [vmem:[#allocation2 + $0x88] sm:$0xff]
    %v242 = vld [vmem:[#allocation2 + $0x90] sm:$0xff]
    %v243 = vld [vmem:[#allocation2 + $0x98] sm:$0xff]
    %v244 = vld [vmem:[#allocation2 + $0xa0] sm:$0xff]
    %v245 = vld [vmem:[#allocation2 + $0xa8] sm:$0xff]
    %v246 = vld [vmem:[#allocation2 + $0xb0] sm:$0xff]
    %v247 = vld [vmem:[#allocation2 + $0xb8] sm:$0xff]
    %v248 = vld [vmem:[#allocation2 + $0xc0] sm:$0xff]
    %v249 = vld [vmem:[#allocation2 + $0xc8] sm:$0xff]
    %v250 = vld [vmem:[#allocation2 + $0xd0] sm:$0xff]
    %v251 = vld [vmem:[#allocation2 + $0xd8] sm:$0xff]
    %v252 = vld [vmem:[#allocation2 + $0xe0] sm:$0xff]
    %v253 = vld [vmem:[#allocation2 + $0xe8] sm:$0xff]
    %v254 = vld [vmem:[#allocation2 + $0xf0] sm:$0xff]
    %v255 = vld [vmem:[#allocation2 + $0xf8] sm:$0xff]
    %v256 = vld [vmem:[#allocation2 + $0x100] sm:$0xff]
    %v257 = vld [vmem:[#allocation2 + $0x108] sm:$0xff]
    %v258 = vld [vmem:[#allocation2 + $0x110] sm:$0xff]
    %v259 = vld [vmem:[#allocation2 + $0x118] sm:$0xff]
    %v260 = vld [vmem:[#allocation2 + $0x120] sm:$0xff]
    %v261 = vld [vmem:[#allocation2 + $0x128] sm:$0xff]
    %v262 = vld [vmem:[#allocation2 + $0x130] sm:$0xff]
    %v263 = vld [vmem:[#allocation2 + $0x138] sm:$0xff]
    %v264 = vld [vmem:[#allocation2 + $0x140] sm:$0xff]
    %v265 = vld [vmem:[#allocation2 + $0x148] sm:$0xff]
    %v266 = vld [vmem:[#allocation2 + $0x150] sm:$0xff]
    %v267 = vld [vmem:[#allocation2 + $0x158] sm:$0xff]
    %v268 = vld [vmem:[#allocation2 + $0x160] sm:$0xff]
    %v269 = vld [vmem:[#allocation2 + $0x168] sm:$0xff]
    %v270 = vld [vmem:[#allocation2 + $0x170] sm:$0xff]
    %v271 = vld [vmem:[#allocation2 + $0x178] sm:$0xff]
    %v272 = vld [vmem:[#allocation2 + $0x180] sm:$0xff]
    %v273 = vld [vmem:[#allocation2 + $0x188] sm:$0xff]
    %v274 = vld [vmem:[#allocation2 + $0x190] sm:$0xff]
    %v275 = vld [vmem:[#allocation2 + $0x198] sm:$0xff]
    %v276 = vld [vmem:[#allocation2 + $0x1a0] sm:$0xff]
    %v277 = vld [vmem:[#allocation2 + $0x1a8] sm:$0xff]
    %v278 = vld [vmem:[#allocation2 + $0x1b0] sm:$0xff]
    %v279 = vld [vmem:[#allocation2 + $0x1b8] sm:$0xff]
    %v280 = vld [vmem:[#allocation2 + $0x1c0] sm:$0xff]
    %v281 = vld [vmem:[#allocation2 + $0x1c8] sm:$0xff]
    %v282 = vld [vmem:[#allocation2 + $0x1d0] sm:$0xff]
    %v283 = vld [vmem:[#allocation2 + $0x1d8] sm:$0xff]
    %v284 = vld [vmem:[#allocation2 + $0x1e0] sm:$0xff]
    %v285 = vld [vmem:[#allocation2 + $0x1e8] sm:$0xff]
    %v286 = vld [vmem:[#allocation2 + $0x1f0] sm:$0xff]
    %v287 = vld [vmem:[#allocation2 + $0x1f8] sm:$0xff]
    %v288 = vld [vmem:[#allocation2 + $0x200] sm:$0xff]
    %v289 = vld [vmem:[#allocation2 + $0x208] sm:$0xff]
    %v290 = vld [vmem:[#allocation2 + $0x210] sm:$0xff]
    %v291 = vld [vmem:[#allocation2 + $0x218] sm:$0xff]
    %v292 = vld [vmem:[#allocation2 + $0x220] sm:$0xff]
    %v293 = vld [vmem:[#allocation2 + $0x228] sm:$0xff]
    %v294 = vld [vmem:[#allocation2 + $0x230] sm:$0xff]
    %v295 = vld [vmem:[#allocation2 + $0x238] sm:$0xff]
    %v296 = vld [vmem:[#allocation2 + $0x240] sm:$0xff]
    %v297 = vld [vmem:[#allocation2 + $0x248] sm:$0xff]
    %v298 = vld [vmem:[#allocation2 + $0x250] sm:$0xff]
    %v299 = vld [vmem:[#allocation2 + $0x258] sm:$0xff]
    %v300 = vld [vmem:[#allocation2 + $0x260] sm:$0xff]
    %v301 = vld [vmem:[#allocation2 + $0x268] sm:$0xff]
    %v302 = vld [vmem:[#allocation2 + $0x270] sm:$0xff]
    %v303 = vld [vmem:[#allocation2 + $0x278] sm:$0xff]
    %v304 = vld [vmem:[#allocation2 + $0x280] sm:$0xff]
    %v305 = vld [vmem:[#allocation2 + $0x288] sm:$0xff]
    %v306 = vld [vmem:[#allocation2 + $0x290] sm:$0xff]
    %v307 = vld [vmem:[#allocation2 + $0x298] sm:$0xff]
    %v308 = vld [vmem:[#allocation2 + $0x2a0] sm:$0xff]
    %v309 = vld [vmem:[#allocation2 + $0x2a8] sm:$0xff]
    %v310 = vld [vmem:[#allocation2 + $0x2b0] sm:$0xff]
    %v311 = vld [vmem:[#allocation2 + $0x2b8] sm:$0xff]
    %v312 = vld [vmem:[#allocation2 + $0x2c0] sm:$0xff]
    %v313 = vld [vmem:[#allocation2 + $0x2c8] sm:$0xff]
    %v314 = vld [vmem:[#allocation2 + $0x2d0] sm:$0xff]
    %v315 = vld [vmem:[#allocation2 + $0x2d8] sm:$0xff]
    %v316 = vld [vmem:[#allocation2 + $0x2e0] sm:$0xff]
    %v317 = vld [vmem:[#allocation2 + $0x2e8] sm:$0xff]
    %v318 = vld [vmem:[#allocation2 + $0x2f0] sm:$0xff]
    %v319 = vld [vmem:[#allocation2 + $0x2f8] sm:$0xff]
    %v320 = vld [vmem:[#allocation2 + $0x300] sm:$0xff]
    %v321 = vld [vmem:[#allocation2 + $0x308] sm:$0xff]
    %v322 = vld [vmem:[#allocation2 + $0x310] sm:$0xff]
    %v323 = vld [vmem:[#allocation2 + $0x318] sm:$0xff]
    %v324 = vld [vmem:[#allocation2 + $0x320] sm:$0xff]
    %v325 = vld [vmem:[#allocation2 + $0x328] sm:$0xff]
    %v326 = vld [vmem:[#allocation2 + $0x330] sm:$0xff]
    %v327 = vld [vmem:[#allocation2 + $0x338] sm:$0xff]
    %v328 = vld [vmem:[#allocation2 + $0x340] sm:$0xff]
    %v329 = vld [vmem:[#allocation2 + $0x348] sm:$0xff]
    %v330 = vld [vmem:[#allocation2 + $0x350] sm:$0xff]
    %v331 = vld [vmem:[#allocation2 + $0x358] sm:$0xff]
    %v332 = vld [vmem:[#allocation2 + $0x360] sm:$0xff]
    %v333 = vld [vmem:[#allocation2 + $0x368] sm:$0xff]
    %v334 = vld [vmem:[#allocation2 + $0x370] sm:$0xff]
    %v335 = vld [vmem:[#allocation2 + $0x378] sm:$0xff]
    %v336 = vld [vmem:[#allocation2 + $0x380] sm:$0xff]
    %v337 = vld [vmem:[#allocation2 + $0x388] sm:$0xff]
    %v338 = vld [vmem:[#allocation2 + $0x390] sm:$0xff]
    %v339 = vld [vmem:[#allocation2 + $0x398] sm:$0xff]
    %v340 = vld [vmem:[#allocation2 + $0x3a0] sm:$0xff]
    %v341 = vld [vmem:[#allocation2 + $0x3a8] sm:$0xff]
    %v342 = vld [vmem:[#allocation2 + $0x3b0] sm:$0xff]
    %v343 = vld [vmem:[#allocation2 + $0x3b8] sm:$0xff]
    %v344 = vld [vmem:[#allocation2 + $0x3c0] sm:$0xff]
    %v345 = vld [vmem:[#allocation2 + $0x3c8] sm:$0xff]
    %v346 = vld [vmem:[#allocation2 + $0x3d0] sm:$0xff]
    %v347 = vld [vmem:[#allocation2 + $0x3d8] sm:$0xff]
    %v348 = vld [vmem:[#allocation2 + $0x3e0] sm:$0xff]
    %v349 = vld [vmem:[#allocation2 + $0x3e8] sm:$0xff]
    %v350 = vld [vmem:[#allocation2 + $0x3f0] sm:$0xff]
    %v351 = vld [vmem:[#allocation2 + $0x3f8] sm:$0xff]
    %v352 = vld [vmem:[%s4] sm:$0xff]
    %v354 = vperm.slane %v352, 0
    %v355 = vperm.slane %v352, 1
    %v356 = vperm.slane %v352, 2
    %v357 = vperm.slane %v352, 3
    %v358 = vperm.slane %v352, 4
    %v359 = vperm.slane %v352, 5
    %v360 = vperm.slane %v352, 6
    %v361 = vperm.slane %v352, 7
    %370 = vmatpush.msra.mxu0 %v344
    %371 = vmatpush.msra.mxu0 %v336
    %372 = vmatpush.msra.mxu0 %v328
    %373 = vmatpush.msra.mxu0 %v320
    %374 = vmatpush.msra.mxu0 %v312
    %375 = vmatpush.msra.mxu0 %v304
    %376 = vmatpush.msra.mxu0 %v296
    %377 = vmatpush.msra.mxu0 %v288
    %378 = vmatpush.msra.mxu0 %v280
    %379 = vmatpush.msra.mxu0 %v272
    %380 = vmatpush.msra.mxu0 %v264
    %381 = vmatpush.msra.mxu0 %v256
    %382 = vmatpush.msra.mxu0 %v248
    %383 = vmatpush.msra.mxu0 %v240
    %384 = vmatpush.msra.mxu0 %v232
    %385 = vmatpush.msra.mxu0 %v224
    %386 = vmatmul.f32.gmra.mxu0 %v201
    %v387 = vpop.f32.mrf.mxu0
    %v388 = vadd.f32 %v354, %v387
    %389 = vmatmul.f32.gmra.mxu0 %v204
    %v390 = vpop.f32.mrf.mxu0
    %v391 = vadd.f32 %v354, %v390
    %392 = vmatmul.f32.gmra.mxu0 %v207
    %v393 = vpop.f32.mrf.mxu0
    %v394 = vadd.f32 %v354, %v393
    %395 = vmatmul.f32.gmra.mxu0 %v210
    %v396 = vpop.f32.mrf.mxu0
    %v397 = vadd.f32 %v354, %v396
    %398 = vmatmul.f32.gmra.mxu0 %v213
    %v399 = vpop.f32.mrf.mxu0
    %v400 = vadd.f32 %v354, %v399
    %401 = vmatmul.f32.gmra.mxu0 %v216
    %v402 = vpop.f32.mrf.mxu0
    %v403 = vadd.f32 %v354, %v402
    %404 = vmatmul.f32.gmra.mxu0 %v219
    %v405 = vpop.f32.mrf.mxu0
    %v406 = vadd.f32 %v354, %v405
    %407 = vmatmul.f32.gmra.mxu0 %v222
    %v408 = vpop.f32.mrf.mxu0
    %v409 = vadd.f32 %v354, %v408
    %410 = vdwg.mxu0
    %411 = vmatpush.msra.mxu0 %v345
    %412 = vmatpush.msra.mxu0 %v337
    %413 = vmatpush.msra.mxu0 %v329
    %414 = vmatpush.msra.mxu0 %v321
    %415 = vmatpush.msra.mxu0 %v313
    %416 = vmatpush.msra.mxu0 %v305
    %417 = vmatpush.msra.mxu0 %v297
    %418 = vmatpush.msra.mxu0 %v289
    %419 = vmatpush.msra.mxu0 %v281
    %420 = vmatpush.msra.mxu0 %v273
    %421 = vmatpush.msra.mxu0 %v265
    %422 = vmatpush.msra.mxu0 %v257
    %423 = vmatpush.msra.mxu0 %v249
    %424 = vmatpush.msra.mxu0 %v241
    %425 = vmatpush.msra.mxu0 %v233
    %426 = vmatpush.msra.mxu0 %v225
    %427 = vmatmul.f32.gmra.mxu0 %v201
    %v428 = vpop.f32.mrf.mxu0
    %v429 = vadd.f32 %v355, %v428
    %430 = vmatmul.f32.gmra.mxu0 %v204
    %v431 = vpop.f32.mrf.mxu0
    %v432 = vadd.f32 %v355, %v431
    %433 = vmatmul.f32.gmra.mxu0 %v207
    %v434 = vpop.f32.mrf.mxu0
    %v435 = vadd.f32 %v355, %v434
    %436 = vmatmul.f32.gmra.mxu0 %v210
    %v437 = vpop.f32.mrf.mxu0
    %v438 = vadd.f32 %v355, %v437
    %439 = vmatmul.f32.gmra.mxu0 %v213
    %v440 = vpop.f32.mrf.mxu0
    %v441 = vadd.f32 %v355, %v440
    %442 = vmatmul.f32.gmra.mxu0 %v216
    %v443 = vpop.f32.mrf.mxu0
    %v444 = vadd.f32 %v355, %v443
    %445 = vmatmul.f32.gmra.mxu0 %v219
    %v446 = vpop.f32.mrf.mxu0
    %v447 = vadd.f32 %v355, %v446
    %448 = vmatmul.f32.gmra.mxu0 %v222
    %v449 = vpop.f32.mrf.mxu0
    %v450 = vadd.f32 %v355, %v449
    %451 = vdwg.mxu0
    %452 = vmatpush.msra.mxu0 %v346
    %453 = vmatpush.msra.mxu0 %v338
    %454 = vmatpush.msra.mxu0 %v330
    %455 = vmatpush.msra.mxu0 %v322
    %456 = vmatpush.msra.mxu0 %v314
    %457 = vmatpush.msra.mxu0 %v306
    %458 = vmatpush.msra.mxu0 %v298
    %459 = vmatpush.msra.mxu0 %v290
    %460 = vmatpush.msra.mxu0 %v282
    %461 = vmatpush.msra.mxu0 %v274
    %462 = vmatpush.msra.mxu0 %v266
    %463 = vmatpush.msra.mxu0 %v258
    %464 = vmatpush.msra.mxu0 %v250
    %465 = vmatpush.msra.mxu0 %v242
    %466 = vmatpush.msra.mxu0 %v234
    %467 = vmatpush.msra.mxu0 %v226
    %468 = vmatmul.f32.gmra.mxu0 %v201
    %v469 = vpop.f32.mrf.mxu0
    %v470 = vadd.f32 %v356, %v469
    %471 = vmatmul.f32.gmra.mxu0 %v204
    %v472 = vpop.f32.mrf.mxu0
    %v473 = vadd.f32 %v356, %v472
    %474 = vmatmul.f32.gmra.mxu0 %v207
    %v475 = vpop.f32.mrf.mxu0
    %v476 = vadd.f32 %v356, %v475
    %477 = vmatmul.f32.gmra.mxu0 %v210
    %v478 = vpop.f32.mrf.mxu0
    %v479 = vadd.f32 %v356, %v478
    %480 = vmatmul.f32.gmra.mxu0 %v213
    %v481 = vpop.f32.mrf.mxu0
    %v482 = vadd.f32 %v356, %v481
    %483 = vmatmul.f32.gmra.mxu0 %v216
    %v484 = vpop.f32.mrf.mxu0
    %v485 = vadd.f32 %v356, %v484
    %486 = vmatmul.f32.gmra.mxu0 %v219
    %v487 = vpop.f32.mrf.mxu0
    %v488 = vadd.f32 %v356, %v487
    %489 = vmatmul.f32.gmra.mxu0 %v222
    %v490 = vpop.f32.mrf.mxu0
    %v491 = vadd.f32 %v356, %v490
    %492 = vdwg.mxu0
    %493 = vmatpush.msra.mxu0 %v347
    %494 = vmatpush.msra.mxu0 %v339
    %495 = vmatpush.msra.mxu0 %v331
    %496 = vmatpush.msra.mxu0 %v323
    %497 = vmatpush.msra.mxu0 %v315
    %498 = vmatpush.msra.mxu0 %v307
    %499 = vmatpush.msra.mxu0 %v299
    %500 = vmatpush.msra.mxu0 %v291
    %501 = vmatpush.msra.mxu0 %v283
    %502 = vmatpush.msra.mxu0 %v275
    %503 = vmatpush.msra.mxu0 %v267
    %504 = vmatpush.msra.mxu0 %v259
    %505 = vmatpush.msra.mxu0 %v251
    %506 = vmatpush.msra.mxu0 %v243
    %507 = vmatpush.msra.mxu0 %v235
    %508 = vmatpush.msra.mxu0 %v227
    %509 = vmatmul.f32.gmra.mxu0 %v201
    %v510 = vpop.f32.mrf.mxu0
    %v511 = vadd.f32 %v357, %v510
    %512 = vmatmul.f32.gmra.mxu0 %v204
    %v513 = vpop.f32.mrf.mxu0
    %v514 = vadd.f32 %v357, %v513
    %515 = vmatmul.f32.gmra.mxu0 %v207
    %v516 = vpop.f32.mrf.mxu0
    %v517 = vadd.f32 %v357, %v516
    %518 = vmatmul.f32.gmra.mxu0 %v210
    %v519 = vpop.f32.mrf.mxu0
    %v520 = vadd.f32 %v357, %v519
    %521 = vmatmul.f32.gmra.mxu0 %v213
    %v522 = vpop.f32.mrf.mxu0
    %v523 = vadd.f32 %v357, %v522
    %524 = vmatmul.f32.gmra.mxu0 %v216
    %v525 = vpop.f32.mrf.mxu0
    %v526 = vadd.f32 %v357, %v525
    %527 = vmatmul.f32.gmra.mxu0 %v219
    %v528 = vpop.f32.mrf.mxu0
    %v529 = vadd.f32 %v357, %v528
    %530 = vmatmul.f32.gmra.mxu0 %v222
    %v531 = vpop.f32.mrf.mxu0
    %v532 = vadd.f32 %v357, %v531
    %533 = vdwg.mxu0
    %534 = vmatpush.msra.mxu0 %v348
    %535 = vmatpush.msra.mxu0 %v340
    %536 = vmatpush.msra.mxu0 %v332
    %537 = vmatpush.msra.mxu0 %v324
    %538 = vmatpush.msra.mxu0 %v316
    %539 = vmatpush.msra.mxu0 %v308
    %540 = vmatpush.msra.mxu0 %v300
    %541 = vmatpush.msra.mxu0 %v292
    %542 = vmatpush.msra.mxu0 %v284
    %543 = vmatpush.msra.mxu0 %v276
    %544 = vmatpush.msra.mxu0 %v268
    %545 = vmatpush.msra.mxu0 %v260
    %546 = vmatpush.msra.mxu0 %v252
    %547 = vmatpush.msra.mxu0 %v244
    %548 = vmatpush.msra.mxu0 %v236
    %549 = vmatpush.msra.mxu0 %v228
    %550 = vmatmul.f32.gmra.mxu0 %v201
    %v551 = vpop.f32.mrf.mxu0
    %v552 = vadd.f32 %v358, %v551
    %553 = vmatmul.f32.gmra.mxu0 %v204
    %v554 = vpop.f32.mrf.mxu0
    %v555 = vadd.f32 %v358, %v554
    %556 = vmatmul.f32.gmra.mxu0 %v207
    %v557 = vpop.f32.mrf.mxu0
    %v558 = vadd.f32 %v358, %v557
    %559 = vmatmul.f32.gmra.mxu0 %v210
    %v560 = vpop.f32.mrf.mxu0
    %v561 = vadd.f32 %v358, %v560
    %562 = vmatmul.f32.gmra.mxu0 %v213
    %v563 = vpop.f32.mrf.mxu0
    %v564 = vadd.f32 %v358, %v563
    %565 = vmatmul.f32.gmra.mxu0 %v216
    %v566 = vpop.f32.mrf.mxu0
    %v567 = vadd.f32 %v358, %v566
    %568 = vmatmul.f32.gmra.mxu0 %v219
    %v569 = vpop.f32.mrf.mxu0
    %v570 = vadd.f32 %v358, %v569
    %571 = vmatmul.f32.gmra.mxu0 %v222
    %v572 = vpop.f32.mrf.mxu0
    %v573 = vadd.f32 %v358, %v572
    %574 = vdwg.mxu0
    %575 = vmatpush.msra.mxu0 %v349
    %576 = vmatpush.msra.mxu0 %v341
    %577 = vmatpush.msra.mxu0 %v333
    %578 = vmatpush.msra.mxu0 %v325
    %579 = vmatpush.msra.mxu0 %v317
    %580 = vmatpush.msra.mxu0 %v309
    %581 = vmatpush.msra.mxu0 %v301
    %582 = vmatpush.msra.mxu0 %v293
    %583 = vmatpush.msra.mxu0 %v285
    %584 = vmatpush.msra.mxu0 %v277
    %585 = vmatpush.msra.mxu0 %v269
    %586 = vmatpush.msra.mxu0 %v261
    %587 = vmatpush.msra.mxu0 %v253
    %588 = vmatpush.msra.mxu0 %v245
    %589 = vmatpush.msra.mxu0 %v237
    %590 = vmatpush.msra.mxu0 %v229
    %591 = vmatmul.f32.gmra.mxu0 %v201
    %v592 = vpop.f32.mrf.mxu0
    %v593 = vadd.f32 %v359, %v592
    %594 = vmatmul.f32.gmra.mxu0 %v204
    %v595 = vpop.f32.mrf.mxu0
    %v596 = vadd.f32 %v359, %v595
    %597 = vmatmul.f32.gmra.mxu0 %v207
    %v598 = vpop.f32.mrf.mxu0
    %v599 = vadd.f32 %v359, %v598
    %600 = vmatmul.f32.gmra.mxu0 %v210
    %v601 = vpop.f32.mrf.mxu0
    %v602 = vadd.f32 %v359, %v601
    %603 = vmatmul.f32.gmra.mxu0 %v213
    %v604 = vpop.f32.mrf.mxu0
    %v605 = vadd.f32 %v359, %v604
    %606 = vmatmul.f32.gmra.mxu0 %v216
    %v607 = vpop.f32.mrf.mxu0
    %v608 = vadd.f32 %v359, %v607
    %609 = vmatmul.f32.gmra.mxu0 %v219
    %v610 = vpop.f32.mrf.mxu0
    %v611 = vadd.f32 %v359, %v610
    %612 = vmatmul.f32.gmra.mxu0 %v222
    %v613 = vpop.f32.mrf.mxu0
    %v614 = vadd.f32 %v359, %v613
    %615 = vdwg.mxu0
    %616 = vmatpush.msra.mxu0 %v350
    %617 = vmatpush.msra.mxu0 %v342
    %618 = vmatpush.msra.mxu0 %v334
    %619 = vmatpush.msra.mxu0 %v326
    %620 = vmatpush.msra.mxu0 %v318
    %621 = vmatpush.msra.mxu0 %v310
    %622 = vmatpush.msra.mxu0 %v302
    %623 = vmatpush.msra.mxu0 %v294
    %624 = vmatpush.msra.mxu0 %v286
    %625 = vmatpush.msra.mxu0 %v278
    %626 = vmatpush.msra.mxu0 %v270
    %627 = vmatpush.msra.mxu0 %v262
    %628 = vmatpush.msra.mxu0 %v254
    %629 = vmatpush.msra.mxu0 %v246
    %630 = vmatpush.msra.mxu0 %v238
    %631 = vmatpush.msra.mxu0 %v230
    %632 = vmatmul.f32.gmra.mxu0 %v201
    %v633 = vpop.f32.mrf.mxu0
    %v634 = vadd.f32 %v360, %v633
    %635 = vmatmul.f32.gmra.mxu0 %v204
    %v636 = vpop.f32.mrf.mxu0
    %v637 = vadd.f32 %v360, %v636
    %638 = vmatmul.f32.gmra.mxu0 %v207
    %v639 = vpop.f32.mrf.mxu0
    %v640 = vadd.f32 %v360, %v639
    %641 = vmatmul.f32.gmra.mxu0 %v210
    %v642 = vpop.f32.mrf.mxu0
    %v643 = vadd.f32 %v360, %v642
    %644 = vmatmul.f32.gmra.mxu0 %v213
    %v645 = vpop.f32.mrf.mxu0
    %v646 = vadd.f32 %v360, %v645
    %647 = vmatmul.f32.gmra.mxu0 %v216
    %v648 = vpop.f32.mrf.mxu0
    %v649 = vadd.f32 %v360, %v648
    %650 = vmatmul.f32.gmra.mxu0 %v219
    %v651 = vpop.f32.mrf.mxu0
    %v652 = vadd.f32 %v360, %v651
    %653 = vmatmul.f32.gmra.mxu0 %v222
    %v654 = vpop.f32.mrf.mxu0
    %v655 = vadd.f32 %v360, %v654
    %656 = vdwg.mxu0
    %657 = vmatpush.msra.mxu0 %v351
    %658 = vmatpush.msra.mxu0 %v343
    %659 = vmatpush.msra.mxu0 %v335
    %660 = vmatpush.msra.mxu0 %v327
    %661 = vmatpush.msra.mxu0 %v319
    %662 = vmatpush.msra.mxu0 %v311
    %663 = vmatpush.msra.mxu0 %v303
    %664 = vmatpush.msra.mxu0 %v295
    %665 = vmatpush.msra.mxu0 %v287
    %666 = vmatpush.msra.mxu0 %v279
    %667 = vmatpush.msra.mxu0 %v271
    %668 = vmatpush.msra.mxu0 %v263
    %669 = vmatpush.msra.mxu0 %v255
    %670 = vmatpush.msra.mxu0 %v247
    %671 = vmatpush.msra.mxu0 %v239
    %672 = vmatpush.msra.mxu0 %v231
    %673 = vmatmul.f32.gmra.mxu0 %v201
    %v674 = vpop.f32.mrf.mxu0
    %v675 = vadd.f32 %v361, %v674
    %676 = vmatmul.f32.gmra.mxu0 %v204
    %v677 = vpop.f32.mrf.mxu0
    %v678 = vadd.f32 %v361, %v677
    %679 = vmatmul.f32.gmra.mxu0 %v207
    %v680 = vpop.f32.mrf.mxu0
    %v681 = vadd.f32 %v361, %v680
    %682 = vmatmul.f32.gmra.mxu0 %v210
    %v683 = vpop.f32.mrf.mxu0
    %v684 = vadd.f32 %v361, %v683
    %685 = vmatmul.f32.gmra.mxu0 %v213
    %v686 = vpop.f32.mrf.mxu0
    %v687 = vadd.f32 %v361, %v686
    %688 = vmatmul.f32.gmra.mxu0 %v216
    %v689 = vpop.f32.mrf.mxu0
    %v690 = vadd.f32 %v361, %v689
    %691 = vmatmul.f32.gmra.mxu0 %v219
    %v692 = vpop.f32.mrf.mxu0
    %v693 = vadd.f32 %v361, %v692
    %694 = vmatmul.f32.gmra.mxu0 %v222
    %v695 = vpop.f32.mrf.mxu0
    %v696 = vadd.f32 %v361, %v695
    %697 = vdwg.mxu0
    %v698 = vld [vmem:[#allocation5] sm:$0xff]
    %v699 = vld [vmem:[#allocation5 + $0x8] sm:$0xff]
    %v700 = vld [vmem:[#allocation5 + $0x10] sm:$0xff]
    %v701 = vld [vmem:[#allocation5 + $0x18] sm:$0xff]
    %v702 = vld [vmem:[#allocation5 + $0x20] sm:$0xff]
    %v703 = vld [vmem:[#allocation5 + $0x28] sm:$0xff]
    %v704 = vld [vmem:[#allocation5 + $0x30] sm:$0xff]
    %v705 = vld [vmem:[#allocation5 + $0x38] sm:$0xff]
    %v706 = vld [vmem:[#allocation5 + $0x40] sm:$0xff]
    %v707 = vld [vmem:[#allocation5 + $0x48] sm:$0xff]
    %v708 = vld [vmem:[#allocation5 + $0x50] sm:$0xff]
    %v709 = vld [vmem:[#allocation5 + $0x58] sm:$0xff]
    %v710 = vld [vmem:[#allocation5 + $0x60] sm:$0xff]
    %v711 = vld [vmem:[#allocation5 + $0x68] sm:$0xff]
    %v712 = vld [vmem:[#allocation5 + $0x70] sm:$0xff]
    %v713 = vld [vmem:[#allocation5 + $0x78] sm:$0xff]
    %v714 = vld [vmem:[#allocation5 + $0x80] sm:$0xff]
    %v715 = vld [vmem:[#allocation5 + $0x88] sm:$0xff]
    %v716 = vld [vmem:[#allocation5 + $0x90] sm:$0xff]
    %v717 = vld [vmem:[#allocation5 + $0x98] sm:$0xff]
    %v718 = vld [vmem:[#allocation5 + $0xa0] sm:$0xff]
    %v719 = vld [vmem:[#allocation5 + $0xa8] sm:$0xff]
    %v720 = vld [vmem:[#allocation5 + $0xb0] sm:$0xff]
    %v721 = vld [vmem:[#allocation5 + $0xb8] sm:$0xff]
    %v722 = vld [vmem:[#allocation5 + $0xc0] sm:$0xff]
    %v723 = vld [vmem:[#allocation5 + $0xc8] sm:$0xff]
    %v724 = vld [vmem:[#allocation5 + $0xd0] sm:$0xff]
    %v725 = vld [vmem:[#allocation5 + $0xd8] sm:$0xff]
    %v726 = vld [vmem:[#allocation5 + $0xe0] sm:$0xff]
    %v727 = vld [vmem:[#allocation5 + $0xe8] sm:$0xff]
    %v728 = vld [vmem:[#allocation5 + $0xf0] sm:$0xff]
    %v729 = vld [vmem:[#allocation5 + $0xf8] sm:$0xff]
    %v730 = vld [vmem:[#allocation5 + $0x100] sm:$0xff]
    %v731 = vld [vmem:[#allocation5 + $0x108] sm:$0xff]
    %v732 = vld [vmem:[#allocation5 + $0x110] sm:$0xff]
    %v733 = vld [vmem:[#allocation5 + $0x118] sm:$0xff]
    %v734 = vld [vmem:[#allocation5 + $0x120] sm:$0xff]
    %v735 = vld [vmem:[#allocation5 + $0x128] sm:$0xff]
    %v736 = vld [vmem:[#allocation5 + $0x130] sm:$0xff]
    %v737 = vld [vmem:[#allocation5 + $0x138] sm:$0xff]
    %v738 = vld [vmem:[#allocation5 + $0x140] sm:$0xff]
    %v739 = vld [vmem:[#allocation5 + $0x148] sm:$0xff]
    %v740 = vld [vmem:[#allocation5 + $0x150] sm:$0xff]
    %v741 = vld [vmem:[#allocation5 + $0x158] sm:$0xff]
    %v742 = vld [vmem:[#allocation5 + $0x160] sm:$0xff]
    %v743 = vld [vmem:[#allocation5 + $0x168] sm:$0xff]
    %v744 = vld [vmem:[#allocation5 + $0x170] sm:$0xff]
    %v745 = vld [vmem:[#allocation5 + $0x178] sm:$0xff]
    %v746 = vld [vmem:[#allocation5 + $0x180] sm:$0xff]
    %v747 = vld [vmem:[#allocation5 + $0x188] sm:$0xff]
    %v748 = vld [vmem:[#allocation5 + $0x190] sm:$0xff]
    %v749 = vld [vmem:[#allocation5 + $0x198] sm:$0xff]
    %v750 = vld [vmem:[#allocation5 + $0x1a0] sm:$0xff]
    %v751 = vld [vmem:[#allocation5 + $0x1a8] sm:$0xff]
    %v752 = vld [vmem:[#allocation5 + $0x1b0] sm:$0xff]
    %v753 = vld [vmem:[#allocation5 + $0x1b8] sm:$0xff]
    %v754 = vld [vmem:[#allocation5 + $0x1c0] sm:$0xff]
    %v755 = vld [vmem:[#allocation5 + $0x1c8] sm:$0xff]
    %v756 = vld [vmem:[#allocation5 + $0x1d0] sm:$0xff]
    %v757 = vld [vmem:[#allocation5 + $0x1d8] sm:$0xff]
    %v758 = vld [vmem:[#allocation5 + $0x1e0] sm:$0xff]
    %v759 = vld [vmem:[#allocation5 + $0x1e8] sm:$0xff]
    %v760 = vld [vmem:[#allocation5 + $0x1f0] sm:$0xff]
    %v761 = vld [vmem:[#allocation5 + $0x1f8] sm:$0xff]
    %v762 = vld [vmem:[#allocation5 + $0x200] sm:$0xff]
    %v763 = vld [vmem:[#allocation5 + $0x208] sm:$0xff]
    %v764 = vld [vmem:[#allocation5 + $0x210] sm:$0xff]
    %v765 = vld [vmem:[#allocation5 + $0x218] sm:$0xff]
    %v766 = vld [vmem:[#allocation5 + $0x220] sm:$0xff]
    %v767 = vld [vmem:[#allocation5 + $0x228] sm:$0xff]
    %v768 = vld [vmem:[#allocation5 + $0x230] sm:$0xff]
    %v769 = vld [vmem:[#allocation5 + $0x238] sm:$0xff]
    %v770 = vld [vmem:[#allocation5 + $0x240] sm:$0xff]
    %v771 = vld [vmem:[#allocation5 + $0x248] sm:$0xff]
    %v772 = vld [vmem:[#allocation5 + $0x250] sm:$0xff]
    %v773 = vld [vmem:[#allocation5 + $0x258] sm:$0xff]
    %v774 = vld [vmem:[#allocation5 + $0x260] sm:$0xff]
    %v775 = vld [vmem:[#allocation5 + $0x268] sm:$0xff]
    %v776 = vld [vmem:[#allocation5 + $0x270] sm:$0xff]
    %v777 = vld [vmem:[#allocation5 + $0x278] sm:$0xff]
    %v778 = vld [vmem:[#allocation5 + $0x280] sm:$0xff]
    %v779 = vld [vmem:[#allocation5 + $0x288] sm:$0xff]
    %v780 = vld [vmem:[#allocation5 + $0x290] sm:$0xff]
    %v781 = vld [vmem:[#allocation5 + $0x298] sm:$0xff]
    %v782 = vld [vmem:[#allocation5 + $0x2a0] sm:$0xff]
    %v783 = vld [vmem:[#allocation5 + $0x2a8] sm:$0xff]
    %v784 = vld [vmem:[#allocation5 + $0x2b0] sm:$0xff]
    %v785 = vld [vmem:[#allocation5 + $0x2b8] sm:$0xff]
    %v786 = vld [vmem:[#allocation5 + $0x2c0] sm:$0xff]
    %v787 = vld [vmem:[#allocation5 + $0x2c8] sm:$0xff]
    %v788 = vld [vmem:[#allocation5 + $0x2d0] sm:$0xff]
    %v789 = vld [vmem:[#allocation5 + $0x2d8] sm:$0xff]
    %v790 = vld [vmem:[#allocation5 + $0x2e0] sm:$0xff]
    %v791 = vld [vmem:[#allocation5 + $0x2e8] sm:$0xff]
    %v792 = vld [vmem:[#allocation5 + $0x2f0] sm:$0xff]
    %v793 = vld [vmem:[#allocation5 + $0x2f8] sm:$0xff]
    %v794 = vld [vmem:[#allocation5 + $0x300] sm:$0xff]
    %v795 = vld [vmem:[#allocation5 + $0x308] sm:$0xff]
    %v796 = vld [vmem:[#allocation5 + $0x310] sm:$0xff]
    %v797 = vld [vmem:[#allocation5 + $0x318] sm:$0xff]
    %v798 = vld [vmem:[#allocation5 + $0x320] sm:$0xff]
    %v799 = vld [vmem:[#allocation5 + $0x328] sm:$0xff]
    %v800 = vld [vmem:[#allocation5 + $0x330] sm:$0xff]
    %v801 = vld [vmem:[#allocation5 + $0x338] sm:$0xff]
    %v802 = vld [vmem:[#allocation5 + $0x340] sm:$0xff]
    %v803 = vld [vmem:[#allocation5 + $0x348] sm:$0xff]
    %v804 = vld [vmem:[#allocation5 + $0x350] sm:$0xff]
    %v805 = vld [vmem:[#allocation5 + $0x358] sm:$0xff]
    %v806 = vld [vmem:[#allocation5 + $0x360] sm:$0xff]
    %v807 = vld [vmem:[#allocation5 + $0x368] sm:$0xff]
    %v808 = vld [vmem:[#allocation5 + $0x370] sm:$0xff]
    %v809 = vld [vmem:[#allocation5 + $0x378] sm:$0xff]
    %v810 = vld [vmem:[#allocation5 + $0x380] sm:$0xff]
    %v811 = vld [vmem:[#allocation5 + $0x388] sm:$0xff]
    %v812 = vld [vmem:[#allocation5 + $0x390] sm:$0xff]
    %v813 = vld [vmem:[#allocation5 + $0x398] sm:$0xff]
    %v814 = vld [vmem:[#allocation5 + $0x3a0] sm:$0xff]
    %v815 = vld [vmem:[#allocation5 + $0x3a8] sm:$0xff]
    %v816 = vld [vmem:[#allocation5 + $0x3b0] sm:$0xff]
    %v817 = vld [vmem:[#allocation5 + $0x3b8] sm:$0xff]
    %v818 = vld [vmem:[#allocation5 + $0x3c0] sm:$0xff]
    %v819 = vld [vmem:[#allocation5 + $0x3c8] sm:$0xff]
    %v820 = vld [vmem:[#allocation5 + $0x3d0] sm:$0xff]
    %v821 = vld [vmem:[#allocation5 + $0x3d8] sm:$0xff]
    %v822 = vld [vmem:[#allocation5 + $0x3e0] sm:$0xff]
    %v823 = vld [vmem:[#allocation5 + $0x3e8] sm:$0xff]
    %v824 = vld [vmem:[#allocation5 + $0x3f0] sm:$0xff]
    %v825 = vld [vmem:[#allocation5 + $0x3f8] sm:$0xff]
    %v826 = vld [vmem:[#allocation5 + $0x400] sm:$0xff]
    %v827 = vld [vmem:[#allocation5 + $0x408] sm:$0xff]
    %v828 = vld [vmem:[#allocation5 + $0x410] sm:$0xff]
    %v829 = vld [vmem:[#allocation5 + $0x418] sm:$0xff]
    %v830 = vld [vmem:[#allocation5 + $0x420] sm:$0xff]
    %v831 = vld [vmem:[#allocation5 + $0x428] sm:$0xff]
    %v832 = vld [vmem:[#allocation5 + $0x430] sm:$0xff]
    %v833 = vld [vmem:[#allocation5 + $0x438] sm:$0xff]
    %v834 = vld [vmem:[#allocation5 + $0x440] sm:$0xff]
    %v835 = vld [vmem:[#allocation5 + $0x448] sm:$0xff]
    %v836 = vld [vmem:[#allocation5 + $0x450] sm:$0xff]
    %v837 = vld [vmem:[#allocation5 + $0x458] sm:$0xff]
    %v838 = vld [vmem:[#allocation5 + $0x460] sm:$0xff]
    %v839 = vld [vmem:[#allocation5 + $0x468] sm:$0xff]
    %v840 = vld [vmem:[#allocation5 + $0x470] sm:$0xff]
    %v841 = vld [vmem:[#allocation5 + $0x478] sm:$0xff]
    %v842 = vld [vmem:[#allocation5 + $0x480] sm:$0xff]
    %v843 = vld [vmem:[#allocation5 + $0x488] sm:$0xff]
    %v844 = vld [vmem:[#allocation5 + $0x490] sm:$0xff]
    %v845 = vld [vmem:[#allocation5 + $0x498] sm:$0xff]
    %v846 = vld [vmem:[#allocation5 + $0x4a0] sm:$0xff]
    %v847 = vld [vmem:[#allocation5 + $0x4a8] sm:$0xff]
    %v848 = vld [vmem:[#allocation5 + $0x4b0] sm:$0xff]
    %v849 = vld [vmem:[#allocation5 + $0x4b8] sm:$0xff]
    %v850 = vld [vmem:[#allocation5 + $0x4c0] sm:$0xff]
    %v851 = vld [vmem:[#allocation5 + $0x4c8] sm:$0xff]
    %v852 = vld [vmem:[#allocation5 + $0x4d0] sm:$0xff]
    %v853 = vld [vmem:[#allocation5 + $0x4d8] sm:$0xff]
    %v854 = vld [vmem:[#allocation5 + $0x4e0] sm:$0xff]
    %v855 = vld [vmem:[#allocation5 + $0x4e8] sm:$0xff]
    %v856 = vld [vmem:[#allocation5 + $0x4f0] sm:$0xff]
    %v857 = vld [vmem:[#allocation5 + $0x4f8] sm:$0xff]
    %v858 = vld [vmem:[#allocation5 + $0x500] sm:$0xff]
    %v859 = vld [vmem:[#allocation5 + $0x508] sm:$0xff]
    %v860 = vld [vmem:[#allocation5 + $0x510] sm:$0xff]
    %v861 = vld [vmem:[#allocation5 + $0x518] sm:$0xff]
    %v862 = vld [vmem:[#allocation5 + $0x520] sm:$0xff]
    %v863 = vld [vmem:[#allocation5 + $0x528] sm:$0xff]
    %v864 = vld [vmem:[#allocation5 + $0x530] sm:$0xff]
    %v865 = vld [vmem:[#allocation5 + $0x538] sm:$0xff]
    %v866 = vld [vmem:[#allocation5 + $0x540] sm:$0xff]
    %v867 = vld [vmem:[#allocation5 + $0x548] sm:$0xff]
    %v868 = vld [vmem:[#allocation5 + $0x550] sm:$0xff]
    %v869 = vld [vmem:[#allocation5 + $0x558] sm:$0xff]
    %v870 = vld [vmem:[#allocation5 + $0x560] sm:$0xff]
    %v871 = vld [vmem:[#allocation5 + $0x568] sm:$0xff]
    %v872 = vld [vmem:[#allocation5 + $0x570] sm:$0xff]
    %v873 = vld [vmem:[#allocation5 + $0x578] sm:$0xff]
    %v874 = vld [vmem:[#allocation5 + $0x580] sm:$0xff]
    %v875 = vld [vmem:[#allocation5 + $0x588] sm:$0xff]
    %v876 = vld [vmem:[#allocation5 + $0x590] sm:$0xff]
    %v877 = vld [vmem:[#allocation5 + $0x598] sm:$0xff]
    %v878 = vld [vmem:[#allocation5 + $0x5a0] sm:$0xff]
    %v879 = vld [vmem:[#allocation5 + $0x5a8] sm:$0xff]
    %v880 = vld [vmem:[#allocation5 + $0x5b0] sm:$0xff]
    %v881 = vld [vmem:[#allocation5 + $0x5b8] sm:$0xff]
    %v882 = vld [vmem:[#allocation5 + $0x5c0] sm:$0xff]
    %v883 = vld [vmem:[#allocation5 + $0x5c8] sm:$0xff]
    %v884 = vld [vmem:[#allocation5 + $0x5d0] sm:$0xff]
    %v885 = vld [vmem:[#allocation5 + $0x5d8] sm:$0xff]
    %v886 = vld [vmem:[#allocation5 + $0x5e0] sm:$0xff]
    %v887 = vld [vmem:[#allocation5 + $0x5e8] sm:$0xff]
    %v888 = vld [vmem:[#allocation5 + $0x5f0] sm:$0xff]
    %v889 = vld [vmem:[#allocation5 + $0x5f8] sm:$0xff]
    %v890 = vld [vmem:[#allocation5 + $0x600] sm:$0xff]
    %v891 = vld [vmem:[#allocation5 + $0x608] sm:$0xff]
    %v892 = vld [vmem:[#allocation5 + $0x610] sm:$0xff]
    %v893 = vld [vmem:[#allocation5 + $0x618] sm:$0xff]
    %v894 = vld [vmem:[#allocation5 + $0x620] sm:$0xff]
    %v895 = vld [vmem:[#allocation5 + $0x628] sm:$0xff]
    %v896 = vld [vmem:[#allocation5 + $0x630] sm:$0xff]
    %v897 = vld [vmem:[#allocation5 + $0x638] sm:$0xff]
    %v898 = vld [vmem:[#allocation5 + $0x640] sm:$0xff]
    %v899 = vld [vmem:[#allocation5 + $0x648] sm:$0xff]
    %v900 = vld [vmem:[#allocation5 + $0x650] sm:$0xff]
    %v901 = vld [vmem:[#allocation5 + $0x658] sm:$0xff]
    %v902 = vld [vmem:[#allocation5 + $0x660] sm:$0xff]
    %v903 = vld [vmem:[#allocation5 + $0x668] sm:$0xff]
    %v904 = vld [vmem:[#allocation5 + $0x670] sm:$0xff]
    %v905 = vld [vmem:[#allocation5 + $0x678] sm:$0xff]
    %v906 = vld [vmem:[#allocation5 + $0x680] sm:$0xff]
    %v907 = vld [vmem:[#allocation5 + $0x688] sm:$0xff]
    %v908 = vld [vmem:[#allocation5 + $0x690] sm:$0xff]
    %v909 = vld [vmem:[#allocation5 + $0x698] sm:$0xff]
    %v910 = vld [vmem:[#allocation5 + $0x6a0] sm:$0xff]
    %v911 = vld [vmem:[#allocation5 + $0x6a8] sm:$0xff]
    %v912 = vld [vmem:[#allocation5 + $0x6b0] sm:$0xff]
    %v913 = vld [vmem:[#allocation5 + $0x6b8] sm:$0xff]
    %v914 = vld [vmem:[#allocation5 + $0x6c0] sm:$0xff]
    %v915 = vld [vmem:[#allocation5 + $0x6c8] sm:$0xff]
    %v916 = vld [vmem:[#allocation5 + $0x6d0] sm:$0xff]
    %v917 = vld [vmem:[#allocation5 + $0x6d8] sm:$0xff]
    %v918 = vld [vmem:[#allocation5 + $0x6e0] sm:$0xff]
    %v919 = vld [vmem:[#allocation5 + $0x6e8] sm:$0xff]
    %v920 = vld [vmem:[#allocation5 + $0x6f0] sm:$0xff]
    %v921 = vld [vmem:[#allocation5 + $0x6f8] sm:$0xff]
    %v922 = vld [vmem:[#allocation5 + $0x700] sm:$0xff]
    %v923 = vld [vmem:[#allocation5 + $0x708] sm:$0xff]
    %v924 = vld [vmem:[#allocation5 + $0x710] sm:$0xff]
    %v925 = vld [vmem:[#allocation5 + $0x718] sm:$0xff]
    %v926 = vld [vmem:[#allocation5 + $0x720] sm:$0xff]
    %v927 = vld [vmem:[#allocation5 + $0x728] sm:$0xff]
    %v928 = vld [vmem:[#allocation5 + $0x730] sm:$0xff]
    %v929 = vld [vmem:[#allocation5 + $0x738] sm:$0xff]
    %v930 = vld [vmem:[#allocation5 + $0x740] sm:$0xff]
    %v931 = vld [vmem:[#allocation5 + $0x748] sm:$0xff]
    %v932 = vld [vmem:[#allocation5 + $0x750] sm:$0xff]
    %v933 = vld [vmem:[#allocation5 + $0x758] sm:$0xff]
    %v934 = vld [vmem:[#allocation5 + $0x760] sm:$0xff]
    %v935 = vld [vmem:[#allocation5 + $0x768] sm:$0xff]
    %v936 = vld [vmem:[#allocation5 + $0x770] sm:$0xff]
    %v937 = vld [vmem:[#allocation5 + $0x778] sm:$0xff]
    %v938 = vld [vmem:[#allocation5 + $0x780] sm:$0xff]
    %v939 = vld [vmem:[#allocation5 + $0x788] sm:$0xff]
    %v940 = vld [vmem:[#allocation5 + $0x790] sm:$0xff]
    %v941 = vld [vmem:[#allocation5 + $0x798] sm:$0xff]
    %v942 = vld [vmem:[#allocation5 + $0x7a0] sm:$0xff]
    %v943 = vld [vmem:[#allocation5 + $0x7a8] sm:$0xff]
    %v944 = vld [vmem:[#allocation5 + $0x7b0] sm:$0xff]
    %v945 = vld [vmem:[#allocation5 + $0x7b8] sm:$0xff]
    %v946 = vld [vmem:[#allocation5 + $0x7c0] sm:$0xff]
    %v947 = vld [vmem:[#allocation5 + $0x7c8] sm:$0xff]
    %v948 = vld [vmem:[#allocation5 + $0x7d0] sm:$0xff]
    %v949 = vld [vmem:[#allocation5 + $0x7d8] sm:$0xff]
    %v950 = vld [vmem:[#allocation5 + $0x7e0] sm:$0xff]
    %v951 = vld [vmem:[#allocation5 + $0x7e8] sm:$0xff]
    %v952 = vld [vmem:[#allocation5 + $0x7f0] sm:$0xff]
    %v953 = vld [vmem:[#allocation5 + $0x7f8] sm:$0xff]
    %954 = vmatpush.msra.mxu0 %v818
    %955 = vmatpush.msra.mxu0 %v810
    %956 = vmatpush.msra.mxu0 %v802
    %957 = vmatpush.msra.mxu0 %v794
    %958 = vmatpush.msra.mxu0 %v786
    %959 = vmatpush.msra.mxu0 %v778
    %960 = vmatpush.msra.mxu0 %v770
    %961 = vmatpush.msra.mxu0 %v762
    %962 = vmatpush.msra.mxu0 %v754
    %963 = vmatpush.msra.mxu0 %v746
    %964 = vmatpush.msra.mxu0 %v738
    %965 = vmatpush.msra.mxu0 %v730
    %966 = vmatpush.msra.mxu0 %v722
    %967 = vmatpush.msra.mxu0 %v714
    %968 = vmatpush.msra.mxu0 %v706
    %969 = vmatpush.msra.mxu0 %v698
    %970 = vmatmul.f32.gmra.mxu0 0.0
    %v971 = vpop.f32.mrf.mxu0
    %v972 = vadd.f32 0.0, %v971
    %973 = vdwg.mxu0
    %974 = vmatpush.msra.mxu0 %v946
    %975 = vmatpush.msra.mxu0 %v938
    %976 = vmatpush.msra.mxu0 %v930
    %977 = vmatpush.msra.mxu0 %v922
    %978 = vmatpush.msra.mxu0 %v914
    %979 = vmatpush.msra.mxu0 %v906
    %980 = vmatpush.msra.mxu0 %v898
    %981 = vmatpush.msra.mxu0 %v890
    %982 = vmatpush.msra.mxu0 %v882
    %983 = vmatpush.msra.mxu0 %v874
    %984 = vmatpush.msra.mxu0 %v866
    %985 = vmatpush.msra.mxu0 %v858
    %986 = vmatpush.msra.mxu0 %v850
    %987 = vmatpush.msra.mxu0 %v842
    %988 = vmatpush.msra.mxu0 %v834
    %989 = vmatpush.msra.mxu0 %v826
    %990 = vmatmul.f32.gmra.mxu0 0.0
    %v991 = vpop.f32.mrf.mxu0
    %v992 = vadd.f32 %v972, %v991
    %993 = vdwg.mxu0
    %994 = vmatpush.msra.mxu0 %v819
    %995 = vmatpush.msra.mxu0 %v811
    %996 = vmatpush.msra.mxu0 %v803
    %997 = vmatpush.msra.mxu0 %v795
    %998 = vmatpush.msra.mxu0 %v787
    %999 = vmatpush.msra.mxu0 %v779
    %1000 = vmatpush.msra.mxu0 %v771
    %1001 = vmatpush.msra.mxu0 %v763
    %1002 = vmatpush.msra.mxu0 %v755
    %1003 = vmatpush.msra.mxu0 %v747
    %1004 = vmatpush.msra.mxu0 %v739
    %1005 = vmatpush.msra.mxu0 %v731
    %1006 = vmatpush.msra.mxu0 %v723
    %1007 = vmatpush.msra.mxu0 %v715
    %1008 = vmatpush.msra.mxu0 %v707
    %1009 = vmatpush.msra.mxu0 %v699
    %1010 = vmatmul.f32.gmra.mxu0 0.0
    %v1011 = vpop.f32.mrf.mxu0
    %v1012 = vadd.f32 0.0, %v1011
    %1013 = vdwg.mxu0
    %1014 = vmatpush.msra.mxu0 %v947
    %1015 = vmatpush.msra.mxu0 %v939
    %1016 = vmatpush.msra.mxu0 %v931
    %1017 = vmatpush.msra.mxu0 %v923
    %1018 = vmatpush.msra.mxu0 %v915
    %1019 = vmatpush.msra.mxu0 %v907
    %1020 = vmatpush.msra.mxu0 %v899
    %1021 = vmatpush.msra.mxu0 %v891
    %1022 = vmatpush.msra.mxu0 %v883
    %1023 = vmatpush.msra.mxu0 %v875
    %1024 = vmatpush.msra.mxu0 %v867
    %1025 = vmatpush.msra.mxu0 %v859
    %1026 = vmatpush.msra.mxu0 %v851
    %1027 = vmatpush.msra.mxu0 %v843
    %1028 = vmatpush.msra.mxu0 %v835
    %1029 = vmatpush.msra.mxu0 %v827
    %1030 = vmatmul.f32.gmra.mxu0 0.0
    %v1031 = vpop.f32.mrf.mxu0
    %v1032 = vadd.f32 %v1012, %v1031
    %1033 = vdwg.mxu0
    %1034 = vmatpush.msra.mxu0 %v820
    %1035 = vmatpush.msra.mxu0 %v812
    %1036 = vmatpush.msra.mxu0 %v804
    %1037 = vmatpush.msra.mxu0 %v796
    %1038 = vmatpush.msra.mxu0 %v788
    %1039 = vmatpush.msra.mxu0 %v780
    %1040 = vmatpush.msra.mxu0 %v772
    %1041 = vmatpush.msra.mxu0 %v764
    %1042 = vmatpush.msra.mxu0 %v756
    %1043 = vmatpush.msra.mxu0 %v748
    %1044 = vmatpush.msra.mxu0 %v740
    %1045 = vmatpush.msra.mxu0 %v732
    %1046 = vmatpush.msra.mxu0 %v724
    %1047 = vmatpush.msra.mxu0 %v716
    %1048 = vmatpush.msra.mxu0 %v708
    %1049 = vmatpush.msra.mxu0 %v700
    %1050 = vmatmul.f32.gmra.mxu0 0.0
    %v1051 = vpop.f32.mrf.mxu0
    %v1052 = vadd.f32 0.0, %v1051
    %1053 = vdwg.mxu0
    %1054 = vmatpush.msra.mxu0 %v948
    %1055 = vmatpush.msra.mxu0 %v940
    %1056 = vmatpush.msra.mxu0 %v932
    %1057 = vmatpush.msra.mxu0 %v924
    %1058 = vmatpush.msra.mxu0 %v916
    %1059 = vmatpush.msra.mxu0 %v908
    %1060 = vmatpush.msra.mxu0 %v900
    %1061 = vmatpush.msra.mxu0 %v892
    %1062 = vmatpush.msra.mxu0 %v884
    %1063 = vmatpush.msra.mxu0 %v876
    %1064 = vmatpush.msra.mxu0 %v868
    %1065 = vmatpush.msra.mxu0 %v860
    %1066 = vmatpush.msra.mxu0 %v852
    %1067 = vmatpush.msra.mxu0 %v844
    %1068 = vmatpush.msra.mxu0 %v836
    %1069 = vmatpush.msra.mxu0 %v828
    %1070 = vmatmul.f32.gmra.mxu0 0.0
    %v1071 = vpop.f32.mrf.mxu0
    %v1072 = vadd.f32 %v1052, %v1071
    %1073 = vdwg.mxu0
    %1074 = vmatpush.msra.mxu0 %v821
    %1075 = vmatpush.msra.mxu0 %v813
    %1076 = vmatpush.msra.mxu0 %v805
    %1077 = vmatpush.msra.mxu0 %v797
    %1078 = vmatpush.msra.mxu0 %v789
    %1079 = vmatpush.msra.mxu0 %v781
    %1080 = vmatpush.msra.mxu0 %v773
    %1081 = vmatpush.msra.mxu0 %v765
    %1082 = vmatpush.msra.mxu0 %v757
    %1083 = vmatpush.msra.mxu0 %v749
    %1084 = vmatpush.msra.mxu0 %v741
    %1085 = vmatpush.msra.mxu0 %v733
    %1086 = vmatpush.msra.mxu0 %v725
    %1087 = vmatpush.msra.mxu0 %v717
    %1088 = vmatpush.msra.mxu0 %v709
    %1089 = vmatpush.msra.mxu0 %v701
    %1090 = vmatmul.f32.gmra.mxu0 0.0
    %v1091 = vpop.f32.mrf.mxu0
    %v1092 = vadd.f32 0.0, %v1091
    %1093 = vdwg.mxu0
    %1094 = vmatpush.msra.mxu0 %v949
    %1095 = vmatpush.msra.mxu0 %v941
    %1096 = vmatpush.msra.mxu0 %v933
    %1097 = vmatpush.msra.mxu0 %v925
    %1098 = vmatpush.msra.mxu0 %v917
    %1099 = vmatpush.msra.mxu0 %v909
    %1100 = vmatpush.msra.mxu0 %v901
    %1101 = vmatpush.msra.mxu0 %v893
    %1102 = vmatpush.msra.mxu0 %v885
    %1103 = vmatpush.msra.mxu0 %v877
    %1104 = vmatpush.msra.mxu0 %v869
    %1105 = vmatpush.msra.mxu0 %v861
    %1106 = vmatpush.msra.mxu0 %v853
    %1107 = vmatpush.msra.mxu0 %v845
    %1108 = vmatpush.msra.mxu0 %v837
    %1109 = vmatpush.msra.mxu0 %v829
    %1110 = vmatmul.f32.gmra.mxu0 0.0
    %v1111 = vpop.f32.mrf.mxu0
    %v1112 = vadd.f32 %v1092, %v1111
    %1113 = vdwg.mxu0
    %1114 = vmatpush.msra.mxu0 %v822
    %1115 = vmatpush.msra.mxu0 %v814
    %1116 = vmatpush.msra.mxu0 %v806
    %1117 = vmatpush.msra.mxu0 %v798
    %1118 = vmatpush.msra.mxu0 %v790
    %1119 = vmatpush.msra.mxu0 %v782
    %1120 = vmatpush.msra.mxu0 %v774
    %1121 = vmatpush.msra.mxu0 %v766
    %1122 = vmatpush.msra.mxu0 %v758
    %1123 = vmatpush.msra.mxu0 %v750
    %1124 = vmatpush.msra.mxu0 %v742
    %1125 = vmatpush.msra.mxu0 %v734
    %1126 = vmatpush.msra.mxu0 %v726
    %1127 = vmatpush.msra.mxu0 %v718
    %1128 = vmatpush.msra.mxu0 %v710
    %1129 = vmatpush.msra.mxu0 %v702
    %1130 = vmatmul.f32.gmra.mxu0 0.0
    %v1131 = vpop.f32.mrf.mxu0
    %v1132 = vadd.f32 0.0, %v1131
    %1133 = vdwg.mxu0
    %1134 = vmatpush.msra.mxu0 %v950
    %1135 = vmatpush.msra.mxu0 %v942
    %1136 = vmatpush.msra.mxu0 %v934
    %1137 = vmatpush.msra.mxu0 %v926
    %1138 = vmatpush.msra.mxu0 %v918
    %1139 = vmatpush.msra.mxu0 %v910
    %1140 = vmatpush.msra.mxu0 %v902
    %1141 = vmatpush.msra.mxu0 %v894
    %1142 = vmatpush.msra.mxu0 %v886
    %1143 = vmatpush.msra.mxu0 %v878
    %1144 = vmatpush.msra.mxu0 %v870
    %1145 = vmatpush.msra.mxu0 %v862
    %1146 = vmatpush.msra.mxu0 %v854
    %1147 = vmatpush.msra.mxu0 %v846
    %1148 = vmatpush.msra.mxu0 %v838
    %1149 = vmatpush.msra.mxu0 %v830
    %1150 = vmatmul.f32.gmra.mxu0 0.0
    %v1151 = vpop.f32.mrf.mxu0
    %v1152 = vadd.f32 %v1132, %v1151
    %1153 = vdwg.mxu0
    %1154 = vmatpush.msra.mxu0 %v823
    %1155 = vmatpush.msra.mxu0 %v815
    %1156 = vmatpush.msra.mxu0 %v807
    %1157 = vmatpush.msra.mxu0 %v799
    %1158 = vmatpush.msra.mxu0 %v791
    %1159 = vmatpush.msra.mxu0 %v783
    %1160 = vmatpush.msra.mxu0 %v775
    %1161 = vmatpush.msra.mxu0 %v767
    %1162 = vmatpush.msra.mxu0 %v759
    %1163 = vmatpush.msra.mxu0 %v751
    %1164 = vmatpush.msra.mxu0 %v743
    %1165 = vmatpush.msra.mxu0 %v735
    %1166 = vmatpush.msra.mxu0 %v727
    %1167 = vmatpush.msra.mxu0 %v719
    %1168 = vmatpush.msra.mxu0 %v711
    %1169 = vmatpush.msra.mxu0 %v703
    %1170 = vmatmul.f32.gmra.mxu0 0.0
    %v1171 = vpop.f32.mrf.mxu0
    %v1172 = vadd.f32 0.0, %v1171
    %1173 = vdwg.mxu0
    %1174 = vmatpush.msra.mxu0 %v951
    %1175 = vmatpush.msra.mxu0 %v943
    %1176 = vmatpush.msra.mxu0 %v935
    %1177 = vmatpush.msra.mxu0 %v927
    %1178 = vmatpush.msra.mxu0 %v919
    %1179 = vmatpush.msra.mxu0 %v911
    %1180 = vmatpush.msra.mxu0 %v903
    %1181 = vmatpush.msra.mxu0 %v895
    %1182 = vmatpush.msra.mxu0 %v887
    %1183 = vmatpush.msra.mxu0 %v879
    %1184 = vmatpush.msra.mxu0 %v871
    %1185 = vmatpush.msra.mxu0 %v863
    %1186 = vmatpush.msra.mxu0 %v855
    %1187 = vmatpush.msra.mxu0 %v847
    %1188 = vmatpush.msra.mxu0 %v839
    %1189 = vmatpush.msra.mxu0 %v831
    %1190 = vmatmul.f32.gmra.mxu0 0.0
    %v1191 = vpop.f32.mrf.mxu0
    %v1192 = vadd.f32 %v1172, %v1191
    %1193 = vdwg.mxu0
    %1194 = vmatpush.msra.mxu0 %v824
    %1195 = vmatpush.msra.mxu0 %v816
    %1196 = vmatpush.msra.mxu0 %v808
    %1197 = vmatpush.msra.mxu0 %v800
    %1198 = vmatpush.msra.mxu0 %v792
    %1199 = vmatpush.msra.mxu0 %v784
    %1200 = vmatpush.msra.mxu0 %v776
    %1201 = vmatpush.msra.mxu0 %v768
    %1202 = vmatpush.msra.mxu0 %v760
    %1203 = vmatpush.msra.mxu0 %v752
    %1204 = vmatpush.msra.mxu0 %v744
    %1205 = vmatpush.msra.mxu0 %v736
    %1206 = vmatpush.msra.mxu0 %v728
    %1207 = vmatpush.msra.mxu0 %v720
    %1208 = vmatpush.msra.mxu0 %v712
    %1209 = vmatpush.msra.mxu0 %v704
    %1210 = vmatmul.f32.gmra.mxu0 0.0
    %v1211 = vpop.f32.mrf.mxu0
    %v1212 = vadd.f32 0.0, %v1211
    %1213 = vdwg.mxu0
    %1214 = vmatpush.msra.mxu0 %v952
    %1215 = vmatpush.msra.mxu0 %v944
    %1216 = vmatpush.msra.mxu0 %v936
    %1217 = vmatpush.msra.mxu0 %v928
    %1218 = vmatpush.msra.mxu0 %v920
    %1219 = vmatpush.msra.mxu0 %v912
    %1220 = vmatpush.msra.mxu0 %v904
    %1221 = vmatpush.msra.mxu0 %v896
    %1222 = vmatpush.msra.mxu0 %v888
    %1223 = vmatpush.msra.mxu0 %v880
    %1224 = vmatpush.msra.mxu0 %v872
    %1225 = vmatpush.msra.mxu0 %v864
    %1226 = vmatpush.msra.mxu0 %v856
    %1227 = vmatpush.msra.mxu0 %v848
    %1228 = vmatpush.msra.mxu0 %v840
    %1229 = vmatpush.msra.mxu0 %v832
    %1230 = vmatmul.f32.gmra.mxu0 0.0
    %v1231 = vpop.f32.mrf.mxu0
    %v1232 = vadd.f32 %v1212, %v1231
    %1233 = vdwg.mxu0
    %1234 = vmatpush.msra.mxu0 %v825
    %1235 = vmatpush.msra.mxu0 %v817
    %1236 = vmatpush.msra.mxu0 %v809
    %1237 = vmatpush.msra.mxu0 %v801
    %1238 = vmatpush.msra.mxu0 %v793
    %1239 = vmatpush.msra.mxu0 %v785
    %1240 = vmatpush.msra.mxu0 %v777
    %1241 = vmatpush.msra.mxu0 %v769
    %1242 = vmatpush.msra.mxu0 %v761
    %1243 = vmatpush.msra.mxu0 %v753
    %1244 = vmatpush.msra.mxu0 %v745
    %1245 = vmatpush.msra.mxu0 %v737
    %1246 = vmatpush.msra.mxu0 %v729
    %1247 = vmatpush.msra.mxu0 %v721
    %1248 = vmatpush.msra.mxu0 %v713
    %1249 = vmatpush.msra.mxu0 %v705
    %1250 = vmatmul.f32.gmra.mxu0 0.0
    %v1251 = vpop.f32.mrf.mxu0
    %v1252 = vadd.f32 0.0, %v1251
    %1253 = vdwg.mxu0
    %1254 = vmatpush.msra.mxu0 %v953
    %1255 = vmatpush.msra.mxu0 %v945
    %1256 = vmatpush.msra.mxu0 %v937
    %1257 = vmatpush.msra.mxu0 %v929
    %1258 = vmatpush.msra.mxu0 %v921
    %1259 = vmatpush.msra.mxu0 %v913
    %1260 = vmatpush.msra.mxu0 %v905
    %1261 = vmatpush.msra.mxu0 %v897
    %1262 = vmatpush.msra.mxu0 %v889
    %1263 = vmatpush.msra.mxu0 %v881
    %1264 = vmatpush.msra.mxu0 %v873
    %1265 = vmatpush.msra.mxu0 %v865
    %1266 = vmatpush.msra.mxu0 %v857
    %1267 = vmatpush.msra.mxu0 %v849
    %1268 = vmatpush.msra.mxu0 %v841
    %1269 = vmatpush.msra.mxu0 %v833
    %1270 = vmatmul.f32.gmra.mxu0 0.0
    %v1271 = vpop.f32.mrf.mxu0
    %v1272 = vadd.f32 %v1252, %v1271
    %1273 = vdwg.mxu0
    %v1274 = vadd.f32 %v388, %v992
    %v1275 = vadd.f32 %v429, %v1032
    %v1276 = vadd.f32 %v470, %v1072
    %v1277 = vadd.f32 %v511, %v1112
    %v1278 = vadd.f32 %v552, %v1152
    %v1279 = vadd.f32 %v593, %v1192
    %v1280 = vadd.f32 %v634, %v1232
    %v1281 = vadd.f32 %v675, %v1272
    %v1282 = vmul.f32 %v1274, 0.5
    %v1283 = vmul.f32 %v1275, 0.5
    %v1284 = vtanh.pop %v1282
    %v1285 = vtanh.pop %v1283
    %v1286 = vadd.f32 %v1284, 1.0
    %v1287 = vadd.f32 %v1285, 1.0
    %v1288 = vmul.f32 %v1286, 0.5
    %v1289 = vmul.f32 %v1287, 0.5
    %v1290 = vmul.f32 %v1276, 0.5
    %v1291 = vmul.f32 %v1277, 0.5
    %v1292 = vtanh.pop %v1290
    %v1293 = vtanh.pop %v1291
    %v1294 = vadd.f32 %v1292, 1.0
    %v1295 = vadd.f32 %v1293, 1.0
    %v1296 = vmul.f32 %v1294, 0.5
    %v1297 = vmul.f32 %v1295, 0.5
    %v1298 = vtanh.pop %v1278
    %v1299 = vtanh.pop %v1279
    %v1300 = vmul.f32 %v1280, 0.5
    %v1301 = vmul.f32 %v1281, 0.5
    %v1302 = vtanh.pop %v1300
    %v1303 = vtanh.pop %v1301
    %v1304 = vadd.f32 %v1302, 1.0
    %v1305 = vadd.f32 %v1303, 1.0
    %v1306 = vmul.f32 %v1304, 0.5
    %v1307 = vmul.f32 %v1305, 0.5
    %v1308 = vmul.f32 %v1296, 0.0
    %v1309 = vmul.f32 %v1297, 0.0
    %v1310 = vmul.f32 %v1288, %v1298
    %v1311 = vmul.f32 %v1289, %v1299
    %v1312 = vadd.f32 %v1308, %v1310
    %v1313 = vadd.f32 %v1309, %v1311
    %v1314 = vtanh.pop %v1312
    %v1315 = vtanh.pop %v1313
    %v1316 = vmul.f32 %v1306, %v1314
    %v1317 = vmul.f32 %v1307, %v1315
    %1318 = vmatpush.msra.mxu0 %v818
    %1319 = vmatpush.msra.mxu0 %v810
    %1320 = vmatpush.msra.mxu0 %v802
    %1321 = vmatpush.msra.mxu0 %v794
    %1322 = vmatpush.msra.mxu0 %v786
    %1323 = vmatpush.msra.mxu0 %v778
    %1324 = vmatpush.msra.mxu0 %v770
    %1325 = vmatpush.msra.mxu0 %v762
    %1326 = vmatpush.msra.mxu0 %v754
    %1327 = vmatpush.msra.mxu0 %v746
    %1328 = vmatpush.msra.mxu0 %v738
    %1329 = vmatpush.msra.mxu0 %v730
    %1330 = vmatpush.msra.mxu0 %v722
    %1331 = vmatpush.msra.mxu0 %v714
    %1332 = vmatpush.msra.mxu0 %v706
    %1333 = vmatpush.msra.mxu0 %v698
    %1334 = vmatmul.f32.gmra.mxu0 %v1316
    %v1335 = vpop.f32.mrf.mxu0
    %v1336 = vadd.f32 0.0, %v1335
    %1337 = vdwg.mxu0
    %1338 = vmatpush.msra.mxu0 %v946
    %1339 = vmatpush.msra.mxu0 %v938
    %1340 = vmatpush.msra.mxu0 %v930
    %1341 = vmatpush.msra.mxu0 %v922
    %1342 = vmatpush.msra.mxu0 %v914
    %1343 = vmatpush.msra.mxu0 %v906
    %1344 = vmatpush.msra.mxu0 %v898
    %1345 = vmatpush.msra.mxu0 %v890
    %1346 = vmatpush.msra.mxu0 %v882
    %1347 = vmatpush.msra.mxu0 %v874
    %1348 = vmatpush.msra.mxu0 %v866
    %1349 = vmatpush.msra.mxu0 %v858
    %1350 = vmatpush.msra.mxu0 %v850
    %1351 = vmatpush.msra.mxu0 %v842
    %1352 = vmatpush.msra.mxu0 %v834
    %1353 = vmatpush.msra.mxu0 %v826
    %1354 = vmatmul.f32.gmra.mxu0 %v1317
    %v1355 = vpop.f32.mrf.mxu0
    %v1356 = vadd.f32 %v1336, %v1355
    %1357 = vdwg.mxu0
    %1358 = vmatpush.msra.mxu0 %v819
    %1359 = vmatpush.msra.mxu0 %v811
    %1360 = vmatpush.msra.mxu0 %v803
    %1361 = vmatpush.msra.mxu0 %v795
    %1362 = vmatpush.msra.mxu0 %v787
    %1363 = vmatpush.msra.mxu0 %v779
    %1364 = vmatpush.msra.mxu0 %v771
    %1365 = vmatpush.msra.mxu0 %v763
    %1366 = vmatpush.msra.mxu0 %v755
    %1367 = vmatpush.msra.mxu0 %v747
    %1368 = vmatpush.msra.mxu0 %v739
    %1369 = vmatpush.msra.mxu0 %v731
    %1370 = vmatpush.msra.mxu0 %v723
    %1371 = vmatpush.msra.mxu0 %v715
    %1372 = vmatpush.msra.mxu0 %v707
    %1373 = vmatpush.msra.mxu0 %v699
    %1374 = vmatmul.f32.gmra.mxu0 %v1316
    %v1375 = vpop.f32.mrf.mxu0
    %v1376 = vadd.f32 0.0, %v1375
    %1377 = vdwg.mxu0
    %1378 = vmatpush.msra.mxu0 %v947
    %1379 = vmatpush.msra.mxu0 %v939
    %1380 = vmatpush.msra.mxu0 %v931
    %1381 = vmatpush.msra.mxu0 %v923
    %1382 = vmatpush.msra.mxu0 %v915
    %1383 = vmatpush.msra.mxu0 %v907
    %1384 = vmatpush.msra.mxu0 %v899
    %1385 = vmatpush.msra.mxu0 %v891
    %1386 = vmatpush.msra.mxu0 %v883
    %1387 = vmatpush.msra.mxu0 %v875
    %1388 = vmatpush.msra.mxu0 %v867
    %1389 = vmatpush.msra.mxu0 %v859
    %1390 = vmatpush.msra.mxu0 %v851
    %1391 = vmatpush.msra.mxu0 %v843
    %1392 = vmatpush.msra.mxu0 %v835
    %1393 = vmatpush.msra.mxu0 %v827
    %1394 = vmatmul.f32.gmra.mxu0 %v1317
    %v1395 = vpop.f32.mrf.mxu0
    %v1396 = vadd.f32 %v1376, %v1395
    %1397 = vdwg.mxu0
    %1398 = vmatpush.msra.mxu0 %v820
    %1399 = vmatpush.msra.mxu0 %v812
    %1400 = vmatpush.msra.mxu0 %v804
    %1401 = vmatpush.msra.mxu0 %v796
    %1402 = vmatpush.msra.mxu0 %v788
    %1403 = vmatpush.msra.mxu0 %v780
    %1404 = vmatpush.msra.mxu0 %v772
    %1405 = vmatpush.msra.mxu0 %v764
    %1406 = vmatpush.msra.mxu0 %v756
    %1407 = vmatpush.msra.mxu0 %v748
    %1408 = vmatpush.msra.mxu0 %v740
    %1409 = vmatpush.msra.mxu0 %v732
    %1410 = vmatpush.msra.mxu0 %v724
    %1411 = vmatpush.msra.mxu0 %v716
    %1412 = vmatpush.msra.mxu0 %v708
    %1413 = vmatpush.msra.mxu0 %v700
    %1414 = vmatmul.f32.gmra.mxu0 %v1316
    %v1415 = vpop.f32.mrf.mxu0
    %v1416 = vadd.f32 0.0, %v1415
    %1417 = vdwg.mxu0
    %1418 = vmatpush.msra.mxu0 %v948
    %1419 = vmatpush.msra.mxu0 %v940
    %1420 = vmatpush.msra.mxu0 %v932
    %1421 = vmatpush.msra.mxu0 %v924
    %1422 = vmatpush.msra.mxu0 %v916
    %1423 = vmatpush.msra.mxu0 %v908
    %1424 = vmatpush.msra.mxu0 %v900
    %1425 = vmatpush.msra.mxu0 %v892
    %1426 = vmatpush.msra.mxu0 %v884
    %1427 = vmatpush.msra.mxu0 %v876
    %1428 = vmatpush.msra.mxu0 %v868
    %1429 = vmatpush.msra.mxu0 %v860
    %1430 = vmatpush.msra.mxu0 %v852
    %1431 = vmatpush.msra.mxu0 %v844
    %1432 = vmatpush.msra.mxu0 %v836
    %1433 = vmatpush.msra.mxu0 %v828
    %1434 = vmatmul.f32.gmra.mxu0 %v1317
    %v1435 = vpop.f32.mrf.mxu0
    %v1436 = vadd.f32 %v1416, %v1435
    %1437 = vdwg.mxu0
    %1438 = vmatpush.msra.mxu0 %v821
    %1439 = vmatpush.msra.mxu0 %v813
    %1440 = vmatpush.msra.mxu0 %v805
    %1441 = vmatpush.msra.mxu0 %v797
    %1442 = vmatpush.msra.mxu0 %v789
    %1443 = vmatpush.msra.mxu0 %v781
    %1444 = vmatpush.msra.mxu0 %v773
    %1445 = vmatpush.msra.mxu0 %v765
    %1446 = vmatpush.msra.mxu0 %v757
    %1447 = vmatpush.msra.mxu0 %v749
    %1448 = vmatpush.msra.mxu0 %v741
    %1449 = vmatpush.msra.mxu0 %v733
    %1450 = vmatpush.msra.mxu0 %v725
    %1451 = vmatpush.msra.mxu0 %v717
    %1452 = vmatpush.msra.mxu0 %v709
    %1453 = vmatpush.msra.mxu0 %v701
    %1454 = vmatmul.f32.gmra.mxu0 %v1316
    %v1455 = vpop.f32.mrf.mxu0
    %v1456 = vadd.f32 0.0, %v1455
    %1457 = vdwg.mxu0
    %1458 = vmatpush.msra.mxu0 %v949
    %1459 = vmatpush.msra.mxu0 %v941
    %1460 = vmatpush.msra.mxu0 %v933
    %1461 = vmatpush.msra.mxu0 %v925
    %1462 = vmatpush.msra.mxu0 %v917
    %1463 = vmatpush.msra.mxu0 %v909
    %1464 = vmatpush.msra.mxu0 %v901
    %1465 = vmatpush.msra.mxu0 %v893
    %1466 = vmatpush.msra.mxu0 %v885
    %1467 = vmatpush.msra.mxu0 %v877
    %1468 = vmatpush.msra.mxu0 %v869
    %1469 = vmatpush.msra.mxu0 %v861
    %1470 = vmatpush.msra.mxu0 %v853
    %1471 = vmatpush.msra.mxu0 %v845
    %1472 = vmatpush.msra.mxu0 %v837
    %1473 = vmatpush.msra.mxu0 %v829
    %1474 = vmatmul.f32.gmra.mxu0 %v1317
    %v1475 = vpop.f32.mrf.mxu0
    %v1476 = vadd.f32 %v1456, %v1475
    %1477 = vdwg.mxu0
    %1478 = vmatpush.msra.mxu0 %v822
    %1479 = vmatpush.msra.mxu0 %v814
    %1480 = vmatpush.msra.mxu0 %v806
    %1481 = vmatpush.msra.mxu0 %v798
    %1482 = vmatpush.msra.mxu0 %v790
    %1483 = vmatpush.msra.mxu0 %v782
    %1484 = vmatpush.msra.mxu0 %v774
    %1485 = vmatpush.msra.mxu0 %v766
    %1486 = vmatpush.msra.mxu0 %v758
    %1487 = vmatpush.msra.mxu0 %v750
    %1488 = vmatpush.msra.mxu0 %v742
    %1489 = vmatpush.msra.mxu0 %v734
    %1490 = vmatpush.msra.mxu0 %v726
    %1491 = vmatpush.msra.mxu0 %v718
    %1492 = vmatpush.msra.mxu0 %v710
    %1493 = vmatpush.msra.mxu0 %v702
    %1494 = vmatmul.f32.gmra.mxu0 %v1316
    %v1495 = vpop.f32.mrf.mxu0
    %v1496 = vadd.f32 0.0, %v1495
    %1497 = vdwg.mxu0
    %1498 = vmatpush.msra.mxu0 %v950
    %1499 = vmatpush.msra.mxu0 %v942
    %1500 = vmatpush.msra.mxu0 %v934
    %1501 = vmatpush.msra.mxu0 %v926
    %1502 = vmatpush.msra.mxu0 %v918
    %1503 = vmatpush.msra.mxu0 %v910
    %1504 = vmatpush.msra.mxu0 %v902
    %1505 = vmatpush.msra.mxu0 %v894
    %1506 = vmatpush.msra.mxu0 %v886
    %1507 = vmatpush.msra.mxu0 %v878
    %1508 = vmatpush.msra.mxu0 %v870
    %1509 = vmatpush.msra.mxu0 %v862
    %1510 = vmatpush.msra.mxu0 %v854
    %1511 = vmatpush.msra.mxu0 %v846
    %1512 = vmatpush.msra.mxu0 %v838
    %1513 = vmatpush.msra.mxu0 %v830
    %1514 = vmatmul.f32.gmra.mxu0 %v1317
    %v1515 = vpop.f32.mrf.mxu0
    %v1516 = vadd.f32 %v1496, %v1515
    %1517 = vdwg.mxu0
    %1518 = vmatpush.msra.mxu0 %v823
    %1519 = vmatpush.msra.mxu0 %v815
    %1520 = vmatpush.msra.mxu0 %v807
    %1521 = vmatpush.msra.mxu0 %v799
    %1522 = vmatpush.msra.mxu0 %v791
    %1523 = vmatpush.msra.mxu0 %v783
    %1524 = vmatpush.msra.mxu0 %v775
    %1525 = vmatpush.msra.mxu0 %v767
    %1526 = vmatpush.msra.mxu0 %v759
    %1527 = vmatpush.msra.mxu0 %v751
    %1528 = vmatpush.msra.mxu0 %v743
    %1529 = vmatpush.msra.mxu0 %v735
    %1530 = vmatpush.msra.mxu0 %v727
    %1531 = vmatpush.msra.mxu0 %v719
    %1532 = vmatpush.msra.mxu0 %v711
    %1533 = vmatpush.msra.mxu0 %v703
    %1534 = vmatmul.f32.gmra.mxu0 %v1316
    %v1535 = vpop.f32.mrf.mxu0
    %v1536 = vadd.f32 0.0, %v1535
    %1537 = vdwg.mxu0
    %1538 = vmatpush.msra.mxu0 %v951
    %1539 = vmatpush.msra.mxu0 %v943
    %1540 = vmatpush.msra.mxu0 %v935
    %1541 = vmatpush.msra.mxu0 %v927
    %1542 = vmatpush.msra.mxu0 %v919
    %1543 = vmatpush.msra.mxu0 %v911
    %1544 = vmatpush.msra.mxu0 %v903
    %1545 = vmatpush.msra.mxu0 %v895
    %1546 = vmatpush.msra.mxu0 %v887
    %1547 = vmatpush.msra.mxu0 %v879
    %1548 = vmatpush.msra.mxu0 %v871
    %1549 = vmatpush.msra.mxu0 %v863
    %1550 = vmatpush.msra.mxu0 %v855
    %1551 = vmatpush.msra.mxu0 %v847
    %1552 = vmatpush.msra.mxu0 %v839
    %1553 = vmatpush.msra.mxu0 %v831
    %1554 = vmatmul.f32.gmra.mxu0 %v1317
    %v1555 = vpop.f32.mrf.mxu0
    %v1556 = vadd.f32 %v1536, %v1555
    %1557 = vdwg.mxu0
    %1558 = vmatpush.msra.mxu0 %v824
    %1559 = vmatpush.msra.mxu0 %v816
    %1560 = vmatpush.msra.mxu0 %v808
    %1561 = vmatpush.msra.mxu0 %v800
    %1562 = vmatpush.msra.mxu0 %v792
    %1563 = vmatpush.msra.mxu0 %v784
    %1564 = vmatpush.msra.mxu0 %v776
    %1565 = vmatpush.msra.mxu0 %v768
    %1566 = vmatpush.msra.mxu0 %v760
    %1567 = vmatpush.msra.mxu0 %v752
    %1568 = vmatpush.msra.mxu0 %v744
    %1569 = vmatpush.msra.mxu0 %v736
    %1570 = vmatpush.msra.mxu0 %v728
    %1571 = vmatpush.msra.mxu0 %v720
    %1572 = vmatpush.msra.mxu0 %v712
    %1573 = vmatpush.msra.mxu0 %v704
    %1574 = vmatmul.f32.gmra.mxu0 %v1316
    %v1575 = vpop.f32.mrf.mxu0
    %v1576 = vadd.f32 0.0, %v1575
    %1577 = vdwg.mxu0
    %1578 = vmatpush.msra.mxu0 %v952
    %1579 = vmatpush.msra.mxu0 %v944
    %1580 = vmatpush.msra.mxu0 %v936
    %1581 = vmatpush.msra.mxu0 %v928
    %1582 = vmatpush.msra.mxu0 %v920
    %1583 = vmatpush.msra.mxu0 %v912
    %1584 = vmatpush.msra.mxu0 %v904
    %1585 = vmatpush.msra.mxu0 %v896
    %1586 = vmatpush.msra.mxu0 %v888
    %1587 = vmatpush.msra.mxu0 %v880
    %1588 = vmatpush.msra.mxu0 %v872
    %1589 = vmatpush.msra.mxu0 %v864
    %1590 = vmatpush.msra.mxu0 %v856
    %1591 = vmatpush.msra.mxu0 %v848
    %1592 = vmatpush.msra.mxu0 %v840
    %1593 = vmatpush.msra.mxu0 %v832
    %1594 = vmatmul.f32.gmra.mxu0 %v1317
    %v1595 = vpop.f32.mrf.mxu0
    %v1596 = vadd.f32 %v1576, %v1595
    %1597 = vdwg.mxu0
    %1598 = vmatpush.msra.mxu0 %v825
    %1599 = vmatpush.msra.mxu0 %v817
    %1600 = vmatpush.msra.mxu0 %v809
    %1601 = vmatpush.msra.mxu0 %v801
    %1602 = vmatpush.msra.mxu0 %v793
    %1603 = vmatpush.msra.mxu0 %v785
    %1604 = vmatpush.msra.mxu0 %v777
    %1605 = vmatpush.msra.mxu0 %v769
    %1606 = vmatpush.msra.mxu0 %v761
    %1607 = vmatpush.msra.mxu0 %v753
    %1608 = vmatpush.msra.mxu0 %v745
    %1609 = vmatpush.msra.mxu0 %v737
    %1610 = vmatpush.msra.mxu0 %v729
    %1611 = vmatpush.msra.mxu0 %v721
    %1612 = vmatpush.msra.mxu0 %v713
    %1613 = vmatpush.msra.mxu0 %v705
    %1614 = vmatmul.f32.gmra.mxu0 %v1316
    %v1615 = vpop.f32.mrf.mxu0
    %v1616 = vadd.f32 0.0, %v1615
    %1617 = vdwg.mxu0
    %1618 = vmatpush.msra.mxu0 %v953
    %1619 = vmatpush.msra.mxu0 %v945
    %1620 = vmatpush.msra.mxu0 %v937
    %1621 = vmatpush.msra.mxu0 %v929
    %1622 = vmatpush.msra.mxu0 %v921
    %1623 = vmatpush.msra.mxu0 %v913
    %1624 = vmatpush.msra.mxu0 %v905
    %1625 = vmatpush.msra.mxu0 %v897
    %1626 = vmatpush.msra.mxu0 %v889
    %1627 = vmatpush.msra.mxu0 %v881
    %1628 = vmatpush.msra.mxu0 %v873
    %1629 = vmatpush.msra.mxu0 %v865
    %1630 = vmatpush.msra.mxu0 %v857
    %1631 = vmatpush.msra.mxu0 %v849
    %1632 = vmatpush.msra.mxu0 %v841
    %1633 = vmatpush.msra.mxu0 %v833
    %1634 = vmatmul.f32.gmra.mxu0 %v1317
    %v1635 = vpop.f32.mrf.mxu0
    %v1636 = vadd.f32 %v1616, %v1635
    %1637 = vdwg.mxu0
    %v1638 = vadd.f32 %v391, %v1356
    %v1639 = vadd.f32 %v432, %v1396
    %v1640 = vadd.f32 %v473, %v1436
    %v1641 = vadd.f32 %v514, %v1476
    %v1642 = vadd.f32 %v555, %v1516
    %v1643 = vadd.f32 %v596, %v1556
    %v1644 = vadd.f32 %v637, %v1596
    %v1645 = vadd.f32 %v678, %v1636
    %v1646 = vmul.f32 %v1638, 0.5
    %v1647 = vmul.f32 %v1639, 0.5
    %v1648 = vtanh.pop %v1646
    %v1649 = vtanh.pop %v1647
    %v1650 = vadd.f32 %v1648, 1.0
    %v1651 = vadd.f32 %v1649, 1.0
    %v1652 = vmul.f32 %v1650, 0.5
    %v1653 = vmul.f32 %v1651, 0.5
    %v1654 = vmul.f32 %v1640, 0.5
    %v1655 = vmul.f32 %v1641, 0.5
    %v1656 = vtanh.pop %v1654
    %v1657 = vtanh.pop %v1655
    %v1658 = vadd.f32 %v1656, 1.0
    %v1659 = vadd.f32 %v1657, 1.0
    %v1660 = vmul.f32 %v1658, 0.5
    %v1661 = vmul.f32 %v1659, 0.5
    %v1662 = vtanh.pop %v1642
    %v1663 = vtanh.pop %v1643
    %v1664 = vmul.f32 %v1644, 0.5
    %v1665 = vmul.f32 %v1645, 0.5
    %v1666 = vtanh.pop %v1664
    %v1667 = vtanh.pop %v1665
    %v1668 = vadd.f32 %v1666, 1.0
    %v1669 = vadd.f32 %v1667, 1.0
    %v1670 = vmul.f32 %v1668, 0.5
    %v1671 = vmul.f32 %v1669, 0.5
    %v1672 = vmul.f32 %v1660, %v1312
    %v1673 = vmul.f32 %v1661, %v1313
    %v1674 = vmul.f32 %v1652, %v1662
    %v1675 = vmul.f32 %v1653, %v1663
    %v1676 = vadd.f32 %v1672, %v1674
    %v1677 = vadd.f32 %v1673, %v1675
    %v1678 = vtanh.pop %v1676
    %v1679 = vtanh.pop %v1677
    %v1680 = vmul.f32 %v1670, %v1678
    %v1681 = vmul.f32 %v1671, %v1679
    %1682 = vmatpush.msra.mxu0 %v818
    %1683 = vmatpush.msra.mxu0 %v810
    %1684 = vmatpush.msra.mxu0 %v802
    %1685 = vmatpush.msra.mxu0 %v794
    %1686 = vmatpush.msra.mxu0 %v786
    %1687 = vmatpush.msra.mxu0 %v778
    %1688 = vmatpush.msra.mxu0 %v770
    %1689 = vmatpush.msra.mxu0 %v762
    %1690 = vmatpush.msra.mxu0 %v754
    %1691 = vmatpush.msra.mxu0 %v746
    %1692 = vmatpush.msra.mxu0 %v738
    %1693 = vmatpush.msra.mxu0 %v730
    %1694 = vmatpush.msra.mxu0 %v722
    %1695 = vmatpush.msra.mxu0 %v714
    %1696 = vmatpush.msra.mxu0 %v706
    %1697 = vmatpush.msra.mxu0 %v698
    %1698 = vmatmul.f32.gmra.mxu0 %v1680
    %v1699 = vpop.f32.mrf.mxu0
    %v1700 = vadd.f32 0.0, %v1699
    %1701 = vdwg.mxu0
    %1702 = vmatpush.msra.mxu0 %v946
    %1703 = vmatpush.msra.mxu0 %v938
    %1704 = vmatpush.msra.mxu0 %v930
    %1705 = vmatpush.msra.mxu0 %v922
    %1706 = vmatpush.msra.mxu0 %v914
    %1707 = vmatpush.msra.mxu0 %v906
    %1708 = vmatpush.msra.mxu0 %v898
    %1709 = vmatpush.msra.mxu0 %v890
    %1710 = vmatpush.msra.mxu0 %v882
    %1711 = vmatpush.msra.mxu0 %v874
    %1712 = vmatpush.msra.mxu0 %v866
    %1713 = vmatpush.msra.mxu0 %v858
    %1714 = vmatpush.msra.mxu0 %v850
    %1715 = vmatpush.msra.mxu0 %v842
    %1716 = vmatpush.msra.mxu0 %v834
    %1717 = vmatpush.msra.mxu0 %v826
    %1718 = vmatmul.f32.gmra.mxu0 %v1681
    %v1719 = vpop.f32.mrf.mxu0
    %v1720 = vadd.f32 %v1700, %v1719
    %1721 = vdwg.mxu0
    %1722 = vmatpush.msra.mxu0 %v819
    %1723 = vmatpush.msra.mxu0 %v811
    %1724 = vmatpush.msra.mxu0 %v803
    %1725 = vmatpush.msra.mxu0 %v795
    %1726 = vmatpush.msra.mxu0 %v787
    %1727 = vmatpush.msra.mxu0 %v779
    %1728 = vmatpush.msra.mxu0 %v771
    %1729 = vmatpush.msra.mxu0 %v763
    %1730 = vmatpush.msra.mxu0 %v755
    %1731 = vmatpush.msra.mxu0 %v747
    %1732 = vmatpush.msra.mxu0 %v739
    %1733 = vmatpush.msra.mxu0 %v731
    %1734 = vmatpush.msra.mxu0 %v723
    %1735 = vmatpush.msra.mxu0 %v715
    %1736 = vmatpush.msra.mxu0 %v707
    %1737 = vmatpush.msra.mxu0 %v699
    %1738 = vmatmul.f32.gmra.mxu0 %v1680
    %v1739 = vpop.f32.mrf.mxu0
    %v1740 = vadd.f32 0.0, %v1739
    %1741 = vdwg.mxu0
    %1742 = vmatpush.msra.mxu0 %v947
    %1743 = vmatpush.msra.mxu0 %v939
    %1744 = vmatpush.msra.mxu0 %v931
    %1745 = vmatpush.msra.mxu0 %v923
    %1746 = vmatpush.msra.mxu0 %v915
    %1747 = vmatpush.msra.mxu0 %v907
    %1748 = vmatpush.msra.mxu0 %v899
    %1749 = vmatpush.msra.mxu0 %v891
    %1750 = vmatpush.msra.mxu0 %v883
    %1751 = vmatpush.msra.mxu0 %v875
    %1752 = vmatpush.msra.mxu0 %v867
    %1753 = vmatpush.msra.mxu0 %v859
    %1754 = vmatpush.msra.mxu0 %v851
    %1755 = vmatpush.msra.mxu0 %v843
    %1756 = vmatpush.msra.mxu0 %v835
    %1757 = vmatpush.msra.mxu0 %v827
    %1758 = vmatmul.f32.gmra.mxu0 %v1681
    %v1759 = vpop.f32.mrf.mxu0
    %v1760 = vadd.f32 %v1740, %v1759
    %1761 = vdwg.mxu0
    %1762 = vmatpush.msra.mxu0 %v820
    %1763 = vmatpush.msra.mxu0 %v812
    %1764 = vmatpush.msra.mxu0 %v804
    %1765 = vmatpush.msra.mxu0 %v796
    %1766 = vmatpush.msra.mxu0 %v788
    %1767 = vmatpush.msra.mxu0 %v780
    %1768 = vmatpush.msra.mxu0 %v772
    %1769 = vmatpush.msra.mxu0 %v764
    %1770 = vmatpush.msra.mxu0 %v756
    %1771 = vmatpush.msra.mxu0 %v748
    %1772 = vmatpush.msra.mxu0 %v740
    %1773 = vmatpush.msra.mxu0 %v732
    %1774 = vmatpush.msra.mxu0 %v724
    %1775 = vmatpush.msra.mxu0 %v716
    %1776 = vmatpush.msra.mxu0 %v708
    %1777 = vmatpush.msra.mxu0 %v700
    %1778 = vmatmul.f32.gmra.mxu0 %v1680
    %v1779 = vpop.f32.mrf.mxu0
    %v1780 = vadd.f32 0.0, %v1779
    %1781 = vdwg.mxu0
    %1782 = vmatpush.msra.mxu0 %v948
    %1783 = vmatpush.msra.mxu0 %v940
    %1784 = vmatpush.msra.mxu0 %v932
    %1785 = vmatpush.msra.mxu0 %v924
    %1786 = vmatpush.msra.mxu0 %v916
    %1787 = vmatpush.msra.mxu0 %v908
    %1788 = vmatpush.msra.mxu0 %v900
    %1789 = vmatpush.msra.mxu0 %v892
    %1790 = vmatpush.msra.mxu0 %v884
    %1791 = vmatpush.msra.mxu0 %v876
    %1792 = vmatpush.msra.mxu0 %v868
    %1793 = vmatpush.msra.mxu0 %v860
    %1794 = vmatpush.msra.mxu0 %v852
    %1795 = vmatpush.msra.mxu0 %v844
    %1796 = vmatpush.msra.mxu0 %v836
    %1797 = vmatpush.msra.mxu0 %v828
    %1798 = vmatmul.f32.gmra.mxu0 %v1681
    %v1799 = vpop.f32.mrf.mxu0
    %v1800 = vadd.f32 %v1780, %v1799
    %1801 = vdwg.mxu0
    %1802 = vmatpush.msra.mxu0 %v821
    %1803 = vmatpush.msra.mxu0 %v813
    %1804 = vmatpush.msra.mxu0 %v805
    %1805 = vmatpush.msra.mxu0 %v797
    %1806 = vmatpush.msra.mxu0 %v789
    %1807 = vmatpush.msra.mxu0 %v781
    %1808 = vmatpush.msra.mxu0 %v773
    %1809 = vmatpush.msra.mxu0 %v765
    %1810 = vmatpush.msra.mxu0 %v757
    %1811 = vmatpush.msra.mxu0 %v749
    %1812 = vmatpush.msra.mxu0 %v741
    %1813 = vmatpush.msra.mxu0 %v733
    %1814 = vmatpush.msra.mxu0 %v725
    %1815 = vmatpush.msra.mxu0 %v717
    %1816 = vmatpush.msra.mxu0 %v709
    %1817 = vmatpush.msra.mxu0 %v701
    %1818 = vmatmul.f32.gmra.mxu0 %v1680
    %v1819 = vpop.f32.mrf.mxu0
    %v1820 = vadd.f32 0.0, %v1819
    %1821 = vdwg.mxu0
    %1822 = vmatpush.msra.mxu0 %v949
    %1823 = vmatpush.msra.mxu0 %v941
    %1824 = vmatpush.msra.mxu0 %v933
    %1825 = vmatpush.msra.mxu0 %v925
    %1826 = vmatpush.msra.mxu0 %v917
    %1827 = vmatpush.msra.mxu0 %v909
    %1828 = vmatpush.msra.mxu0 %v901
    %1829 = vmatpush.msra.mxu0 %v893
    %1830 = vmatpush.msra.mxu0 %v885
    %1831 = vmatpush.msra.mxu0 %v877
    %1832 = vmatpush.msra.mxu0 %v869
    %1833 = vmatpush.msra.mxu0 %v861
    %1834 = vmatpush.msra.mxu0 %v853
    %1835 = vmatpush.msra.mxu0 %v845
    %1836 = vmatpush.msra.mxu0 %v837
    %1837 = vmatpush.msra.mxu0 %v829
    %1838 = vmatmul.f32.gmra.mxu0 %v1681
    %v1839 = vpop.f32.mrf.mxu0
    %v1840 = vadd.f32 %v1820, %v1839
    %1841 = vdwg.mxu0
    %1842 = vmatpush.msra.mxu0 %v822
    %1843 = vmatpush.msra.mxu0 %v814
    %1844 = vmatpush.msra.mxu0 %v806
    %1845 = vmatpush.msra.mxu0 %v798
    %1846 = vmatpush.msra.mxu0 %v790
    %1847 = vmatpush.msra.mxu0 %v782
    %1848 = vmatpush.msra.mxu0 %v774
    %1849 = vmatpush.msra.mxu0 %v766
    %1850 = vmatpush.msra.mxu0 %v758
    %1851 = vmatpush.msra.mxu0 %v750
    %1852 = vmatpush.msra.mxu0 %v742
    %1853 = vmatpush.msra.mxu0 %v734
    %1854 = vmatpush.msra.mxu0 %v726
    %1855 = vmatpush.msra.mxu0 %v718
    %1856 = vmatpush.msra.mxu0 %v710
    %1857 = vmatpush.msra.mxu0 %v702
    %1858 = vmatmul.f32.gmra.mxu0 %v1680
    %v1859 = vpop.f32.mrf.mxu0
    %v1860 = vadd.f32 0.0, %v1859
    %1861 = vdwg.mxu0
    %1862 = vmatpush.msra.mxu0 %v950
    %1863 = vmatpush.msra.mxu0 %v942
    %1864 = vmatpush.msra.mxu0 %v934
    %1865 = vmatpush.msra.mxu0 %v926
    %1866 = vmatpush.msra.mxu0 %v918
    %1867 = vmatpush.msra.mxu0 %v910
    %1868 = vmatpush.msra.mxu0 %v902
    %1869 = vmatpush.msra.mxu0 %v894
    %1870 = vmatpush.msra.mxu0 %v886
    %1871 = vmatpush.msra.mxu0 %v878
    %1872 = vmatpush.msra.mxu0 %v870
    %1873 = vmatpush.msra.mxu0 %v862
    %1874 = vmatpush.msra.mxu0 %v854
    %1875 = vmatpush.msra.mxu0 %v846
    %1876 = vmatpush.msra.mxu0 %v838
    %1877 = vmatpush.msra.mxu0 %v830
    %1878 = vmatmul.f32.gmra.mxu0 %v1681
    %v1879 = vpop.f32.mrf.mxu0
    %v1880 = vadd.f32 %v1860, %v1879
    %1881 = vdwg.mxu0
    %1882 = vmatpush.msra.mxu0 %v823
    %1883 = vmatpush.msra.mxu0 %v815
    %1884 = vmatpush.msra.mxu0 %v807
    %1885 = vmatpush.msra.mxu0 %v799
    %1886 = vmatpush.msra.mxu0 %v791
    %1887 = vmatpush.msra.mxu0 %v783
    %1888 = vmatpush.msra.mxu0 %v775
    %1889 = vmatpush.msra.mxu0 %v767
    %1890 = vmatpush.msra.mxu0 %v759
    %1891 = vmatpush.msra.mxu0 %v751
    %1892 = vmatpush.msra.mxu0 %v743
    %1893 = vmatpush.msra.mxu0 %v735
    %1894 = vmatpush.msra.mxu0 %v727
    %1895 = vmatpush.msra.mxu0 %v719
    %1896 = vmatpush.msra.mxu0 %v711
    %1897 = vmatpush.msra.mxu0 %v703
    %1898 = vmatmul.f32.gmra.mxu0 %v1680
    %v1899 = vpop.f32.mrf.mxu0
    %v1900 = vadd.f32 0.0, %v1899
    %1901 = vdwg.mxu0
    %1902 = vmatpush.msra.mxu0 %v951
    %1903 = vmatpush.msra.mxu0 %v943
    %1904 = vmatpush.msra.mxu0 %v935
    %1905 = vmatpush.msra.mxu0 %v927
    %1906 = vmatpush.msra.mxu0 %v919
    %1907 = vmatpush.msra.mxu0 %v911
    %1908 = vmatpush.msra.mxu0 %v903
    %1909 = vmatpush.msra.mxu0 %v895
    %1910 = vmatpush.msra.mxu0 %v887
    %1911 = vmatpush.msra.mxu0 %v879
    %1912 = vmatpush.msra.mxu0 %v871
    %1913 = vmatpush.msra.mxu0 %v863
    %1914 = vmatpush.msra.mxu0 %v855
    %1915 = vmatpush.msra.mxu0 %v847
    %1916 = vmatpush.msra.mxu0 %v839
    %1917 = vmatpush.msra.mxu0 %v831
    %1918 = vmatmul.f32.gmra.mxu0 %v1681
    %v1919 = vpop.f32.mrf.mxu0
    %v1920 = vadd.f32 %v1900, %v1919
    %1921 = vdwg.mxu0
    %1922 = vmatpush.msra.mxu0 %v824
    %1923 = vmatpush.msra.mxu0 %v816
    %1924 = vmatpush.msra.mxu0 %v808
    %1925 = vmatpush.msra.mxu0 %v800
    %1926 = vmatpush.msra.mxu0 %v792
    %1927 = vmatpush.msra.mxu0 %v784
    %1928 = vmatpush.msra.mxu0 %v776
    %1929 = vmatpush.msra.mxu0 %v768
    %1930 = vmatpush.msra.mxu0 %v760
    %1931 = vmatpush.msra.mxu0 %v752
    %1932 = vmatpush.msra.mxu0 %v744
    %1933 = vmatpush.msra.mxu0 %v736
    %1934 = vmatpush.msra.mxu0 %v728
    %1935 = vmatpush.msra.mxu0 %v720
    %1936 = vmatpush.msra.mxu0 %v712
    %1937 = vmatpush.msra.mxu0 %v704
    %1938 = vmatmul.f32.gmra.mxu0 %v1680
    %v1939 = vpop.f32.mrf.mxu0
    %v1940 = vadd.f32 0.0, %v1939
    %1941 = vdwg.mxu0
    %1942 = vmatpush.msra.mxu0 %v952
    %1943 = vmatpush.msra.mxu0 %v944
    %1944 = vmatpush.msra.mxu0 %v936
    %1945 = vmatpush.msra.mxu0 %v928
    %1946 = vmatpush.msra.mxu0 %v920
    %1947 = vmatpush.msra.mxu0 %v912
    %1948 = vmatpush.msra.mxu0 %v904
    %1949 = vmatpush.msra.mxu0 %v896
    %1950 = vmatpush.msra.mxu0 %v888
    %1951 = vmatpush.msra.mxu0 %v880
    %1952 = vmatpush.msra.mxu0 %v872
    %1953 = vmatpush.msra.mxu0 %v864
    %1954 = vmatpush.msra.mxu0 %v856
    %1955 = vmatpush.msra.mxu0 %v848
    %1956 = vmatpush.msra.mxu0 %v840
    %1957 = vmatpush.msra.mxu0 %v832
    %1958 = vmatmul.f32.gmra.mxu0 %v1681
    %v1959 = vpop.f32.mrf.mxu0
    %v1960 = vadd.f32 %v1940, %v1959
    %1961 = vdwg.mxu0
    %1962 = vmatpush.msra.mxu0 %v825
    %1963 = vmatpush.msra.mxu0 %v817
    %1964 = vmatpush.msra.mxu0 %v809
    %1965 = vmatpush.msra.mxu0 %v801
    %1966 = vmatpush.msra.mxu0 %v793
    %1967 = vmatpush.msra.mxu0 %v785
    %1968 = vmatpush.msra.mxu0 %v777
    %1969 = vmatpush.msra.mxu0 %v769
    %1970 = vmatpush.msra.mxu0 %v761
    %1971 = vmatpush.msra.mxu0 %v753
    %1972 = vmatpush.msra.mxu0 %v745
    %1973 = vmatpush.msra.mxu0 %v737
    %1974 = vmatpush.msra.mxu0 %v729
    %1975 = vmatpush.msra.mxu0 %v721
    %1976 = vmatpush.msra.mxu0 %v713
    %1977 = vmatpush.msra.mxu0 %v705
    %1978 = vmatmul.f32.gmra.mxu0 %v1680
    %v1979 = vpop.f32.mrf.mxu0
    %v1980 = vadd.f32 0.0, %v1979
    %1981 = vdwg.mxu0
    %1982 = vmatpush.msra.mxu0 %v953
    %1983 = vmatpush.msra.mxu0 %v945
    %1984 = vmatpush.msra.mxu0 %v937
    %1985 = vmatpush.msra.mxu0 %v929
    %1986 = vmatpush.msra.mxu0 %v921
    %1987 = vmatpush.msra.mxu0 %v913
    %1988 = vmatpush.msra.mxu0 %v905
    %1989 = vmatpush.msra.mxu0 %v897
    %1990 = vmatpush.msra.mxu0 %v889
    %1991 = vmatpush.msra.mxu0 %v881
    %1992 = vmatpush.msra.mxu0 %v873
    %1993 = vmatpush.msra.mxu0 %v865
    %1994 = vmatpush.msra.mxu0 %v857
    %1995 = vmatpush.msra.mxu0 %v849
    %1996 = vmatpush.msra.mxu0 %v841
    %1997 = vmatpush.msra.mxu0 %v833
    %1998 = vmatmul.f32.gmra.mxu0 %v1681
    %v1999 = vpop.f32.mrf.mxu0
    %v2000 = vadd.f32 %v1980, %v1999
    %2001 = vdwg.mxu0
    %v2002 = vadd.f32 %v394, %v1720
    %v2003 = vadd.f32 %v435, %v1760
    %v2004 = vadd.f32 %v476, %v1800
    %v2005 = vadd.f32 %v517, %v1840
    %v2006 = vadd.f32 %v558, %v1880
    %v2007 = vadd.f32 %v599, %v1920
    %v2008 = vadd.f32 %v640, %v1960
    %v2009 = vadd.f32 %v681, %v2000
    %v2010 = vmul.f32 %v2002, 0.5
    %v2011 = vmul.f32 %v2003, 0.5
    %v2012 = vtanh.pop %v2010
    %v2013 = vtanh.pop %v2011
    %v2014 = vadd.f32 %v2012, 1.0
    %v2015 = vadd.f32 %v2013, 1.0
    %v2016 = vmul.f32 %v2014, 0.5
    %v2017 = vmul.f32 %v2015, 0.5
    %v2018 = vmul.f32 %v2004, 0.5
    %v2019 = vmul.f32 %v2005, 0.5
    %v2020 = vtanh.pop %v2018
    %v2021 = vtanh.pop %v2019
    %v2022 = vadd.f32 %v2020, 1.0
    %v2023 = vadd.f32 %v2021, 1.0
    %v2024 = vmul.f32 %v2022, 0.5
    %v2025 = vmul.f32 %v2023, 0.5
    %v2026 = vtanh.pop %v2006
    %v2027 = vtanh.pop %v2007
    %v2028 = vmul.f32 %v2008, 0.5
    %v2029 = vmul.f32 %v2009, 0.5
    %v2030 = vtanh.pop %v2028
    %v2031 = vtanh.pop %v2029
    %v2032 = vadd.f32 %v2030, 1.0
    %v2033 = vadd.f32 %v2031, 1.0
    %v2034 = vmul.f32 %v2032, 0.5
    %v2035 = vmul.f32 %v2033, 0.5
    %v2036 = vmul.f32 %v2024, %v1676
    %v2037 = vmul.f32 %v2025, %v1677
    %v2038 = vmul.f32 %v2016, %v2026
    %v2039 = vmul.f32 %v2017, %v2027
    %v2040 = vadd.f32 %v2036, %v2038
    %v2041 = vadd.f32 %v2037, %v2039
    %v2042 = vtanh.pop %v2040
    %v2043 = vtanh.pop %v2041
    %v2044 = vmul.f32 %v2034, %v2042
    %v2045 = vmul.f32 %v2035, %v2043
    %2046 = vmatpush.msra.mxu0 %v818
    %2047 = vmatpush.msra.mxu0 %v810
    %2048 = vmatpush.msra.mxu0 %v802
    %2049 = vmatpush.msra.mxu0 %v794
    %2050 = vmatpush.msra.mxu0 %v786
    %2051 = vmatpush.msra.mxu0 %v778
    %2052 = vmatpush.msra.mxu0 %v770
    %2053 = vmatpush.msra.mxu0 %v762
    %2054 = vmatpush.msra.mxu0 %v754
    %2055 = vmatpush.msra.mxu0 %v746
    %2056 = vmatpush.msra.mxu0 %v738
    %2057 = vmatpush.msra.mxu0 %v730
    %2058 = vmatpush.msra.mxu0 %v722
    %2059 = vmatpush.msra.mxu0 %v714
    %2060 = vmatpush.msra.mxu0 %v706
    %2061 = vmatpush.msra.mxu0 %v698
    %2062 = vmatmul.f32.gmra.mxu0 %v2044
    %v2063 = vpop.f32.mrf.mxu0
    %v2064 = vadd.f32 0.0, %v2063
    %2065 = vdwg.mxu0
    %2066 = vmatpush.msra.mxu0 %v946
    %2067 = vmatpush.msra.mxu0 %v938
    %2068 = vmatpush.msra.mxu0 %v930
    %2069 = vmatpush.msra.mxu0 %v922
    %2070 = vmatpush.msra.mxu0 %v914
    %2071 = vmatpush.msra.mxu0 %v906
    %2072 = vmatpush.msra.mxu0 %v898
    %2073 = vmatpush.msra.mxu0 %v890
    %2074 = vmatpush.msra.mxu0 %v882
    %2075 = vmatpush.msra.mxu0 %v874
    %2076 = vmatpush.msra.mxu0 %v866
    %2077 = vmatpush.msra.mxu0 %v858
    %2078 = vmatpush.msra.mxu0 %v850
    %2079 = vmatpush.msra.mxu0 %v842
    %2080 = vmatpush.msra.mxu0 %v834
    %2081 = vmatpush.msra.mxu0 %v826
    %2082 = vmatmul.f32.gmra.mxu0 %v2045
    %v2083 = vpop.f32.mrf.mxu0
    %v2084 = vadd.f32 %v2064, %v2083
    %2085 = vdwg.mxu0
    %2086 = vmatpush.msra.mxu0 %v819
    %2087 = vmatpush.msra.mxu0 %v811
    %2088 = vmatpush.msra.mxu0 %v803
    %2089 = vmatpush.msra.mxu0 %v795
    %2090 = vmatpush.msra.mxu0 %v787
    %2091 = vmatpush.msra.mxu0 %v779
    %2092 = vmatpush.msra.mxu0 %v771
    %2093 = vmatpush.msra.mxu0 %v763
    %2094 = vmatpush.msra.mxu0 %v755
    %2095 = vmatpush.msra.mxu0 %v747
    %2096 = vmatpush.msra.mxu0 %v739
    %2097 = vmatpush.msra.mxu0 %v731
    %2098 = vmatpush.msra.mxu0 %v723
    %2099 = vmatpush.msra.mxu0 %v715
    %2100 = vmatpush.msra.mxu0 %v707
    %2101 = vmatpush.msra.mxu0 %v699
    %2102 = vmatmul.f32.gmra.mxu0 %v2044
    %v2103 = vpop.f32.mrf.mxu0
    %v2104 = vadd.f32 0.0, %v2103
    %2105 = vdwg.mxu0
    %2106 = vmatpush.msra.mxu0 %v947
    %2107 = vmatpush.msra.mxu0 %v939
    %2108 = vmatpush.msra.mxu0 %v931
    %2109 = vmatpush.msra.mxu0 %v923
    %2110 = vmatpush.msra.mxu0 %v915
    %2111 = vmatpush.msra.mxu0 %v907
    %2112 = vmatpush.msra.mxu0 %v899
    %2113 = vmatpush.msra.mxu0 %v891
    %2114 = vmatpush.msra.mxu0 %v883
    %2115 = vmatpush.msra.mxu0 %v875
    %2116 = vmatpush.msra.mxu0 %v867
    %2117 = vmatpush.msra.mxu0 %v859
    %2118 = vmatpush.msra.mxu0 %v851
    %2119 = vmatpush.msra.mxu0 %v843
    %2120 = vmatpush.msra.mxu0 %v835
    %2121 = vmatpush.msra.mxu0 %v827
    %2122 = vmatmul.f32.gmra.mxu0 %v2045
    %v2123 = vpop.f32.mrf.mxu0
    %v2124 = vadd.f32 %v2104, %v2123
    %2125 = vdwg.mxu0
    %2126 = vmatpush.msra.mxu0 %v820
    %2127 = vmatpush.msra.mxu0 %v812
    %2128 = vmatpush.msra.mxu0 %v804
    %2129 = vmatpush.msra.mxu0 %v796
    %2130 = vmatpush.msra.mxu0 %v788
    %2131 = vmatpush.msra.mxu0 %v780
    %2132 = vmatpush.msra.mxu0 %v772
    %2133 = vmatpush.msra.mxu0 %v764
    %2134 = vmatpush.msra.mxu0 %v756
    %2135 = vmatpush.msra.mxu0 %v748
    %2136 = vmatpush.msra.mxu0 %v740
    %2137 = vmatpush.msra.mxu0 %v732
    %2138 = vmatpush.msra.mxu0 %v724
    %2139 = vmatpush.msra.mxu0 %v716
    %2140 = vmatpush.msra.mxu0 %v708
    %2141 = vmatpush.msra.mxu0 %v700
    %2142 = vmatmul.f32.gmra.mxu0 %v2044
    %v2143 = vpop.f32.mrf.mxu0
    %v2144 = vadd.f32 0.0, %v2143
    %2145 = vdwg.mxu0
    %2146 = vmatpush.msra.mxu0 %v948
    %2147 = vmatpush.msra.mxu0 %v940
    %2148 = vmatpush.msra.mxu0 %v932
    %2149 = vmatpush.msra.mxu0 %v924
    %2150 = vmatpush.msra.mxu0 %v916
    %2151 = vmatpush.msra.mxu0 %v908
    %2152 = vmatpush.msra.mxu0 %v900
    %2153 = vmatpush.msra.mxu0 %v892
    %2154 = vmatpush.msra.mxu0 %v884
    %2155 = vmatpush.msra.mxu0 %v876
    %2156 = vmatpush.msra.mxu0 %v868
    %2157 = vmatpush.msra.mxu0 %v860
    %2158 = vmatpush.msra.mxu0 %v852
    %2159 = vmatpush.msra.mxu0 %v844
    %2160 = vmatpush.msra.mxu0 %v836
    %2161 = vmatpush.msra.mxu0 %v828
    %2162 = vmatmul.f32.gmra.mxu0 %v2045
    %v2163 = vpop.f32.mrf.mxu0
    %v2164 = vadd.f32 %v2144, %v2163
    %2165 = vdwg.mxu0
    %2166 = vmatpush.msra.mxu0 %v821
    %2167 = vmatpush.msra.mxu0 %v813
    %2168 = vmatpush.msra.mxu0 %v805
    %2169 = vmatpush.msra.mxu0 %v797
    %2170 = vmatpush.msra.mxu0 %v789
    %2171 = vmatpush.msra.mxu0 %v781
    %2172 = vmatpush.msra.mxu0 %v773
    %2173 = vmatpush.msra.mxu0 %v765
    %2174 = vmatpush.msra.mxu0 %v757
    %2175 = vmatpush.msra.mxu0 %v749
    %2176 = vmatpush.msra.mxu0 %v741
    %2177 = vmatpush.msra.mxu0 %v733
    %2178 = vmatpush.msra.mxu0 %v725
    %2179 = vmatpush.msra.mxu0 %v717
    %2180 = vmatpush.msra.mxu0 %v709
    %2181 = vmatpush.msra.mxu0 %v701
    %2182 = vmatmul.f32.gmra.mxu0 %v2044
    %v2183 = vpop.f32.mrf.mxu0
    %v2184 = vadd.f32 0.0, %v2183
    %2185 = vdwg.mxu0
    %2186 = vmatpush.msra.mxu0 %v949
    %2187 = vmatpush.msra.mxu0 %v941
    %2188 = vmatpush.msra.mxu0 %v933
    %2189 = vmatpush.msra.mxu0 %v925
    %2190 = vmatpush.msra.mxu0 %v917
    %2191 = vmatpush.msra.mxu0 %v909
    %2192 = vmatpush.msra.mxu0 %v901
    %2193 = vmatpush.msra.mxu0 %v893
    %2194 = vmatpush.msra.mxu0 %v885
    %2195 = vmatpush.msra.mxu0 %v877
    %2196 = vmatpush.msra.mxu0 %v869
    %2197 = vmatpush.msra.mxu0 %v861
    %2198 = vmatpush.msra.mxu0 %v853
    %2199 = vmatpush.msra.mxu0 %v845
    %2200 = vmatpush.msra.mxu0 %v837
    %2201 = vmatpush.msra.mxu0 %v829
    %2202 = vmatmul.f32.gmra.mxu0 %v2045
    %v2203 = vpop.f32.mrf.mxu0
    %v2204 = vadd.f32 %v2184, %v2203
    %2205 = vdwg.mxu0
    %2206 = vmatpush.msra.mxu0 %v822
    %2207 = vmatpush.msra.mxu0 %v814
    %2208 = vmatpush.msra.mxu0 %v806
    %2209 = vmatpush.msra.mxu0 %v798
    %2210 = vmatpush.msra.mxu0 %v790
    %2211 = vmatpush.msra.mxu0 %v782
    %2212 = vmatpush.msra.mxu0 %v774
    %2213 = vmatpush.msra.mxu0 %v766
    %2214 = vmatpush.msra.mxu0 %v758
    %2215 = vmatpush.msra.mxu0 %v750
    %2216 = vmatpush.msra.mxu0 %v742
    %2217 = vmatpush.msra.mxu0 %v734
    %2218 = vmatpush.msra.mxu0 %v726
    %2219 = vmatpush.msra.mxu0 %v718
    %2220 = vmatpush.msra.mxu0 %v710
    %2221 = vmatpush.msra.mxu0 %v702
    %2222 = vmatmul.f32.gmra.mxu0 %v2044
    %v2223 = vpop.f32.mrf.mxu0
    %v2224 = vadd.f32 0.0, %v2223
    %2225 = vdwg.mxu0
    %2226 = vmatpush.msra.mxu0 %v950
    %2227 = vmatpush.msra.mxu0 %v942
    %2228 = vmatpush.msra.mxu0 %v934
    %2229 = vmatpush.msra.mxu0 %v926
    %2230 = vmatpush.msra.mxu0 %v918
    %2231 = vmatpush.msra.mxu0 %v910
    %2232 = vmatpush.msra.mxu0 %v902
    %2233 = vmatpush.msra.mxu0 %v894
    %2234 = vmatpush.msra.mxu0 %v886
    %2235 = vmatpush.msra.mxu0 %v878
    %2236 = vmatpush.msra.mxu0 %v870
    %2237 = vmatpush.msra.mxu0 %v862
    %2238 = vmatpush.msra.mxu0 %v854
    %2239 = vmatpush.msra.mxu0 %v846
    %2240 = vmatpush.msra.mxu0 %v838
    %2241 = vmatpush.msra.mxu0 %v830
    %2242 = vmatmul.f32.gmra.mxu0 %v2045
    %v2243 = vpop.f32.mrf.mxu0
    %v2244 = vadd.f32 %v2224, %v2243
    %2245 = vdwg.mxu0
    %2246 = vmatpush.msra.mxu0 %v823
    %2247 = vmatpush.msra.mxu0 %v815
    %2248 = vmatpush.msra.mxu0 %v807
    %2249 = vmatpush.msra.mxu0 %v799
    %2250 = vmatpush.msra.mxu0 %v791
    %2251 = vmatpush.msra.mxu0 %v783
    %2252 = vmatpush.msra.mxu0 %v775
    %2253 = vmatpush.msra.mxu0 %v767
    %2254 = vmatpush.msra.mxu0 %v759
    %2255 = vmatpush.msra.mxu0 %v751
    %2256 = vmatpush.msra.mxu0 %v743
    %2257 = vmatpush.msra.mxu0 %v735
    %2258 = vmatpush.msra.mxu0 %v727
    %2259 = vmatpush.msra.mxu0 %v719
    %2260 = vmatpush.msra.mxu0 %v711
    %2261 = vmatpush.msra.mxu0 %v703
    %2262 = vmatmul.f32.gmra.mxu0 %v2044
    %v2263 = vpop.f32.mrf.mxu0
    %v2264 = vadd.f32 0.0, %v2263
    %2265 = vdwg.mxu0
    %2266 = vmatpush.msra.mxu0 %v951
    %2267 = vmatpush.msra.mxu0 %v943
    %2268 = vmatpush.msra.mxu0 %v935
    %2269 = vmatpush.msra.mxu0 %v927
    %2270 = vmatpush.msra.mxu0 %v919
    %2271 = vmatpush.msra.mxu0 %v911
    %2272 = vmatpush.msra.mxu0 %v903
    %2273 = vmatpush.msra.mxu0 %v895
    %2274 = vmatpush.msra.mxu0 %v887
    %2275 = vmatpush.msra.mxu0 %v879
    %2276 = vmatpush.msra.mxu0 %v871
    %2277 = vmatpush.msra.mxu0 %v863
    %2278 = vmatpush.msra.mxu0 %v855
    %2279 = vmatpush.msra.mxu0 %v847
    %2280 = vmatpush.msra.mxu0 %v839
    %2281 = vmatpush.msra.mxu0 %v831
    %2282 = vmatmul.f32.gmra.mxu0 %v2045
    %v2283 = vpop.f32.mrf.mxu0
    %v2284 = vadd.f32 %v2264, %v2283
    %2285 = vdwg.mxu0
    %2286 = vmatpush.msra.mxu0 %v824
    %2287 = vmatpush.msra.mxu0 %v816
    %2288 = vmatpush.msra.mxu0 %v808
    %2289 = vmatpush.msra.mxu0 %v800
    %2290 = vmatpush.msra.mxu0 %v792
    %2291 = vmatpush.msra.mxu0 %v784
    %2292 = vmatpush.msra.mxu0 %v776
    %2293 = vmatpush.msra.mxu0 %v768
    %2294 = vmatpush.msra.mxu0 %v760
    %2295 = vmatpush.msra.mxu0 %v752
    %2296 = vmatpush.msra.mxu0 %v744
    %2297 = vmatpush.msra.mxu0 %v736
    %2298 = vmatpush.msra.mxu0 %v728
    %2299 = vmatpush.msra.mxu0 %v720
    %2300 = vmatpush.msra.mxu0 %v712
    %2301 = vmatpush.msra.mxu0 %v704
    %2302 = vmatmul.f32.gmra.mxu0 %v2044
    %v2303 = vpop.f32.mrf.mxu0
    %v2304 = vadd.f32 0.0, %v2303
    %2305 = vdwg.mxu0
    %2306 = vmatpush.msra.mxu0 %v952
    %2307 = vmatpush.msra.mxu0 %v944
    %2308 = vmatpush.msra.mxu0 %v936
    %2309 = vmatpush.msra.mxu0 %v928
    %2310 = vmatpush.msra.mxu0 %v920
    %2311 = vmatpush.msra.mxu0 %v912
    %2312 = vmatpush.msra.mxu0 %v904
    %2313 = vmatpush.msra.mxu0 %v896
    %2314 = vmatpush.msra.mxu0 %v888
    %2315 = vmatpush.msra.mxu0 %v880
    %2316 = vmatpush.msra.mxu0 %v872
    %2317 = vmatpush.msra.mxu0 %v864
    %2318 = vmatpush.msra.mxu0 %v856
    %2319 = vmatpush.msra.mxu0 %v848
    %2320 = vmatpush.msra.mxu0 %v840
    %2321 = vmatpush.msra.mxu0 %v832
    %2322 = vmatmul.f32.gmra.mxu0 %v2045
    %v2323 = vpop.f32.mrf.mxu0
    %v2324 = vadd.f32 %v2304, %v2323
    %2325 = vdwg.mxu0
    %2326 = vmatpush.msra.mxu0 %v825
    %2327 = vmatpush.msra.mxu0 %v817
    %2328 = vmatpush.msra.mxu0 %v809
    %2329 = vmatpush.msra.mxu0 %v801
    %2330 = vmatpush.msra.mxu0 %v793
    %2331 = vmatpush.msra.mxu0 %v785
    %2332 = vmatpush.msra.mxu0 %v777
    %2333 = vmatpush.msra.mxu0 %v769
    %2334 = vmatpush.msra.mxu0 %v761
    %2335 = vmatpush.msra.mxu0 %v753
    %2336 = vmatpush.msra.mxu0 %v745
    %2337 = vmatpush.msra.mxu0 %v737
    %2338 = vmatpush.msra.mxu0 %v729
    %2339 = vmatpush.msra.mxu0 %v721
    %2340 = vmatpush.msra.mxu0 %v713
    %2341 = vmatpush.msra.mxu0 %v705
    %2342 = vmatmul.f32.gmra.mxu0 %v2044
    %v2343 = vpop.f32.mrf.mxu0
    %v2344 = vadd.f32 0.0, %v2343
    %2345 = vdwg.mxu0
    %2346 = vmatpush.msra.mxu0 %v953
    %2347 = vmatpush.msra.mxu0 %v945
    %2348 = vmatpush.msra.mxu0 %v937
    %2349 = vmatpush.msra.mxu0 %v929
    %2350 = vmatpush.msra.mxu0 %v921
    %2351 = vmatpush.msra.mxu0 %v913
    %2352 = vmatpush.msra.mxu0 %v905
    %2353 = vmatpush.msra.mxu0 %v897
    %2354 = vmatpush.msra.mxu0 %v889
    %2355 = vmatpush.msra.mxu0 %v881
    %2356 = vmatpush.msra.mxu0 %v873
    %2357 = vmatpush.msra.mxu0 %v865
    %2358 = vmatpush.msra.mxu0 %v857
    %2359 = vmatpush.msra.mxu0 %v849
    %2360 = vmatpush.msra.mxu0 %v841
    %2361 = vmatpush.msra.mxu0 %v833
    %2362 = vmatmul.f32.gmra.mxu0 %v2045
    %v2363 = vpop.f32.mrf.mxu0
    %v2364 = vadd.f32 %v2344, %v2363
    %2365 = vdwg.mxu0
    %v2366 = vadd.f32 %v397, %v2084
    %v2367 = vadd.f32 %v438, %v2124
    %v2368 = vadd.f32 %v479, %v2164
    %v2369 = vadd.f32 %v520, %v2204
    %v2370 = vadd.f32 %v561, %v2244
    %v2371 = vadd.f32 %v602, %v2284
    %v2372 = vadd.f32 %v643, %v2324
    %v2373 = vadd.f32 %v684, %v2364
    %v2374 = vmul.f32 %v2366, 0.5
    %v2375 = vmul.f32 %v2367, 0.5
    %v2376 = vtanh.pop %v2374
    %v2377 = vtanh.pop %v2375
    %v2378 = vadd.f32 %v2376, 1.0
    %v2379 = vadd.f32 %v2377, 1.0
    %v2380 = vmul.f32 %v2378, 0.5
    %v2381 = vmul.f32 %v2379, 0.5
    %v2382 = vmul.f32 %v2368, 0.5
    %v2383 = vmul.f32 %v2369, 0.5
    %v2384 = vtanh.pop %v2382
    %v2385 = vtanh.pop %v2383
    %v2386 = vadd.f32 %v2384, 1.0
    %v2387 = vadd.f32 %v2385, 1.0
    %v2388 = vmul.f32 %v2386, 0.5
    %v2389 = vmul.f32 %v2387, 0.5
    %v2390 = vtanh.pop %v2370
    %v2391 = vtanh.pop %v2371
    %v2392 = vmul.f32 %v2372, 0.5
    %v2393 = vmul.f32 %v2373, 0.5
    %v2394 = vtanh.pop %v2392
    %v2395 = vtanh.pop %v2393
    %v2396 = vadd.f32 %v2394, 1.0
    %v2397 = vadd.f32 %v2395, 1.0
    %v2398 = vmul.f32 %v2396, 0.5
    %v2399 = vmul.f32 %v2397, 0.5
    %v2400 = vmul.f32 %v2388, %v2040
    %v2401 = vmul.f32 %v2389, %v2041
    %v2402 = vmul.f32 %v2380, %v2390
    %v2403 = vmul.f32 %v2381, %v2391
    %v2404 = vadd.f32 %v2400, %v2402
    %v2405 = vadd.f32 %v2401, %v2403
    %v2406 = vtanh.pop %v2404
    %v2407 = vtanh.pop %v2405
    %v2408 = vmul.f32 %v2398, %v2406
    %v2409 = vmul.f32 %v2399, %v2407
    %2410 = vmatpush.msra.mxu0 %v818
    %2411 = vmatpush.msra.mxu0 %v810
    %2412 = vmatpush.msra.mxu0 %v802
    %2413 = vmatpush.msra.mxu0 %v794
    %2414 = vmatpush.msra.mxu0 %v786
    %2415 = vmatpush.msra.mxu0 %v778
    %2416 = vmatpush.msra.mxu0 %v770
    %2417 = vmatpush.msra.mxu0 %v762
    %2418 = vmatpush.msra.mxu0 %v754
    %2419 = vmatpush.msra.mxu0 %v746
    %2420 = vmatpush.msra.mxu0 %v738
    %2421 = vmatpush.msra.mxu0 %v730
    %2422 = vmatpush.msra.mxu0 %v722
    %2423 = vmatpush.msra.mxu0 %v714
    %2424 = vmatpush.msra.mxu0 %v706
    %2425 = vmatpush.msra.mxu0 %v698
    %2426 = vmatmul.f32.gmra.mxu0 %v2408
    %v2427 = vpop.f32.mrf.mxu0
    %v2428 = vadd.f32 0.0, %v2427
    %2429 = vdwg.mxu0
    %2430 = vmatpush.msra.mxu0 %v946
    %2431 = vmatpush.msra.mxu0 %v938
    %2432 = vmatpush.msra.mxu0 %v930
    %2433 = vmatpush.msra.mxu0 %v922
    %2434 = vmatpush.msra.mxu0 %v914
    %2435 = vmatpush.msra.mxu0 %v906
    %2436 = vmatpush.msra.mxu0 %v898
    %2437 = vmatpush.msra.mxu0 %v890
    %2438 = vmatpush.msra.mxu0 %v882
    %2439 = vmatpush.msra.mxu0 %v874
    %2440 = vmatpush.msra.mxu0 %v866
    %2441 = vmatpush.msra.mxu0 %v858
    %2442 = vmatpush.msra.mxu0 %v850
    %2443 = vmatpush.msra.mxu0 %v842
    %2444 = vmatpush.msra.mxu0 %v834
    %2445 = vmatpush.msra.mxu0 %v826
    %2446 = vmatmul.f32.gmra.mxu0 %v2409
    %v2447 = vpop.f32.mrf.mxu0
    %v2448 = vadd.f32 %v2428, %v2447
    %2449 = vdwg.mxu0
    %2450 = vmatpush.msra.mxu0 %v819
    %2451 = vmatpush.msra.mxu0 %v811
    %2452 = vmatpush.msra.mxu0 %v803
    %2453 = vmatpush.msra.mxu0 %v795
    %2454 = vmatpush.msra.mxu0 %v787
    %2455 = vmatpush.msra.mxu0 %v779
    %2456 = vmatpush.msra.mxu0 %v771
    %2457 = vmatpush.msra.mxu0 %v763
    %2458 = vmatpush.msra.mxu0 %v755
    %2459 = vmatpush.msra.mxu0 %v747
    %2460 = vmatpush.msra.mxu0 %v739
    %2461 = vmatpush.msra.mxu0 %v731
    %2462 = vmatpush.msra.mxu0 %v723
    %2463 = vmatpush.msra.mxu0 %v715
    %2464 = vmatpush.msra.mxu0 %v707
    %2465 = vmatpush.msra.mxu0 %v699
    %2466 = vmatmul.f32.gmra.mxu0 %v2408
    %v2467 = vpop.f32.mrf.mxu0
    %v2468 = vadd.f32 0.0, %v2467
    %2469 = vdwg.mxu0
    %2470 = vmatpush.msra.mxu0 %v947
    %2471 = vmatpush.msra.mxu0 %v939
    %2472 = vmatpush.msra.mxu0 %v931
    %2473 = vmatpush.msra.mxu0 %v923
    %2474 = vmatpush.msra.mxu0 %v915
    %2475 = vmatpush.msra.mxu0 %v907
    %2476 = vmatpush.msra.mxu0 %v899
    %2477 = vmatpush.msra.mxu0 %v891
    %2478 = vmatpush.msra.mxu0 %v883
    %2479 = vmatpush.msra.mxu0 %v875
    %2480 = vmatpush.msra.mxu0 %v867
    %2481 = vmatpush.msra.mxu0 %v859
    %2482 = vmatpush.msra.mxu0 %v851
    %2483 = vmatpush.msra.mxu0 %v843
    %2484 = vmatpush.msra.mxu0 %v835
    %2485 = vmatpush.msra.mxu0 %v827
    %2486 = vmatmul.f32.gmra.mxu0 %v2409
    %v2487 = vpop.f32.mrf.mxu0
    %v2488 = vadd.f32 %v2468, %v2487
    %2489 = vdwg.mxu0
    %2490 = vmatpush.msra.mxu0 %v820
    %2491 = vmatpush.msra.mxu0 %v812
    %2492 = vmatpush.msra.mxu0 %v804
    %2493 = vmatpush.msra.mxu0 %v796
    %2494 = vmatpush.msra.mxu0 %v788
    %2495 = vmatpush.msra.mxu0 %v780
    %2496 = vmatpush.msra.mxu0 %v772
    %2497 = vmatpush.msra.mxu0 %v764
    %2498 = vmatpush.msra.mxu0 %v756
    %2499 = vmatpush.msra.mxu0 %v748
    %2500 = vmatpush.msra.mxu0 %v740
    %2501 = vmatpush.msra.mxu0 %v732
    %2502 = vmatpush.msra.mxu0 %v724
    %2503 = vmatpush.msra.mxu0 %v716
    %2504 = vmatpush.msra.mxu0 %v708
    %2505 = vmatpush.msra.mxu0 %v700
    %2506 = vmatmul.f32.gmra.mxu0 %v2408
    %v2507 = vpop.f32.mrf.mxu0
    %v2508 = vadd.f32 0.0, %v2507
    %2509 = vdwg.mxu0
    %2510 = vmatpush.msra.mxu0 %v948
    %2511 = vmatpush.msra.mxu0 %v940
    %2512 = vmatpush.msra.mxu0 %v932
    %2513 = vmatpush.msra.mxu0 %v924
    %2514 = vmatpush.msra.mxu0 %v916
    %2515 = vmatpush.msra.mxu0 %v908
    %2516 = vmatpush.msra.mxu0 %v900
    %2517 = vmatpush.msra.mxu0 %v892
    %2518 = vmatpush.msra.mxu0 %v884
    %2519 = vmatpush.msra.mxu0 %v876
    %2520 = vmatpush.msra.mxu0 %v868
    %2521 = vmatpush.msra.mxu0 %v860
    %2522 = vmatpush.msra.mxu0 %v852
    %2523 = vmatpush.msra.mxu0 %v844
    %2524 = vmatpush.msra.mxu0 %v836
    %2525 = vmatpush.msra.mxu0 %v828
    %2526 = vmatmul.f32.gmra.mxu0 %v2409
    %v2527 = vpop.f32.mrf.mxu0
    %v2528 = vadd.f32 %v2508, %v2527
    %2529 = vdwg.mxu0
    %2530 = vmatpush.msra.mxu0 %v821
    %2531 = vmatpush.msra.mxu0 %v813
    %2532 = vmatpush.msra.mxu0 %v805
    %2533 = vmatpush.msra.mxu0 %v797
    %2534 = vmatpush.msra.mxu0 %v789
    %2535 = vmatpush.msra.mxu0 %v781
    %2536 = vmatpush.msra.mxu0 %v773
    %2537 = vmatpush.msra.mxu0 %v765
    %2538 = vmatpush.msra.mxu0 %v757
    %2539 = vmatpush.msra.mxu0 %v749
    %2540 = vmatpush.msra.mxu0 %v741
    %2541 = vmatpush.msra.mxu0 %v733
    %2542 = vmatpush.msra.mxu0 %v725
    %2543 = vmatpush.msra.mxu0 %v717
    %2544 = vmatpush.msra.mxu0 %v709
    %2545 = vmatpush.msra.mxu0 %v701
    %2546 = vmatmul.f32.gmra.mxu0 %v2408
    %v2547 = vpop.f32.mrf.mxu0
    %v2548 = vadd.f32 0.0, %v2547
    %2549 = vdwg.mxu0
    %2550 = vmatpush.msra.mxu0 %v949
    %2551 = vmatpush.msra.mxu0 %v941
    %2552 = vmatpush.msra.mxu0 %v933
    %2553 = vmatpush.msra.mxu0 %v925
    %2554 = vmatpush.msra.mxu0 %v917
    %2555 = vmatpush.msra.mxu0 %v909
    %2556 = vmatpush.msra.mxu0 %v901
    %2557 = vmatpush.msra.mxu0 %v893
    %2558 = vmatpush.msra.mxu0 %v885
    %2559 = vmatpush.msra.mxu0 %v877
    %2560 = vmatpush.msra.mxu0 %v869
    %2561 = vmatpush.msra.mxu0 %v861
    %2562 = vmatpush.msra.mxu0 %v853
    %2563 = vmatpush.msra.mxu0 %v845
    %2564 = vmatpush.msra.mxu0 %v837
    %2565 = vmatpush.msra.mxu0 %v829
    %2566 = vmatmul.f32.gmra.mxu0 %v2409
    %v2567 = vpop.f32.mrf.mxu0
    %v2568 = vadd.f32 %v2548, %v2567
    %2569 = vdwg.mxu0
    %2570 = vmatpush.msra.mxu0 %v822
    %2571 = vmatpush.msra.mxu0 %v814
    %2572 = vmatpush.msra.mxu0 %v806
    %2573 = vmatpush.msra.mxu0 %v798
    %2574 = vmatpush.msra.mxu0 %v790
    %2575 = vmatpush.msra.mxu0 %v782
    %2576 = vmatpush.msra.mxu0 %v774
    %2577 = vmatpush.msra.mxu0 %v766
    %2578 = vmatpush.msra.mxu0 %v758
    %2579 = vmatpush.msra.mxu0 %v750
    %2580 = vmatpush.msra.mxu0 %v742
    %2581 = vmatpush.msra.mxu0 %v734
    %2582 = vmatpush.msra.mxu0 %v726
    %2583 = vmatpush.msra.mxu0 %v718
    %2584 = vmatpush.msra.mxu0 %v710
    %2585 = vmatpush.msra.mxu0 %v702
    %2586 = vmatmul.f32.gmra.mxu0 %v2408
    %v2587 = vpop.f32.mrf.mxu0
    %v2588 = vadd.f32 0.0, %v2587
    %2589 = vdwg.mxu0
    %2590 = vmatpush.msra.mxu0 %v950
    %2591 = vmatpush.msra.mxu0 %v942
    %2592 = vmatpush.msra.mxu0 %v934
    %2593 = vmatpush.msra.mxu0 %v926
    %2594 = vmatpush.msra.mxu0 %v918
    %2595 = vmatpush.msra.mxu0 %v910
    %2596 = vmatpush.msra.mxu0 %v902
    %2597 = vmatpush.msra.mxu0 %v894
    %2598 = vmatpush.msra.mxu0 %v886
    %2599 = vmatpush.msra.mxu0 %v878
    %2600 = vmatpush.msra.mxu0 %v870
    %2601 = vmatpush.msra.mxu0 %v862
    %2602 = vmatpush.msra.mxu0 %v854
    %2603 = vmatpush.msra.mxu0 %v846
    %2604 = vmatpush.msra.mxu0 %v838
    %2605 = vmatpush.msra.mxu0 %v830
    %2606 = vmatmul.f32.gmra.mxu0 %v2409
    %v2607 = vpop.f32.mrf.mxu0
    %v2608 = vadd.f32 %v2588, %v2607
    %2609 = vdwg.mxu0
    %2610 = vmatpush.msra.mxu0 %v823
    %2611 = vmatpush.msra.mxu0 %v815
    %2612 = vmatpush.msra.mxu0 %v807
    %2613 = vmatpush.msra.mxu0 %v799
    %2614 = vmatpush.msra.mxu0 %v791
    %2615 = vmatpush.msra.mxu0 %v783
    %2616 = vmatpush.msra.mxu0 %v775
    %2617 = vmatpush.msra.mxu0 %v767
    %2618 = vmatpush.msra.mxu0 %v759
    %2619 = vmatpush.msra.mxu0 %v751
    %2620 = vmatpush.msra.mxu0 %v743
    %2621 = vmatpush.msra.mxu0 %v735
    %2622 = vmatpush.msra.mxu0 %v727
    %2623 = vmatpush.msra.mxu0 %v719
    %2624 = vmatpush.msra.mxu0 %v711
    %2625 = vmatpush.msra.mxu0 %v703
    %2626 = vmatmul.f32.gmra.mxu0 %v2408
    %v2627 = vpop.f32.mrf.mxu0
    %v2628 = vadd.f32 0.0, %v2627
    %2629 = vdwg.mxu0
    %2630 = vmatpush.msra.mxu0 %v951
    %2631 = vmatpush.msra.mxu0 %v943
    %2632 = vmatpush.msra.mxu0 %v935
    %2633 = vmatpush.msra.mxu0 %v927
    %2634 = vmatpush.msra.mxu0 %v919
    %2635 = vmatpush.msra.mxu0 %v911
    %2636 = vmatpush.msra.mxu0 %v903
    %2637 = vmatpush.msra.mxu0 %v895
    %2638 = vmatpush.msra.mxu0 %v887
    %2639 = vmatpush.msra.mxu0 %v879
    %2640 = vmatpush.msra.mxu0 %v871
    %2641 = vmatpush.msra.mxu0 %v863
    %2642 = vmatpush.msra.mxu0 %v855
    %2643 = vmatpush.msra.mxu0 %v847
    %2644 = vmatpush.msra.mxu0 %v839
    %2645 = vmatpush.msra.mxu0 %v831
    %2646 = vmatmul.f32.gmra.mxu0 %v2409
    %v2647 = vpop.f32.mrf.mxu0
    %v2648 = vadd.f32 %v2628, %v2647
    %2649 = vdwg.mxu0
    %2650 = vmatpush.msra.mxu0 %v824
    %2651 = vmatpush.msra.mxu0 %v816
    %2652 = vmatpush.msra.mxu0 %v808
    %2653 = vmatpush.msra.mxu0 %v800
    %2654 = vmatpush.msra.mxu0 %v792
    %2655 = vmatpush.msra.mxu0 %v784
    %2656 = vmatpush.msra.mxu0 %v776
    %2657 = vmatpush.msra.mxu0 %v768
    %2658 = vmatpush.msra.mxu0 %v760
    %2659 = vmatpush.msra.mxu0 %v752
    %2660 = vmatpush.msra.mxu0 %v744
    %2661 = vmatpush.msra.mxu0 %v736
    %2662 = vmatpush.msra.mxu0 %v728
    %2663 = vmatpush.msra.mxu0 %v720
    %2664 = vmatpush.msra.mxu0 %v712
    %2665 = vmatpush.msra.mxu0 %v704
    %2666 = vmatmul.f32.gmra.mxu0 %v2408
    %v2667 = vpop.f32.mrf.mxu0
    %v2668 = vadd.f32 0.0, %v2667
    %2669 = vdwg.mxu0
    %2670 = vmatpush.msra.mxu0 %v952
    %2671 = vmatpush.msra.mxu0 %v944
    %2672 = vmatpush.msra.mxu0 %v936
    %2673 = vmatpush.msra.mxu0 %v928
    %2674 = vmatpush.msra.mxu0 %v920
    %2675 = vmatpush.msra.mxu0 %v912
    %2676 = vmatpush.msra.mxu0 %v904
    %2677 = vmatpush.msra.mxu0 %v896
    %2678 = vmatpush.msra.mxu0 %v888
    %2679 = vmatpush.msra.mxu0 %v880
    %2680 = vmatpush.msra.mxu0 %v872
    %2681 = vmatpush.msra.mxu0 %v864
    %2682 = vmatpush.msra.mxu0 %v856
    %2683 = vmatpush.msra.mxu0 %v848
    %2684 = vmatpush.msra.mxu0 %v840
    %2685 = vmatpush.msra.mxu0 %v832
    %2686 = vmatmul.f32.gmra.mxu0 %v2409
    %v2687 = vpop.f32.mrf.mxu0
    %v2688 = vadd.f32 %v2668, %v2687
    %2689 = vdwg.mxu0
    %2690 = vmatpush.msra.mxu0 %v825
    %2691 = vmatpush.msra.mxu0 %v817
    %2692 = vmatpush.msra.mxu0 %v809
    %2693 = vmatpush.msra.mxu0 %v801
    %2694 = vmatpush.msra.mxu0 %v793
    %2695 = vmatpush.msra.mxu0 %v785
    %2696 = vmatpush.msra.mxu0 %v777
    %2697 = vmatpush.msra.mxu0 %v769
    %2698 = vmatpush.msra.mxu0 %v761
    %2699 = vmatpush.msra.mxu0 %v753
    %2700 = vmatpush.msra.mxu0 %v745
    %2701 = vmatpush.msra.mxu0 %v737
    %2702 = vmatpush.msra.mxu0 %v729
    %2703 = vmatpush.msra.mxu0 %v721
    %2704 = vmatpush.msra.mxu0 %v713
    %2705 = vmatpush.msra.mxu0 %v705
    %2706 = vmatmul.f32.gmra.mxu0 %v2408
    %v2707 = vpop.f32.mrf.mxu0
    %v2708 = vadd.f32 0.0, %v2707
    %2709 = vdwg.mxu0
    %2710 = vmatpush.msra.mxu0 %v953
    %2711 = vmatpush.msra.mxu0 %v945
    %2712 = vmatpush.msra.mxu0 %v937
    %2713 = vmatpush.msra.mxu0 %v929
    %2714 = vmatpush.msra.mxu0 %v921
    %2715 = vmatpush.msra.mxu0 %v913
    %2716 = vmatpush.msra.mxu0 %v905
    %2717 = vmatpush.msra.mxu0 %v897
    %2718 = vmatpush.msra.mxu0 %v889
    %2719 = vmatpush.msra.mxu0 %v881
    %2720 = vmatpush.msra.mxu0 %v873
    %2721 = vmatpush.msra.mxu0 %v865
    %2722 = vmatpush.msra.mxu0 %v857
    %2723 = vmatpush.msra.mxu0 %v849
    %2724 = vmatpush.msra.mxu0 %v841
    %2725 = vmatpush.msra.mxu0 %v833
    %2726 = vmatmul.f32.gmra.mxu0 %v2409
    %v2727 = vpop.f32.mrf.mxu0
    %v2728 = vadd.f32 %v2708, %v2727
    %2729 = vdwg.mxu0
    %v2730 = vadd.f32 %v400, %v2448
    %v2731 = vadd.f32 %v441, %v2488
    %v2732 = vadd.f32 %v482, %v2528
    %v2733 = vadd.f32 %v523, %v2568
    %v2734 = vadd.f32 %v564, %v2608
    %v2735 = vadd.f32 %v605, %v2648
    %v2736 = vadd.f32 %v646, %v2688
    %v2737 = vadd.f32 %v687, %v2728
    %v2738 = vmul.f32 %v2730, 0.5
    %v2739 = vmul.f32 %v2731, 0.5
    %v2740 = vtanh.pop %v2738
    %v2741 = vtanh.pop %v2739
    %v2742 = vadd.f32 %v2740, 1.0
    %v2743 = vadd.f32 %v2741, 1.0
    %v2744 = vmul.f32 %v2742, 0.5
    %v2745 = vmul.f32 %v2743, 0.5
    %v2746 = vmul.f32 %v2732, 0.5
    %v2747 = vmul.f32 %v2733, 0.5
    %v2748 = vtanh.pop %v2746
    %v2749 = vtanh.pop %v2747
    %v2750 = vadd.f32 %v2748, 1.0
    %v2751 = vadd.f32 %v2749, 1.0
    %v2752 = vmul.f32 %v2750, 0.5
    %v2753 = vmul.f32 %v2751, 0.5
    %v2754 = vtanh.pop %v2734
    %v2755 = vtanh.pop %v2735
    %v2756 = vmul.f32 %v2736, 0.5
    %v2757 = vmul.f32 %v2737, 0.5
    %v2758 = vtanh.pop %v2756
    %v2759 = vtanh.pop %v2757
    %v2760 = vadd.f32 %v2758, 1.0
    %v2761 = vadd.f32 %v2759, 1.0
    %v2762 = vmul.f32 %v2760, 0.5
    %v2763 = vmul.f32 %v2761, 0.5
    %v2764 = vmul.f32 %v2752, %v2404
    %v2765 = vmul.f32 %v2753, %v2405
    %v2766 = vmul.f32 %v2744, %v2754
    %v2767 = vmul.f32 %v2745, %v2755
    %v2768 = vadd.f32 %v2764, %v2766
    %v2769 = vadd.f32 %v2765, %v2767
    %v2770 = vtanh.pop %v2768
    %v2771 = vtanh.pop %v2769
    %v2772 = vmul.f32 %v2762, %v2770
    %v2773 = vmul.f32 %v2763, %v2771
    %2774 = vmatpush.msra.mxu0 %v818
    %2775 = vmatpush.msra.mxu0 %v810
    %2776 = vmatpush.msra.mxu0 %v802
    %2777 = vmatpush.msra.mxu0 %v794
    %2778 = vmatpush.msra.mxu0 %v786
    %2779 = vmatpush.msra.mxu0 %v778
    %2780 = vmatpush.msra.mxu0 %v770
    %2781 = vmatpush.msra.mxu0 %v762
    %2782 = vmatpush.msra.mxu0 %v754
    %2783 = vmatpush.msra.mxu0 %v746
    %2784 = vmatpush.msra.mxu0 %v738
    %2785 = vmatpush.msra.mxu0 %v730
    %2786 = vmatpush.msra.mxu0 %v722
    %2787 = vmatpush.msra.mxu0 %v714
    %2788 = vmatpush.msra.mxu0 %v706
    %2789 = vmatpush.msra.mxu0 %v698
    %2790 = vmatmul.f32.gmra.mxu0 %v2772
    %v2791 = vpop.f32.mrf.mxu0
    %v2792 = vadd.f32 0.0, %v2791
    %2793 = vdwg.mxu0
    %2794 = vmatpush.msra.mxu0 %v946
    %2795 = vmatpush.msra.mxu0 %v938
    %2796 = vmatpush.msra.mxu0 %v930
    %2797 = vmatpush.msra.mxu0 %v922
    %2798 = vmatpush.msra.mxu0 %v914
    %2799 = vmatpush.msra.mxu0 %v906
    %2800 = vmatpush.msra.mxu0 %v898
    %2801 = vmatpush.msra.mxu0 %v890
    %2802 = vmatpush.msra.mxu0 %v882
    %2803 = vmatpush.msra.mxu0 %v874
    %2804 = vmatpush.msra.mxu0 %v866
    %2805 = vmatpush.msra.mxu0 %v858
    %2806 = vmatpush.msra.mxu0 %v850
    %2807 = vmatpush.msra.mxu0 %v842
    %2808 = vmatpush.msra.mxu0 %v834
    %2809 = vmatpush.msra.mxu0 %v826
    %2810 = vmatmul.f32.gmra.mxu0 %v2773
    %v2811 = vpop.f32.mrf.mxu0
    %v2812 = vadd.f32 %v2792, %v2811
    %2813 = vdwg.mxu0
    %2814 = vmatpush.msra.mxu0 %v819
    %2815 = vmatpush.msra.mxu0 %v811
    %2816 = vmatpush.msra.mxu0 %v803
    %2817 = vmatpush.msra.mxu0 %v795
    %2818 = vmatpush.msra.mxu0 %v787
    %2819 = vmatpush.msra.mxu0 %v779
    %2820 = vmatpush.msra.mxu0 %v771
    %2821 = vmatpush.msra.mxu0 %v763
    %2822 = vmatpush.msra.mxu0 %v755
    %2823 = vmatpush.msra.mxu0 %v747
    %2824 = vmatpush.msra.mxu0 %v739
    %2825 = vmatpush.msra.mxu0 %v731
    %2826 = vmatpush.msra.mxu0 %v723
    %2827 = vmatpush.msra.mxu0 %v715
    %2828 = vmatpush.msra.mxu0 %v707
    %2829 = vmatpush.msra.mxu0 %v699
    %2830 = vmatmul.f32.gmra.mxu0 %v2772
    %v2831 = vpop.f32.mrf.mxu0
    %v2832 = vadd.f32 0.0, %v2831
    %2833 = vdwg.mxu0
    %2834 = vmatpush.msra.mxu0 %v947
    %2835 = vmatpush.msra.mxu0 %v939
    %2836 = vmatpush.msra.mxu0 %v931
    %2837 = vmatpush.msra.mxu0 %v923
    %2838 = vmatpush.msra.mxu0 %v915
    %2839 = vmatpush.msra.mxu0 %v907
    %2840 = vmatpush.msra.mxu0 %v899
    %2841 = vmatpush.msra.mxu0 %v891
    %2842 = vmatpush.msra.mxu0 %v883
    %2843 = vmatpush.msra.mxu0 %v875
    %2844 = vmatpush.msra.mxu0 %v867
    %2845 = vmatpush.msra.mxu0 %v859
    %2846 = vmatpush.msra.mxu0 %v851
    %2847 = vmatpush.msra.mxu0 %v843
    %2848 = vmatpush.msra.mxu0 %v835
    %2849 = vmatpush.msra.mxu0 %v827
    %2850 = vmatmul.f32.gmra.mxu0 %v2773
    %v2851 = vpop.f32.mrf.mxu0
    %v2852 = vadd.f32 %v2832, %v2851
    %2853 = vdwg.mxu0
    %2854 = vmatpush.msra.mxu0 %v820
    %2855 = vmatpush.msra.mxu0 %v812
    %2856 = vmatpush.msra.mxu0 %v804
    %2857 = vmatpush.msra.mxu0 %v796
    %2858 = vmatpush.msra.mxu0 %v788
    %2859 = vmatpush.msra.mxu0 %v780
    %2860 = vmatpush.msra.mxu0 %v772
    %2861 = vmatpush.msra.mxu0 %v764
    %2862 = vmatpush.msra.mxu0 %v756
    %2863 = vmatpush.msra.mxu0 %v748
    %2864 = vmatpush.msra.mxu0 %v740
    %2865 = vmatpush.msra.mxu0 %v732
    %2866 = vmatpush.msra.mxu0 %v724
    %2867 = vmatpush.msra.mxu0 %v716
    %2868 = vmatpush.msra.mxu0 %v708
    %2869 = vmatpush.msra.mxu0 %v700
    %2870 = vmatmul.f32.gmra.mxu0 %v2772
    %v2871 = vpop.f32.mrf.mxu0
    %v2872 = vadd.f32 0.0, %v2871
    %2873 = vdwg.mxu0
    %2874 = vmatpush.msra.mxu0 %v948
    %2875 = vmatpush.msra.mxu0 %v940
    %2876 = vmatpush.msra.mxu0 %v932
    %2877 = vmatpush.msra.mxu0 %v924
    %2878 = vmatpush.msra.mxu0 %v916
    %2879 = vmatpush.msra.mxu0 %v908
    %2880 = vmatpush.msra.mxu0 %v900
    %2881 = vmatpush.msra.mxu0 %v892
    %2882 = vmatpush.msra.mxu0 %v884
    %2883 = vmatpush.msra.mxu0 %v876
    %2884 = vmatpush.msra.mxu0 %v868
    %2885 = vmatpush.msra.mxu0 %v860
    %2886 = vmatpush.msra.mxu0 %v852
    %2887 = vmatpush.msra.mxu0 %v844
    %2888 = vmatpush.msra.mxu0 %v836
    %2889 = vmatpush.msra.mxu0 %v828
    %2890 = vmatmul.f32.gmra.mxu0 %v2773
    %v2891 = vpop.f32.mrf.mxu0
    %v2892 = vadd.f32 %v2872, %v2891
    %2893 = vdwg.mxu0
    %2894 = vmatpush.msra.mxu0 %v821
    %2895 = vmatpush.msra.mxu0 %v813
    %2896 = vmatpush.msra.mxu0 %v805
    %2897 = vmatpush.msra.mxu0 %v797
    %2898 = vmatpush.msra.mxu0 %v789
    %2899 = vmatpush.msra.mxu0 %v781
    %2900 = vmatpush.msra.mxu0 %v773
    %2901 = vmatpush.msra.mxu0 %v765
    %2902 = vmatpush.msra.mxu0 %v757
    %2903 = vmatpush.msra.mxu0 %v749
    %2904 = vmatpush.msra.mxu0 %v741
    %2905 = vmatpush.msra.mxu0 %v733
    %2906 = vmatpush.msra.mxu0 %v725
    %2907 = vmatpush.msra.mxu0 %v717
    %2908 = vmatpush.msra.mxu0 %v709
    %2909 = vmatpush.msra.mxu0 %v701
    %2910 = vmatmul.f32.gmra.mxu0 %v2772
    %v2911 = vpop.f32.mrf.mxu0
    %v2912 = vadd.f32 0.0, %v2911
    %2913 = vdwg.mxu0
    %2914 = vmatpush.msra.mxu0 %v949
    %2915 = vmatpush.msra.mxu0 %v941
    %2916 = vmatpush.msra.mxu0 %v933
    %2917 = vmatpush.msra.mxu0 %v925
    %2918 = vmatpush.msra.mxu0 %v917
    %2919 = vmatpush.msra.mxu0 %v909
    %2920 = vmatpush.msra.mxu0 %v901
    %2921 = vmatpush.msra.mxu0 %v893
    %2922 = vmatpush.msra.mxu0 %v885
    %2923 = vmatpush.msra.mxu0 %v877
    %2924 = vmatpush.msra.mxu0 %v869
    %2925 = vmatpush.msra.mxu0 %v861
    %2926 = vmatpush.msra.mxu0 %v853
    %2927 = vmatpush.msra.mxu0 %v845
    %2928 = vmatpush.msra.mxu0 %v837
    %2929 = vmatpush.msra.mxu0 %v829
    %2930 = vmatmul.f32.gmra.mxu0 %v2773
    %v2931 = vpop.f32.mrf.mxu0
    %v2932 = vadd.f32 %v2912, %v2931
    %2933 = vdwg.mxu0
    %2934 = vmatpush.msra.mxu0 %v822
    %2935 = vmatpush.msra.mxu0 %v814
    %2936 = vmatpush.msra.mxu0 %v806
    %2937 = vmatpush.msra.mxu0 %v798
    %2938 = vmatpush.msra.mxu0 %v790
    %2939 = vmatpush.msra.mxu0 %v782
    %2940 = vmatpush.msra.mxu0 %v774
    %2941 = vmatpush.msra.mxu0 %v766
    %2942 = vmatpush.msra.mxu0 %v758
    %2943 = vmatpush.msra.mxu0 %v750
    %2944 = vmatpush.msra.mxu0 %v742
    %2945 = vmatpush.msra.mxu0 %v734
    %2946 = vmatpush.msra.mxu0 %v726
    %2947 = vmatpush.msra.mxu0 %v718
    %2948 = vmatpush.msra.mxu0 %v710
    %2949 = vmatpush.msra.mxu0 %v702
    %2950 = vmatmul.f32.gmra.mxu0 %v2772
    %v2951 = vpop.f32.mrf.mxu0
    %v2952 = vadd.f32 0.0, %v2951
    %2953 = vdwg.mxu0
    %2954 = vmatpush.msra.mxu0 %v950
    %2955 = vmatpush.msra.mxu0 %v942
    %2956 = vmatpush.msra.mxu0 %v934
    %2957 = vmatpush.msra.mxu0 %v926
    %2958 = vmatpush.msra.mxu0 %v918
    %2959 = vmatpush.msra.mxu0 %v910
    %2960 = vmatpush.msra.mxu0 %v902
    %2961 = vmatpush.msra.mxu0 %v894
    %2962 = vmatpush.msra.mxu0 %v886
    %2963 = vmatpush.msra.mxu0 %v878
    %2964 = vmatpush.msra.mxu0 %v870
    %2965 = vmatpush.msra.mxu0 %v862
    %2966 = vmatpush.msra.mxu0 %v854
    %2967 = vmatpush.msra.mxu0 %v846
    %2968 = vmatpush.msra.mxu0 %v838
    %2969 = vmatpush.msra.mxu0 %v830
    %2970 = vmatmul.f32.gmra.mxu0 %v2773
    %v2971 = vpop.f32.mrf.mxu0
    %v2972 = vadd.f32 %v2952, %v2971
    %2973 = vdwg.mxu0
    %2974 = vmatpush.msra.mxu0 %v823
    %2975 = vmatpush.msra.mxu0 %v815
    %2976 = vmatpush.msra.mxu0 %v807
    %2977 = vmatpush.msra.mxu0 %v799
    %2978 = vmatpush.msra.mxu0 %v791
    %2979 = vmatpush.msra.mxu0 %v783
    %2980 = vmatpush.msra.mxu0 %v775
    %2981 = vmatpush.msra.mxu0 %v767
    %2982 = vmatpush.msra.mxu0 %v759
    %2983 = vmatpush.msra.mxu0 %v751
    %2984 = vmatpush.msra.mxu0 %v743
    %2985 = vmatpush.msra.mxu0 %v735
    %2986 = vmatpush.msra.mxu0 %v727
    %2987 = vmatpush.msra.mxu0 %v719
    %2988 = vmatpush.msra.mxu0 %v711
    %2989 = vmatpush.msra.mxu0 %v703
    %2990 = vmatmul.f32.gmra.mxu0 %v2772
    %v2991 = vpop.f32.mrf.mxu0
    %v2992 = vadd.f32 0.0, %v2991
    %2993 = vdwg.mxu0
    %2994 = vmatpush.msra.mxu0 %v951
    %2995 = vmatpush.msra.mxu0 %v943
    %2996 = vmatpush.msra.mxu0 %v935
    %2997 = vmatpush.msra.mxu0 %v927
    %2998 = vmatpush.msra.mxu0 %v919
    %2999 = vmatpush.msra.mxu0 %v911
    %3000 = vmatpush.msra.mxu0 %v903
    %3001 = vmatpush.msra.mxu0 %v895
    %3002 = vmatpush.msra.mxu0 %v887
    %3003 = vmatpush.msra.mxu0 %v879
    %3004 = vmatpush.msra.mxu0 %v871
    %3005 = vmatpush.msra.mxu0 %v863
    %3006 = vmatpush.msra.mxu0 %v855
    %3007 = vmatpush.msra.mxu0 %v847
    %3008 = vmatpush.msra.mxu0 %v839
    %3009 = vmatpush.msra.mxu0 %v831
    %3010 = vmatmul.f32.gmra.mxu0 %v2773
    %v3011 = vpop.f32.mrf.mxu0
    %v3012 = vadd.f32 %v2992, %v3011
    %3013 = vdwg.mxu0
    %3014 = vmatpush.msra.mxu0 %v824
    %3015 = vmatpush.msra.mxu0 %v816
    %3016 = vmatpush.msra.mxu0 %v808
    %3017 = vmatpush.msra.mxu0 %v800
    %3018 = vmatpush.msra.mxu0 %v792
    %3019 = vmatpush.msra.mxu0 %v784
    %3020 = vmatpush.msra.mxu0 %v776
    %3021 = vmatpush.msra.mxu0 %v768
    %3022 = vmatpush.msra.mxu0 %v760
    %3023 = vmatpush.msra.mxu0 %v752
    %3024 = vmatpush.msra.mxu0 %v744
    %3025 = vmatpush.msra.mxu0 %v736
    %3026 = vmatpush.msra.mxu0 %v728
    %3027 = vmatpush.msra.mxu0 %v720
    %3028 = vmatpush.msra.mxu0 %v712
    %3029 = vmatpush.msra.mxu0 %v704
    %3030 = vmatmul.f32.gmra.mxu0 %v2772
    %v3031 = vpop.f32.mrf.mxu0
    %v3032 = vadd.f32 0.0, %v3031
    %3033 = vdwg.mxu0
    %3034 = vmatpush.msra.mxu0 %v952
    %3035 = vmatpush.msra.mxu0 %v944
    %3036 = vmatpush.msra.mxu0 %v936
    %3037 = vmatpush.msra.mxu0 %v928
    %3038 = vmatpush.msra.mxu0 %v920
    %3039 = vmatpush.msra.mxu0 %v912
    %3040 = vmatpush.msra.mxu0 %v904
    %3041 = vmatpush.msra.mxu0 %v896
    %3042 = vmatpush.msra.mxu0 %v888
    %3043 = vmatpush.msra.mxu0 %v880
    %3044 = vmatpush.msra.mxu0 %v872
    %3045 = vmatpush.msra.mxu0 %v864
    %3046 = vmatpush.msra.mxu0 %v856
    %3047 = vmatpush.msra.mxu0 %v848
    %3048 = vmatpush.msra.mxu0 %v840
    %3049 = vmatpush.msra.mxu0 %v832
    %3050 = vmatmul.f32.gmra.mxu0 %v2773
    %v3051 = vpop.f32.mrf.mxu0
    %v3052 = vadd.f32 %v3032, %v3051
    %3053 = vdwg.mxu0
    %3054 = vmatpush.msra.mxu0 %v825
    %3055 = vmatpush.msra.mxu0 %v817
    %3056 = vmatpush.msra.mxu0 %v809
    %3057 = vmatpush.msra.mxu0 %v801
    %3058 = vmatpush.msra.mxu0 %v793
    %3059 = vmatpush.msra.mxu0 %v785
    %3060 = vmatpush.msra.mxu0 %v777
    %3061 = vmatpush.msra.mxu0 %v769
    %3062 = vmatpush.msra.mxu0 %v761
    %3063 = vmatpush.msra.mxu0 %v753
    %3064 = vmatpush.msra.mxu0 %v745
    %3065 = vmatpush.msra.mxu0 %v737
    %3066 = vmatpush.msra.mxu0 %v729
    %3067 = vmatpush.msra.mxu0 %v721
    %3068 = vmatpush.msra.mxu0 %v713
    %3069 = vmatpush.msra.mxu0 %v705
    %3070 = vmatmul.f32.gmra.mxu0 %v2772
    %v3071 = vpop.f32.mrf.mxu0
    %v3072 = vadd.f32 0.0, %v3071
    %3073 = vdwg.mxu0
    %3074 = vmatpush.msra.mxu0 %v953
    %3075 = vmatpush.msra.mxu0 %v945
    %3076 = vmatpush.msra.mxu0 %v937
    %3077 = vmatpush.msra.mxu0 %v929
    %3078 = vmatpush.msra.mxu0 %v921
    %3079 = vmatpush.msra.mxu0 %v913
    %3080 = vmatpush.msra.mxu0 %v905
    %3081 = vmatpush.msra.mxu0 %v897
    %3082 = vmatpush.msra.mxu0 %v889
    %3083 = vmatpush.msra.mxu0 %v881
    %3084 = vmatpush.msra.mxu0 %v873
    %3085 = vmatpush.msra.mxu0 %v865
    %3086 = vmatpush.msra.mxu0 %v857
    %3087 = vmatpush.msra.mxu0 %v849
    %3088 = vmatpush.msra.mxu0 %v841
    %3089 = vmatpush.msra.mxu0 %v833
    %3090 = vmatmul.f32.gmra.mxu0 %v2773
    %v3091 = vpop.f32.mrf.mxu0
    %v3092 = vadd.f32 %v3072, %v3091
    %3093 = vdwg.mxu0
    %v3094 = vadd.f32 %v403, %v2812
    %v3095 = vadd.f32 %v444, %v2852
    %v3096 = vadd.f32 %v485, %v2892
    %v3097 = vadd.f32 %v526, %v2932
    %v3098 = vadd.f32 %v567, %v2972
    %v3099 = vadd.f32 %v608, %v3012
    %v3100 = vadd.f32 %v649, %v3052
    %v3101 = vadd.f32 %v690, %v3092
    %v3102 = vmul.f32 %v3094, 0.5
    %v3103 = vmul.f32 %v3095, 0.5
    %v3104 = vtanh.pop %v3102
    %v3105 = vtanh.pop %v3103
    %v3106 = vadd.f32 %v3104, 1.0
    %v3107 = vadd.f32 %v3105, 1.0
    %v3108 = vmul.f32 %v3106, 0.5
    %v3109 = vmul.f32 %v3107, 0.5
    %v3110 = vmul.f32 %v3096, 0.5
    %v3111 = vmul.f32 %v3097, 0.5
    %v3112 = vtanh.pop %v3110
    %v3113 = vtanh.pop %v3111
    %v3114 = vadd.f32 %v3112, 1.0
    %v3115 = vadd.f32 %v3113, 1.0
    %v3116 = vmul.f32 %v3114, 0.5
    %v3117 = vmul.f32 %v3115, 0.5
    %v3118 = vtanh.pop %v3098
    %v3119 = vtanh.pop %v3099
    %v3120 = vmul.f32 %v3100, 0.5
    %v3121 = vmul.f32 %v3101, 0.5
    %v3122 = vtanh.pop %v3120
    %v3123 = vtanh.pop %v3121
    %v3124 = vadd.f32 %v3122, 1.0
    %v3125 = vadd.f32 %v3123, 1.0
    %v3126 = vmul.f32 %v3124, 0.5
    %v3127 = vmul.f32 %v3125, 0.5
    %v3128 = vmul.f32 %v3116, %v2768
    %v3129 = vmul.f32 %v3117, %v2769
    %v3130 = vmul.f32 %v3108, %v3118
    %v3131 = vmul.f32 %v3109, %v3119
    %v3132 = vadd.f32 %v3128, %v3130
    %v3133 = vadd.f32 %v3129, %v3131
    %v3134 = vtanh.pop %v3132
    %v3135 = vtanh.pop %v3133
    %v3136 = vmul.f32 %v3126, %v3134
    %v3137 = vmul.f32 %v3127, %v3135
    %3138 = vmatpush.msra.mxu0 %v818
    %3139 = vmatpush.msra.mxu0 %v810
    %3140 = vmatpush.msra.mxu0 %v802
    %3141 = vmatpush.msra.mxu0 %v794
    %3142 = vmatpush.msra.mxu0 %v786
    %3143 = vmatpush.msra.mxu0 %v778
    %3144 = vmatpush.msra.mxu0 %v770
    %3145 = vmatpush.msra.mxu0 %v762
    %3146 = vmatpush.msra.mxu0 %v754
    %3147 = vmatpush.msra.mxu0 %v746
    %3148 = vmatpush.msra.mxu0 %v738
    %3149 = vmatpush.msra.mxu0 %v730
    %3150 = vmatpush.msra.mxu0 %v722
    %3151 = vmatpush.msra.mxu0 %v714
    %3152 = vmatpush.msra.mxu0 %v706
    %3153 = vmatpush.msra.mxu0 %v698
    %3154 = vmatmul.f32.gmra.mxu0 %v3136
    %v3155 = vpop.f32.mrf.mxu0
    %v3156 = vadd.f32 0.0, %v3155
    %3157 = vdwg.mxu0
    %3158 = vmatpush.msra.mxu0 %v946
    %3159 = vmatpush.msra.mxu0 %v938
    %3160 = vmatpush.msra.mxu0 %v930
    %3161 = vmatpush.msra.mxu0 %v922
    %3162 = vmatpush.msra.mxu0 %v914
    %3163 = vmatpush.msra.mxu0 %v906
    %3164 = vmatpush.msra.mxu0 %v898
    %3165 = vmatpush.msra.mxu0 %v890
    %3166 = vmatpush.msra.mxu0 %v882
    %3167 = vmatpush.msra.mxu0 %v874
    %3168 = vmatpush.msra.mxu0 %v866
    %3169 = vmatpush.msra.mxu0 %v858
    %3170 = vmatpush.msra.mxu0 %v850
    %3171 = vmatpush.msra.mxu0 %v842
    %3172 = vmatpush.msra.mxu0 %v834
    %3173 = vmatpush.msra.mxu0 %v826
    %3174 = vmatmul.f32.gmra.mxu0 %v3137
    %v3175 = vpop.f32.mrf.mxu0
    %v3176 = vadd.f32 %v3156, %v3175
    %3177 = vdwg.mxu0
    %3178 = vmatpush.msra.mxu0 %v819
    %3179 = vmatpush.msra.mxu0 %v811
    %3180 = vmatpush.msra.mxu0 %v803
    %3181 = vmatpush.msra.mxu0 %v795
    %3182 = vmatpush.msra.mxu0 %v787
    %3183 = vmatpush.msra.mxu0 %v779
    %3184 = vmatpush.msra.mxu0 %v771
    %3185 = vmatpush.msra.mxu0 %v763
    %3186 = vmatpush.msra.mxu0 %v755
    %3187 = vmatpush.msra.mxu0 %v747
    %3188 = vmatpush.msra.mxu0 %v739
    %3189 = vmatpush.msra.mxu0 %v731
    %3190 = vmatpush.msra.mxu0 %v723
    %3191 = vmatpush.msra.mxu0 %v715
    %3192 = vmatpush.msra.mxu0 %v707
    %3193 = vmatpush.msra.mxu0 %v699
    %3194 = vmatmul.f32.gmra.mxu0 %v3136
    %v3195 = vpop.f32.mrf.mxu0
    %v3196 = vadd.f32 0.0, %v3195
    %3197 = vdwg.mxu0
    %3198 = vmatpush.msra.mxu0 %v947
    %3199 = vmatpush.msra.mxu0 %v939
    %3200 = vmatpush.msra.mxu0 %v931
    %3201 = vmatpush.msra.mxu0 %v923
    %3202 = vmatpush.msra.mxu0 %v915
    %3203 = vmatpush.msra.mxu0 %v907
    %3204 = vmatpush.msra.mxu0 %v899
    %3205 = vmatpush.msra.mxu0 %v891
    %3206 = vmatpush.msra.mxu0 %v883
    %3207 = vmatpush.msra.mxu0 %v875
    %3208 = vmatpush.msra.mxu0 %v867
    %3209 = vmatpush.msra.mxu0 %v859
    %3210 = vmatpush.msra.mxu0 %v851
    %3211 = vmatpush.msra.mxu0 %v843
    %3212 = vmatpush.msra.mxu0 %v835
    %3213 = vmatpush.msra.mxu0 %v827
    %3214 = vmatmul.f32.gmra.mxu0 %v3137
    %v3215 = vpop.f32.mrf.mxu0
    %v3216 = vadd.f32 %v3196, %v3215
    %3217 = vdwg.mxu0
    %3218 = vmatpush.msra.mxu0 %v820
    %3219 = vmatpush.msra.mxu0 %v812
    %3220 = vmatpush.msra.mxu0 %v804
    %3221 = vmatpush.msra.mxu0 %v796
    %3222 = vmatpush.msra.mxu0 %v788
    %3223 = vmatpush.msra.mxu0 %v780
    %3224 = vmatpush.msra.mxu0 %v772
    %3225 = vmatpush.msra.mxu0 %v764
    %3226 = vmatpush.msra.mxu0 %v756
    %3227 = vmatpush.msra.mxu0 %v748
    %3228 = vmatpush.msra.mxu0 %v740
    %3229 = vmatpush.msra.mxu0 %v732
    %3230 = vmatpush.msra.mxu0 %v724
    %3231 = vmatpush.msra.mxu0 %v716
    %3232 = vmatpush.msra.mxu0 %v708
    %3233 = vmatpush.msra.mxu0 %v700
    %3234 = vmatmul.f32.gmra.mxu0 %v3136
    %v3235 = vpop.f32.mrf.mxu0
    %v3236 = vadd.f32 0.0, %v3235
    %3237 = vdwg.mxu0
    %3238 = vmatpush.msra.mxu0 %v948
    %3239 = vmatpush.msra.mxu0 %v940
    %3240 = vmatpush.msra.mxu0 %v932
    %3241 = vmatpush.msra.mxu0 %v924
    %3242 = vmatpush.msra.mxu0 %v916
    %3243 = vmatpush.msra.mxu0 %v908
    %3244 = vmatpush.msra.mxu0 %v900
    %3245 = vmatpush.msra.mxu0 %v892
    %3246 = vmatpush.msra.mxu0 %v884
    %3247 = vmatpush.msra.mxu0 %v876
    %3248 = vmatpush.msra.mxu0 %v868
    %3249 = vmatpush.msra.mxu0 %v860
    %3250 = vmatpush.msra.mxu0 %v852
    %3251 = vmatpush.msra.mxu0 %v844
    %3252 = vmatpush.msra.mxu0 %v836
    %3253 = vmatpush.msra.mxu0 %v828
    %3254 = vmatmul.f32.gmra.mxu0 %v3137
    %v3255 = vpop.f32.mrf.mxu0
    %v3256 = vadd.f32 %v3236, %v3255
    %3257 = vdwg.mxu0
    %3258 = vmatpush.msra.mxu0 %v821
    %3259 = vmatpush.msra.mxu0 %v813
    %3260 = vmatpush.msra.mxu0 %v805
    %3261 = vmatpush.msra.mxu0 %v797
    %3262 = vmatpush.msra.mxu0 %v789
    %3263 = vmatpush.msra.mxu0 %v781
    %3264 = vmatpush.msra.mxu0 %v773
    %3265 = vmatpush.msra.mxu0 %v765
    %3266 = vmatpush.msra.mxu0 %v757
    %3267 = vmatpush.msra.mxu0 %v749
    %3268 = vmatpush.msra.mxu0 %v741
    %3269 = vmatpush.msra.mxu0 %v733
    %3270 = vmatpush.msra.mxu0 %v725
    %3271 = vmatpush.msra.mxu0 %v717
    %3272 = vmatpush.msra.mxu0 %v709
    %3273 = vmatpush.msra.mxu0 %v701
    %3274 = vmatmul.f32.gmra.mxu0 %v3136
    %v3275 = vpop.f32.mrf.mxu0
    %v3276 = vadd.f32 0.0, %v3275
    %3277 = vdwg.mxu0
    %3278 = vmatpush.msra.mxu0 %v949
    %3279 = vmatpush.msra.mxu0 %v941
    %3280 = vmatpush.msra.mxu0 %v933
    %3281 = vmatpush.msra.mxu0 %v925
    %3282 = vmatpush.msra.mxu0 %v917
    %3283 = vmatpush.msra.mxu0 %v909
    %3284 = vmatpush.msra.mxu0 %v901
    %3285 = vmatpush.msra.mxu0 %v893
    %3286 = vmatpush.msra.mxu0 %v885
    %3287 = vmatpush.msra.mxu0 %v877
    %3288 = vmatpush.msra.mxu0 %v869
    %3289 = vmatpush.msra.mxu0 %v861
    %3290 = vmatpush.msra.mxu0 %v853
    %3291 = vmatpush.msra.mxu0 %v845
    %3292 = vmatpush.msra.mxu0 %v837
    %3293 = vmatpush.msra.mxu0 %v829
    %3294 = vmatmul.f32.gmra.mxu0 %v3137
    %v3295 = vpop.f32.mrf.mxu0
    %v3296 = vadd.f32 %v3276, %v3295
    %3297 = vdwg.mxu0
    %3298 = vmatpush.msra.mxu0 %v822
    %3299 = vmatpush.msra.mxu0 %v814
    %3300 = vmatpush.msra.mxu0 %v806
    %3301 = vmatpush.msra.mxu0 %v798
    %3302 = vmatpush.msra.mxu0 %v790
    %3303 = vmatpush.msra.mxu0 %v782
    %3304 = vmatpush.msra.mxu0 %v774
    %3305 = vmatpush.msra.mxu0 %v766
    %3306 = vmatpush.msra.mxu0 %v758
    %3307 = vmatpush.msra.mxu0 %v750
    %3308 = vmatpush.msra.mxu0 %v742
    %3309 = vmatpush.msra.mxu0 %v734
    %3310 = vmatpush.msra.mxu0 %v726
    %3311 = vmatpush.msra.mxu0 %v718
    %3312 = vmatpush.msra.mxu0 %v710
    %3313 = vmatpush.msra.mxu0 %v702
    %3314 = vmatmul.f32.gmra.mxu0 %v3136
    %v3315 = vpop.f32.mrf.mxu0
    %v3316 = vadd.f32 0.0, %v3315
    %3317 = vdwg.mxu0
    %3318 = vmatpush.msra.mxu0 %v950
    %3319 = vmatpush.msra.mxu0 %v942
    %3320 = vmatpush.msra.mxu0 %v934
    %3321 = vmatpush.msra.mxu0 %v926
    %3322 = vmatpush.msra.mxu0 %v918
    %3323 = vmatpush.msra.mxu0 %v910
    %3324 = vmatpush.msra.mxu0 %v902
    %3325 = vmatpush.msra.mxu0 %v894
    %3326 = vmatpush.msra.mxu0 %v886
    %3327 = vmatpush.msra.mxu0 %v878
    %3328 = vmatpush.msra.mxu0 %v870
    %3329 = vmatpush.msra.mxu0 %v862
    %3330 = vmatpush.msra.mxu0 %v854
    %3331 = vmatpush.msra.mxu0 %v846
    %3332 = vmatpush.msra.mxu0 %v838
    %3333 = vmatpush.msra.mxu0 %v830
    %3334 = vmatmul.f32.gmra.mxu0 %v3137
    %v3335 = vpop.f32.mrf.mxu0
    %v3336 = vadd.f32 %v3316, %v3335
    %3337 = vdwg.mxu0
    %3338 = vmatpush.msra.mxu0 %v823
    %3339 = vmatpush.msra.mxu0 %v815
    %3340 = vmatpush.msra.mxu0 %v807
    %3341 = vmatpush.msra.mxu0 %v799
    %3342 = vmatpush.msra.mxu0 %v791
    %3343 = vmatpush.msra.mxu0 %v783
    %3344 = vmatpush.msra.mxu0 %v775
    %3345 = vmatpush.msra.mxu0 %v767
    %3346 = vmatpush.msra.mxu0 %v759
    %3347 = vmatpush.msra.mxu0 %v751
    %3348 = vmatpush.msra.mxu0 %v743
    %3349 = vmatpush.msra.mxu0 %v735
    %3350 = vmatpush.msra.mxu0 %v727
    %3351 = vmatpush.msra.mxu0 %v719
    %3352 = vmatpush.msra.mxu0 %v711
    %3353 = vmatpush.msra.mxu0 %v703
    %3354 = vmatmul.f32.gmra.mxu0 %v3136
    %v3355 = vpop.f32.mrf.mxu0
    %v3356 = vadd.f32 0.0, %v3355
    %3357 = vdwg.mxu0
    %3358 = vmatpush.msra.mxu0 %v951
    %3359 = vmatpush.msra.mxu0 %v943
    %3360 = vmatpush.msra.mxu0 %v935
    %3361 = vmatpush.msra.mxu0 %v927
    %3362 = vmatpush.msra.mxu0 %v919
    %3363 = vmatpush.msra.mxu0 %v911
    %3364 = vmatpush.msra.mxu0 %v903
    %3365 = vmatpush.msra.mxu0 %v895
    %3366 = vmatpush.msra.mxu0 %v887
    %3367 = vmatpush.msra.mxu0 %v879
    %3368 = vmatpush.msra.mxu0 %v871
    %3369 = vmatpush.msra.mxu0 %v863
    %3370 = vmatpush.msra.mxu0 %v855
    %3371 = vmatpush.msra.mxu0 %v847
    %3372 = vmatpush.msra.mxu0 %v839
    %3373 = vmatpush.msra.mxu0 %v831
    %3374 = vmatmul.f32.gmra.mxu0 %v3137
    %v3375 = vpop.f32.mrf.mxu0
    %v3376 = vadd.f32 %v3356, %v3375
    %3377 = vdwg.mxu0
    %3378 = vmatpush.msra.mxu0 %v824
    %3379 = vmatpush.msra.mxu0 %v816
    %3380 = vmatpush.msra.mxu0 %v808
    %3381 = vmatpush.msra.mxu0 %v800
    %3382 = vmatpush.msra.mxu0 %v792
    %3383 = vmatpush.msra.mxu0 %v784
    %3384 = vmatpush.msra.mxu0 %v776
    %3385 = vmatpush.msra.mxu0 %v768
    %3386 = vmatpush.msra.mxu0 %v760
    %3387 = vmatpush.msra.mxu0 %v752
    %3388 = vmatpush.msra.mxu0 %v744
    %3389 = vmatpush.msra.mxu0 %v736
    %3390 = vmatpush.msra.mxu0 %v728
    %3391 = vmatpush.msra.mxu0 %v720
    %3392 = vmatpush.msra.mxu0 %v712
    %3393 = vmatpush.msra.mxu0 %v704
    %3394 = vmatmul.f32.gmra.mxu0 %v3136
    %v3395 = vpop.f32.mrf.mxu0
    %v3396 = vadd.f32 0.0, %v3395
    %3397 = vdwg.mxu0
    %3398 = vmatpush.msra.mxu0 %v952
    %3399 = vmatpush.msra.mxu0 %v944
    %3400 = vmatpush.msra.mxu0 %v936
    %3401 = vmatpush.msra.mxu0 %v928
    %3402 = vmatpush.msra.mxu0 %v920
    %3403 = vmatpush.msra.mxu0 %v912
    %3404 = vmatpush.msra.mxu0 %v904
    %3405 = vmatpush.msra.mxu0 %v896
    %3406 = vmatpush.msra.mxu0 %v888
    %3407 = vmatpush.msra.mxu0 %v880
    %3408 = vmatpush.msra.mxu0 %v872
    %3409 = vmatpush.msra.mxu0 %v864
    %3410 = vmatpush.msra.mxu0 %v856
    %3411 = vmatpush.msra.mxu0 %v848
    %3412 = vmatpush.msra.mxu0 %v840
    %3413 = vmatpush.msra.mxu0 %v832
    %3414 = vmatmul.f32.gmra.mxu0 %v3137
    %v3415 = vpop.f32.mrf.mxu0
    %v3416 = vadd.f32 %v3396, %v3415
    %3417 = vdwg.mxu0
    %3418 = vmatpush.msra.mxu0 %v825
    %3419 = vmatpush.msra.mxu0 %v817
    %3420 = vmatpush.msra.mxu0 %v809
    %3421 = vmatpush.msra.mxu0 %v801
    %3422 = vmatpush.msra.mxu0 %v793
    %3423 = vmatpush.msra.mxu0 %v785
    %3424 = vmatpush.msra.mxu0 %v777
    %3425 = vmatpush.msra.mxu0 %v769
    %3426 = vmatpush.msra.mxu0 %v761
    %3427 = vmatpush.msra.mxu0 %v753
    %3428 = vmatpush.msra.mxu0 %v745
    %3429 = vmatpush.msra.mxu0 %v737
    %3430 = vmatpush.msra.mxu0 %v729
    %3431 = vmatpush.msra.mxu0 %v721
    %3432 = vmatpush.msra.mxu0 %v713
    %3433 = vmatpush.msra.mxu0 %v705
    %3434 = vmatmul.f32.gmra.mxu0 %v3136
    %v3435 = vpop.f32.mrf.mxu0
    %v3436 = vadd.f32 0.0, %v3435
    %3437 = vdwg.mxu0
    %3438 = vmatpush.msra.mxu0 %v953
    %3439 = vmatpush.msra.mxu0 %v945
    %3440 = vmatpush.msra.mxu0 %v937
    %3441 = vmatpush.msra.mxu0 %v929
    %3442 = vmatpush.msra.mxu0 %v921
    %3443 = vmatpush.msra.mxu0 %v913
    %3444 = vmatpush.msra.mxu0 %v905
    %3445 = vmatpush.msra.mxu0 %v897
    %3446 = vmatpush.msra.mxu0 %v889
    %3447 = vmatpush.msra.mxu0 %v881
    %3448 = vmatpush.msra.mxu0 %v873
    %3449 = vmatpush.msra.mxu0 %v865
    %3450 = vmatpush.msra.mxu0 %v857
    %3451 = vmatpush.msra.mxu0 %v849
    %3452 = vmatpush.msra.mxu0 %v841
    %3453 = vmatpush.msra.mxu0 %v833
    %3454 = vmatmul.f32.gmra.mxu0 %v3137
    %v3455 = vpop.f32.mrf.mxu0
    %v3456 = vadd.f32 %v3436, %v3455
    %3457 = vdwg.mxu0
    %v3458 = vadd.f32 %v406, %v3176
    %v3459 = vadd.f32 %v447, %v3216
    %v3460 = vadd.f32 %v488, %v3256
    %v3461 = vadd.f32 %v529, %v3296
    %v3462 = vadd.f32 %v570, %v3336
    %v3463 = vadd.f32 %v611, %v3376
    %v3464 = vadd.f32 %v652, %v3416
    %v3465 = vadd.f32 %v693, %v3456
    %v3466 = vmul.f32 %v3458, 0.5
    %v3467 = vmul.f32 %v3459, 0.5
    %v3468 = vtanh.pop %v3466
    %v3469 = vtanh.pop %v3467
    %v3470 = vadd.f32 %v3468, 1.0
    %v3471 = vadd.f32 %v3469, 1.0
    %v3472 = vmul.f32 %v3470, 0.5
    %v3473 = vmul.f32 %v3471, 0.5
    %v3474 = vmul.f32 %v3460, 0.5
    %v3475 = vmul.f32 %v3461, 0.5
    %v3476 = vtanh.pop %v3474
    %v3477 = vtanh.pop %v3475
    %v3478 = vadd.f32 %v3476, 1.0
    %v3479 = vadd.f32 %v3477, 1.0
    %v3480 = vmul.f32 %v3478, 0.5
    %v3481 = vmul.f32 %v3479, 0.5
    %v3482 = vtanh.pop %v3462
    %v3483 = vtanh.pop %v3463
    %v3484 = vmul.f32 %v3464, 0.5
    %v3485 = vmul.f32 %v3465, 0.5
    %v3486 = vtanh.pop %v3484
    %v3487 = vtanh.pop %v3485
    %v3488 = vadd.f32 %v3486, 1.0
    %v3489 = vadd.f32 %v3487, 1.0
    %v3490 = vmul.f32 %v3488, 0.5
    %v3491 = vmul.f32 %v3489, 0.5
    %v3492 = vmul.f32 %v3480, %v3132
    %v3493 = vmul.f32 %v3481, %v3133
    %v3494 = vmul.f32 %v3472, %v3482
    %v3495 = vmul.f32 %v3473, %v3483
    %v3496 = vadd.f32 %v3492, %v3494
    %v3497 = vadd.f32 %v3493, %v3495
    %v3498 = vtanh.pop %v3496
    %v3499 = vtanh.pop %v3497
    %v3500 = vmul.f32 %v3490, %v3498
    %v3501 = vmul.f32 %v3491, %v3499
    %3502 = vmatpush.msra.mxu0 %v818
    %3503 = vmatpush.msra.mxu0 %v810
    %3504 = vmatpush.msra.mxu0 %v802
    %3505 = vmatpush.msra.mxu0 %v794
    %3506 = vmatpush.msra.mxu0 %v786
    %3507 = vmatpush.msra.mxu0 %v778
    %3508 = vmatpush.msra.mxu0 %v770
    %3509 = vmatpush.msra.mxu0 %v762
    %3510 = vmatpush.msra.mxu0 %v754
    %3511 = vmatpush.msra.mxu0 %v746
    %3512 = vmatpush.msra.mxu0 %v738
    %3513 = vmatpush.msra.mxu0 %v730
    %3514 = vmatpush.msra.mxu0 %v722
    %3515 = vmatpush.msra.mxu0 %v714
    %3516 = vmatpush.msra.mxu0 %v706
    %3517 = vmatpush.msra.mxu0 %v698
    %3518 = vmatmul.f32.gmra.mxu0 %v3500
    %v3519 = vpop.f32.mrf.mxu0
    %v3520 = vadd.f32 0.0, %v3519
    %3521 = vdwg.mxu0
    %3522 = vmatpush.msra.mxu0 %v946
    %3523 = vmatpush.msra.mxu0 %v938
    %3524 = vmatpush.msra.mxu0 %v930
    %3525 = vmatpush.msra.mxu0 %v922
    %3526 = vmatpush.msra.mxu0 %v914
    %3527 = vmatpush.msra.mxu0 %v906
    %3528 = vmatpush.msra.mxu0 %v898
    %3529 = vmatpush.msra.mxu0 %v890
    %3530 = vmatpush.msra.mxu0 %v882
    %3531 = vmatpush.msra.mxu0 %v874
    %3532 = vmatpush.msra.mxu0 %v866
    %3533 = vmatpush.msra.mxu0 %v858
    %3534 = vmatpush.msra.mxu0 %v850
    %3535 = vmatpush.msra.mxu0 %v842
    %3536 = vmatpush.msra.mxu0 %v834
    %3537 = vmatpush.msra.mxu0 %v826
    %3538 = vmatmul.f32.gmra.mxu0 %v3501
    %v3539 = vpop.f32.mrf.mxu0
    %v3540 = vadd.f32 %v3520, %v3539
    %3541 = vdwg.mxu0
    %3542 = vmatpush.msra.mxu0 %v819
    %3543 = vmatpush.msra.mxu0 %v811
    %3544 = vmatpush.msra.mxu0 %v803
    %3545 = vmatpush.msra.mxu0 %v795
    %3546 = vmatpush.msra.mxu0 %v787
    %3547 = vmatpush.msra.mxu0 %v779
    %3548 = vmatpush.msra.mxu0 %v771
    %3549 = vmatpush.msra.mxu0 %v763
    %3550 = vmatpush.msra.mxu0 %v755
    %3551 = vmatpush.msra.mxu0 %v747
    %3552 = vmatpush.msra.mxu0 %v739
    %3553 = vmatpush.msra.mxu0 %v731
    %3554 = vmatpush.msra.mxu0 %v723
    %3555 = vmatpush.msra.mxu0 %v715
    %3556 = vmatpush.msra.mxu0 %v707
    %3557 = vmatpush.msra.mxu0 %v699
    %3558 = vmatmul.f32.gmra.mxu0 %v3500
    %v3559 = vpop.f32.mrf.mxu0
    %v3560 = vadd.f32 0.0, %v3559
    %3561 = vdwg.mxu0
    %3562 = vmatpush.msra.mxu0 %v947
    %3563 = vmatpush.msra.mxu0 %v939
    %3564 = vmatpush.msra.mxu0 %v931
    %3565 = vmatpush.msra.mxu0 %v923
    %3566 = vmatpush.msra.mxu0 %v915
    %3567 = vmatpush.msra.mxu0 %v907
    %3568 = vmatpush.msra.mxu0 %v899
    %3569 = vmatpush.msra.mxu0 %v891
    %3570 = vmatpush.msra.mxu0 %v883
    %3571 = vmatpush.msra.mxu0 %v875
    %3572 = vmatpush.msra.mxu0 %v867
    %3573 = vmatpush.msra.mxu0 %v859
    %3574 = vmatpush.msra.mxu0 %v851
    %3575 = vmatpush.msra.mxu0 %v843
    %3576 = vmatpush.msra.mxu0 %v835
    %3577 = vmatpush.msra.mxu0 %v827
    %3578 = vmatmul.f32.gmra.mxu0 %v3501
    %v3579 = vpop.f32.mrf.mxu0
    %v3580 = vadd.f32 %v3560, %v3579
    %3581 = vdwg.mxu0
    %3582 = vmatpush.msra.mxu0 %v820
    %3583 = vmatpush.msra.mxu0 %v812
    %3584 = vmatpush.msra.mxu0 %v804
    %3585 = vmatpush.msra.mxu0 %v796
    %3586 = vmatpush.msra.mxu0 %v788
    %3587 = vmatpush.msra.mxu0 %v780
    %3588 = vmatpush.msra.mxu0 %v772
    %3589 = vmatpush.msra.mxu0 %v764
    %3590 = vmatpush.msra.mxu0 %v756
    %3591 = vmatpush.msra.mxu0 %v748
    %3592 = vmatpush.msra.mxu0 %v740
    %3593 = vmatpush.msra.mxu0 %v732
    %3594 = vmatpush.msra.mxu0 %v724
    %3595 = vmatpush.msra.mxu0 %v716
    %3596 = vmatpush.msra.mxu0 %v708
    %3597 = vmatpush.msra.mxu0 %v700
    %3598 = vmatmul.f32.gmra.mxu0 %v3500
    %v3599 = vpop.f32.mrf.mxu0
    %v3600 = vadd.f32 0.0, %v3599
    %3601 = vdwg.mxu0
    %3602 = vmatpush.msra.mxu0 %v948
    %3603 = vmatpush.msra.mxu0 %v940
    %3604 = vmatpush.msra.mxu0 %v932
    %3605 = vmatpush.msra.mxu0 %v924
    %3606 = vmatpush.msra.mxu0 %v916
    %3607 = vmatpush.msra.mxu0 %v908
    %3608 = vmatpush.msra.mxu0 %v900
    %3609 = vmatpush.msra.mxu0 %v892
    %3610 = vmatpush.msra.mxu0 %v884
    %3611 = vmatpush.msra.mxu0 %v876
    %3612 = vmatpush.msra.mxu0 %v868
    %3613 = vmatpush.msra.mxu0 %v860
    %3614 = vmatpush.msra.mxu0 %v852
    %3615 = vmatpush.msra.mxu0 %v844
    %3616 = vmatpush.msra.mxu0 %v836
    %3617 = vmatpush.msra.mxu0 %v828
    %3618 = vmatmul.f32.gmra.mxu0 %v3501
    %v3619 = vpop.f32.mrf.mxu0
    %v3620 = vadd.f32 %v3600, %v3619
    %3621 = vdwg.mxu0
    %3622 = vmatpush.msra.mxu0 %v821
    %3623 = vmatpush.msra.mxu0 %v813
    %3624 = vmatpush.msra.mxu0 %v805
    %3625 = vmatpush.msra.mxu0 %v797
    %3626 = vmatpush.msra.mxu0 %v789
    %3627 = vmatpush.msra.mxu0 %v781
    %3628 = vmatpush.msra.mxu0 %v773
    %3629 = vmatpush.msra.mxu0 %v765
    %3630 = vmatpush.msra.mxu0 %v757
    %3631 = vmatpush.msra.mxu0 %v749
    %3632 = vmatpush.msra.mxu0 %v741
    %3633 = vmatpush.msra.mxu0 %v733
    %3634 = vmatpush.msra.mxu0 %v725
    %3635 = vmatpush.msra.mxu0 %v717
    %3636 = vmatpush.msra.mxu0 %v709
    %3637 = vmatpush.msra.mxu0 %v701
    %3638 = vmatmul.f32.gmra.mxu0 %v3500
    %v3639 = vpop.f32.mrf.mxu0
    %v3640 = vadd.f32 0.0, %v3639
    %3641 = vdwg.mxu0
    %3642 = vmatpush.msra.mxu0 %v949
    %3643 = vmatpush.msra.mxu0 %v941
    %3644 = vmatpush.msra.mxu0 %v933
    %3645 = vmatpush.msra.mxu0 %v925
    %3646 = vmatpush.msra.mxu0 %v917
    %3647 = vmatpush.msra.mxu0 %v909
    %3648 = vmatpush.msra.mxu0 %v901
    %3649 = vmatpush.msra.mxu0 %v893
    %3650 = vmatpush.msra.mxu0 %v885
    %3651 = vmatpush.msra.mxu0 %v877
    %3652 = vmatpush.msra.mxu0 %v869
    %3653 = vmatpush.msra.mxu0 %v861
    %3654 = vmatpush.msra.mxu0 %v853
    %3655 = vmatpush.msra.mxu0 %v845
    %3656 = vmatpush.msra.mxu0 %v837
    %3657 = vmatpush.msra.mxu0 %v829
    %3658 = vmatmul.f32.gmra.mxu0 %v3501
    %v3659 = vpop.f32.mrf.mxu0
    %v3660 = vadd.f32 %v3640, %v3659
    %3661 = vdwg.mxu0
    %3662 = vmatpush.msra.mxu0 %v822
    %3663 = vmatpush.msra.mxu0 %v814
    %3664 = vmatpush.msra.mxu0 %v806
    %3665 = vmatpush.msra.mxu0 %v798
    %3666 = vmatpush.msra.mxu0 %v790
    %3667 = vmatpush.msra.mxu0 %v782
    %3668 = vmatpush.msra.mxu0 %v774
    %3669 = vmatpush.msra.mxu0 %v766
    %3670 = vmatpush.msra.mxu0 %v758
    %3671 = vmatpush.msra.mxu0 %v750
    %3672 = vmatpush.msra.mxu0 %v742
    %3673 = vmatpush.msra.mxu0 %v734
    %3674 = vmatpush.msra.mxu0 %v726
    %3675 = vmatpush.msra.mxu0 %v718
    %3676 = vmatpush.msra.mxu0 %v710
    %3677 = vmatpush.msra.mxu0 %v702
    %3678 = vmatmul.f32.gmra.mxu0 %v3500
    %v3679 = vpop.f32.mrf.mxu0
    %v3680 = vadd.f32 0.0, %v3679
    %3681 = vdwg.mxu0
    %3682 = vmatpush.msra.mxu0 %v950
    %3683 = vmatpush.msra.mxu0 %v942
    %3684 = vmatpush.msra.mxu0 %v934
    %3685 = vmatpush.msra.mxu0 %v926
    %3686 = vmatpush.msra.mxu0 %v918
    %3687 = vmatpush.msra.mxu0 %v910
    %3688 = vmatpush.msra.mxu0 %v902
    %3689 = vmatpush.msra.mxu0 %v894
    %3690 = vmatpush.msra.mxu0 %v886
    %3691 = vmatpush.msra.mxu0 %v878
    %3692 = vmatpush.msra.mxu0 %v870
    %3693 = vmatpush.msra.mxu0 %v862
    %3694 = vmatpush.msra.mxu0 %v854
    %3695 = vmatpush.msra.mxu0 %v846
    %3696 = vmatpush.msra.mxu0 %v838
    %3697 = vmatpush.msra.mxu0 %v830
    %3698 = vmatmul.f32.gmra.mxu0 %v3501
    %v3699 = vpop.f32.mrf.mxu0
    %v3700 = vadd.f32 %v3680, %v3699
    %3701 = vdwg.mxu0
    %3702 = vmatpush.msra.mxu0 %v823
    %3703 = vmatpush.msra.mxu0 %v815
    %3704 = vmatpush.msra.mxu0 %v807
    %3705 = vmatpush.msra.mxu0 %v799
    %3706 = vmatpush.msra.mxu0 %v791
    %3707 = vmatpush.msra.mxu0 %v783
    %3708 = vmatpush.msra.mxu0 %v775
    %3709 = vmatpush.msra.mxu0 %v767
    %3710 = vmatpush.msra.mxu0 %v759
    %3711 = vmatpush.msra.mxu0 %v751
    %3712 = vmatpush.msra.mxu0 %v743
    %3713 = vmatpush.msra.mxu0 %v735
    %3714 = vmatpush.msra.mxu0 %v727
    %3715 = vmatpush.msra.mxu0 %v719
    %3716 = vmatpush.msra.mxu0 %v711
    %3717 = vmatpush.msra.mxu0 %v703
    %3718 = vmatmul.f32.gmra.mxu0 %v3500
    %v3719 = vpop.f32.mrf.mxu0
    %v3720 = vadd.f32 0.0, %v3719
    %3721 = vdwg.mxu0
    %3722 = vmatpush.msra.mxu0 %v951
    %3723 = vmatpush.msra.mxu0 %v943
    %3724 = vmatpush.msra.mxu0 %v935
    %3725 = vmatpush.msra.mxu0 %v927
    %3726 = vmatpush.msra.mxu0 %v919
    %3727 = vmatpush.msra.mxu0 %v911
    %3728 = vmatpush.msra.mxu0 %v903
    %3729 = vmatpush.msra.mxu0 %v895
    %3730 = vmatpush.msra.mxu0 %v887
    %3731 = vmatpush.msra.mxu0 %v879
    %3732 = vmatpush.msra.mxu0 %v871
    %3733 = vmatpush.msra.mxu0 %v863
    %3734 = vmatpush.msra.mxu0 %v855
    %3735 = vmatpush.msra.mxu0 %v847
    %3736 = vmatpush.msra.mxu0 %v839
    %3737 = vmatpush.msra.mxu0 %v831
    %3738 = vmatmul.f32.gmra.mxu0 %v3501
    %v3739 = vpop.f32.mrf.mxu0
    %v3740 = vadd.f32 %v3720, %v3739
    %3741 = vdwg.mxu0
    %3742 = vmatpush.msra.mxu0 %v824
    %3743 = vmatpush.msra.mxu0 %v816
    %3744 = vmatpush.msra.mxu0 %v808
    %3745 = vmatpush.msra.mxu0 %v800
    %3746 = vmatpush.msra.mxu0 %v792
    %3747 = vmatpush.msra.mxu0 %v784
    %3748 = vmatpush.msra.mxu0 %v776
    %3749 = vmatpush.msra.mxu0 %v768
    %3750 = vmatpush.msra.mxu0 %v760
    %3751 = vmatpush.msra.mxu0 %v752
    %3752 = vmatpush.msra.mxu0 %v744
    %3753 = vmatpush.msra.mxu0 %v736
    %3754 = vmatpush.msra.mxu0 %v728
    %3755 = vmatpush.msra.mxu0 %v720
    %3756 = vmatpush.msra.mxu0 %v712
    %3757 = vmatpush.msra.mxu0 %v704
    %3758 = vmatmul.f32.gmra.mxu0 %v3500
    %v3759 = vpop.f32.mrf.mxu0
    %v3760 = vadd.f32 0.0, %v3759
    %3761 = vdwg.mxu0
    %3762 = vmatpush.msra.mxu0 %v952
    %3763 = vmatpush.msra.mxu0 %v944
    %3764 = vmatpush.msra.mxu0 %v936
    %3765 = vmatpush.msra.mxu0 %v928
    %3766 = vmatpush.msra.mxu0 %v920
    %3767 = vmatpush.msra.mxu0 %v912
    %3768 = vmatpush.msra.mxu0 %v904
    %3769 = vmatpush.msra.mxu0 %v896
    %3770 = vmatpush.msra.mxu0 %v888
    %3771 = vmatpush.msra.mxu0 %v880
    %3772 = vmatpush.msra.mxu0 %v872
    %3773 = vmatpush.msra.mxu0 %v864
    %3774 = vmatpush.msra.mxu0 %v856
    %3775 = vmatpush.msra.mxu0 %v848
    %3776 = vmatpush.msra.mxu0 %v840
    %3777 = vmatpush.msra.mxu0 %v832
    %3778 = vmatmul.f32.gmra.mxu0 %v3501
    %v3779 = vpop.f32.mrf.mxu0
    %v3780 = vadd.f32 %v3760, %v3779
    %3781 = vdwg.mxu0
    %3782 = vmatpush.msra.mxu0 %v825
    %3783 = vmatpush.msra.mxu0 %v817
    %3784 = vmatpush.msra.mxu0 %v809
    %3785 = vmatpush.msra.mxu0 %v801
    %3786 = vmatpush.msra.mxu0 %v793
    %3787 = vmatpush.msra.mxu0 %v785
    %3788 = vmatpush.msra.mxu0 %v777
    %3789 = vmatpush.msra.mxu0 %v769
    %3790 = vmatpush.msra.mxu0 %v761
    %3791 = vmatpush.msra.mxu0 %v753
    %3792 = vmatpush.msra.mxu0 %v745
    %3793 = vmatpush.msra.mxu0 %v737
    %3794 = vmatpush.msra.mxu0 %v729
    %3795 = vmatpush.msra.mxu0 %v721
    %3796 = vmatpush.msra.mxu0 %v713
    %3797 = vmatpush.msra.mxu0 %v705
    %3798 = vmatmul.f32.gmra.mxu0 %v3500
    %v3799 = vpop.f32.mrf.mxu0
    %v3800 = vadd.f32 0.0, %v3799
    %3801 = vdwg.mxu0
    %3802 = vmatpush.msra.mxu0 %v953
    %3803 = vmatpush.msra.mxu0 %v945
    %3804 = vmatpush.msra.mxu0 %v937
    %3805 = vmatpush.msra.mxu0 %v929
    %3806 = vmatpush.msra.mxu0 %v921
    %3807 = vmatpush.msra.mxu0 %v913
    %3808 = vmatpush.msra.mxu0 %v905
    %3809 = vmatpush.msra.mxu0 %v897
    %3810 = vmatpush.msra.mxu0 %v889
    %3811 = vmatpush.msra.mxu0 %v881
    %3812 = vmatpush.msra.mxu0 %v873
    %3813 = vmatpush.msra.mxu0 %v865
    %3814 = vmatpush.msra.mxu0 %v857
    %3815 = vmatpush.msra.mxu0 %v849
    %3816 = vmatpush.msra.mxu0 %v841
    %3817 = vmatpush.msra.mxu0 %v833
    %3818 = vmatmul.f32.gmra.mxu0 %v3501
    %v3819 = vpop.f32.mrf.mxu0
    %v3820 = vadd.f32 %v3800, %v3819
    %3821 = vdwg.mxu0
    %v3822 = vadd.f32 %v409, %v3540
    %v3823 = vadd.f32 %v450, %v3580
    %v3824 = vadd.f32 %v491, %v3620
    %v3825 = vadd.f32 %v532, %v3660
    %v3826 = vadd.f32 %v573, %v3700
    %v3827 = vadd.f32 %v614, %v3740
    %v3828 = vadd.f32 %v655, %v3780
    %v3829 = vadd.f32 %v696, %v3820
    %v3830 = vmul.f32 %v3822, 0.5
    %v3831 = vmul.f32 %v3823, 0.5
    %v3832 = vtanh.pop %v3830
    %v3833 = vtanh.pop %v3831
    %v3834 = vadd.f32 %v3832, 1.0
    %v3835 = vadd.f32 %v3833, 1.0
    %v3836 = vmul.f32 %v3834, 0.5
    %v3837 = vmul.f32 %v3835, 0.5
    %v3838 = vmul.f32 %v3824, 0.5
    %v3839 = vmul.f32 %v3825, 0.5
    %v3840 = vtanh.pop %v3838
    %v3841 = vtanh.pop %v3839
    %v3842 = vadd.f32 %v3840, 1.0
    %v3843 = vadd.f32 %v3841, 1.0
    %v3844 = vmul.f32 %v3842, 0.5
    %v3845 = vmul.f32 %v3843, 0.5
    %v3846 = vtanh.pop %v3826
    %v3847 = vtanh.pop %v3827
    %v3848 = vmul.f32 %v3828, 0.5
    %v3849 = vmul.f32 %v3829, 0.5
    %v3850 = vtanh.pop %v3848
    %v3851 = vtanh.pop %v3849
    %v3852 = vadd.f32 %v3850, 1.0
    %v3853 = vadd.f32 %v3851, 1.0
    %v3854 = vmul.f32 %v3852, 0.5
    %v3855 = vmul.f32 %v3853, 0.5
    %v3856 = vmul.f32 %v3844, %v3496
    %v3857 = vmul.f32 %v3845, %v3497
    %v3858 = vmul.f32 %v3836, %v3846
    %v3859 = vmul.f32 %v3837, %v3847
    %v3860 = vadd.f32 %v3856, %v3858
    %v3861 = vadd.f32 %v3857, %v3859
    %v3862 = vtanh.pop %v3860
    %v3863 = vtanh.pop %v3861
    %v3864 = vmul.f32 %v3854, %v3862
    %v3865 = vmul.f32 %v3855, %v3863
    %v3866 = vld [vmem:[#allocation7] sm:$0xff]
    %v3867 = vld [vmem:[#allocation7 + $0x8] sm:$0xff]
    %v3868 = vld [vmem:[#allocation7 + $0x10] sm:$0xff]
    %v3869 = vld [vmem:[#allocation7 + $0x18] sm:$0xff]
    %v3870 = vld [vmem:[#allocation7 + $0x20] sm:$0xff]
    %v3871 = vld [vmem:[#allocation7 + $0x28] sm:$0xff]
    %v3872 = vld [vmem:[#allocation7 + $0x30] sm:$0xff]
    %v3873 = vld [vmem:[#allocation7 + $0x38] sm:$0xff]
    %v3874 = vld [vmem:[#allocation7 + $0x40] sm:$0xff]
    %v3875 = vld [vmem:[#allocation7 + $0x48] sm:$0xff]
    %v3876 = vld [vmem:[#allocation7 + $0x50] sm:$0xff]
    %v3877 = vld [vmem:[#allocation7 + $0x58] sm:$0xff]
    %v3878 = vld [vmem:[#allocation7 + $0x60] sm:$0xff]
    %v3879 = vld [vmem:[#allocation7 + $0x68] sm:$0xff]
    %v3880 = vld [vmem:[#allocation7 + $0x70] sm:$0xff]
    %v3881 = vld [vmem:[#allocation7 + $0x78] sm:$0xff]
    %v3882 = vld [vmem:[#allocation7 + $0x80] sm:$0xff]
    %v3883 = vld [vmem:[#allocation7 + $0x88] sm:$0xff]
    %v3884 = vld [vmem:[#allocation7 + $0x90] sm:$0xff]
    %v3885 = vld [vmem:[#allocation7 + $0x98] sm:$0xff]
    %v3886 = vld [vmem:[#allocation7 + $0xa0] sm:$0xff]
    %v3887 = vld [vmem:[#allocation7 + $0xa8] sm:$0xff]
    %v3888 = vld [vmem:[#allocation7 + $0xb0] sm:$0xff]
    %v3889 = vld [vmem:[#allocation7 + $0xb8] sm:$0xff]
    %v3890 = vld [vmem:[#allocation7 + $0xc0] sm:$0xff]
    %v3891 = vld [vmem:[#allocation7 + $0xc8] sm:$0xff]
    %v3892 = vld [vmem:[#allocation7 + $0xd0] sm:$0xff]
    %v3893 = vld [vmem:[#allocation7 + $0xd8] sm:$0xff]
    %v3894 = vld [vmem:[#allocation7 + $0xe0] sm:$0xff]
    %v3895 = vld [vmem:[#allocation7 + $0xe8] sm:$0xff]
    %v3896 = vld [vmem:[#allocation7 + $0xf0] sm:$0xff]
    %v3897 = vld [vmem:[#allocation7 + $0xf8] sm:$0xff]
    %v3898 = vld [vmem:[#allocation7 + $0x100] sm:$0xff]
    %v3899 = vld [vmem:[#allocation7 + $0x108] sm:$0xff]
    %v3900 = vld [vmem:[#allocation7 + $0x110] sm:$0xff]
    %v3901 = vld [vmem:[#allocation7 + $0x118] sm:$0xff]
    %v3902 = vld [vmem:[#allocation7 + $0x120] sm:$0xff]
    %v3903 = vld [vmem:[#allocation7 + $0x128] sm:$0xff]
    %v3904 = vld [vmem:[#allocation7 + $0x130] sm:$0xff]
    %v3905 = vld [vmem:[#allocation7 + $0x138] sm:$0xff]
    %v3906 = vld [vmem:[#allocation7 + $0x140] sm:$0xff]
    %v3907 = vld [vmem:[#allocation7 + $0x148] sm:$0xff]
    %v3908 = vld [vmem:[#allocation7 + $0x150] sm:$0xff]
    %v3909 = vld [vmem:[#allocation7 + $0x158] sm:$0xff]
    %v3910 = vld [vmem:[#allocation7 + $0x160] sm:$0xff]
    %v3911 = vld [vmem:[#allocation7 + $0x168] sm:$0xff]
    %v3912 = vld [vmem:[#allocation7 + $0x170] sm:$0xff]
    %v3913 = vld [vmem:[#allocation7 + $0x178] sm:$0xff]
    %v3914 = vld [vmem:[#allocation7 + $0x180] sm:$0xff]
    %v3915 = vld [vmem:[#allocation7 + $0x188] sm:$0xff]
    %v3916 = vld [vmem:[#allocation7 + $0x190] sm:$0xff]
    %v3917 = vld [vmem:[#allocation7 + $0x198] sm:$0xff]
    %v3918 = vld [vmem:[#allocation7 + $0x1a0] sm:$0xff]
    %v3919 = vld [vmem:[#allocation7 + $0x1a8] sm:$0xff]
    %v3920 = vld [vmem:[#allocation7 + $0x1b0] sm:$0xff]
    %v3921 = vld [vmem:[#allocation7 + $0x1b8] sm:$0xff]
    %v3922 = vld [vmem:[#allocation7 + $0x1c0] sm:$0xff]
    %v3923 = vld [vmem:[#allocation7 + $0x1c8] sm:$0xff]
    %v3924 = vld [vmem:[#allocation7 + $0x1d0] sm:$0xff]
    %v3925 = vld [vmem:[#allocation7 + $0x1d8] sm:$0xff]
    %v3926 = vld [vmem:[#allocation7 + $0x1e0] sm:$0xff]
    %v3927 = vld [vmem:[#allocation7 + $0x1e8] sm:$0xff]
    %v3928 = vld [vmem:[#allocation7 + $0x1f0] sm:$0xff]
    %v3929 = vld [vmem:[#allocation7 + $0x1f8] sm:$0xff]
    %v3930 = vld [vmem:[%s6] sm:$0x3]
    %v3932 = vperm.slane %v3930, 0
    %v3933 = vperm.slane %v3930, 1
    %3936 = vmatpush.msra.mxu0 %v3896
    %3937 = vmatpush.msra.mxu0 %v3894
    %3938 = vmatpush.msra.mxu0 %v3892
    %3939 = vmatpush.msra.mxu0 %v3890
    %3940 = vmatpush.msra.mxu0 %v3888
    %3941 = vmatpush.msra.mxu0 %v3886
    %3942 = vmatpush.msra.mxu0 %v3884
    %3943 = vmatpush.msra.mxu0 %v3882
    %3944 = vmatpush.msra.mxu0 %v3880
    %3945 = vmatpush.msra.mxu0 %v3878
    %3946 = vmatpush.msra.mxu0 %v3876
    %3947 = vmatpush.msra.mxu0 %v3874
    %3948 = vmatpush.msra.mxu0 %v3872
    %3949 = vmatpush.msra.mxu0 %v3870
    %3950 = vmatpush.msra.mxu0 %v3868
    %3951 = vmatpush.msra.mxu0 %v3866
    %3952 = vmatmul.f32.gmra.mxu0 %v3864
    %v3953 = vpop.f32.mrf.mxu0
    %v3954 = vadd.f32 %v3932, %v3953
    %3955 = vdwg.mxu0
    %3956 = vmatpush.msra.mxu0 %v3928
    %3957 = vmatpush.msra.mxu0 %v3926
    %3958 = vmatpush.msra.mxu0 %v3924
    %3959 = vmatpush.msra.mxu0 %v3922
    %3960 = vmatpush.msra.mxu0 %v3920
    %3961 = vmatpush.msra.mxu0 %v3918
    %3962 = vmatpush.msra.mxu0 %v3916
    %3963 = vmatpush.msra.mxu0 %v3914
    %3964 = vmatpush.msra.mxu0 %v3912
    %3965 = vmatpush.msra.mxu0 %v3910
    %3966 = vmatpush.msra.mxu0 %v3908
    %3967 = vmatpush.msra.mxu0 %v3906
    %3968 = vmatpush.msra.mxu0 %v3904
    %3969 = vmatpush.msra.mxu0 %v3902
    %3970 = vmatpush.msra.mxu0 %v3900
    %3971 = vmatpush.msra.mxu0 %v3898
    %3972 = vmatmul.f32.gmra.mxu0 %v3865
    %v3973 = vpop.f32.mrf.mxu0
    %v3974 = vadd.f32 %v3954, %v3973
    %3975 = vdwg.mxu0
    %3976 = vmatpush.msra.mxu0 %v3897
    %3977 = vmatpush.msra.mxu0 %v3895
    %3978 = vmatpush.msra.mxu0 %v3893
    %3979 = vmatpush.msra.mxu0 %v3891
    %3980 = vmatpush.msra.mxu0 %v3889
    %3981 = vmatpush.msra.mxu0 %v3887
    %3982 = vmatpush.msra.mxu0 %v3885
    %3983 = vmatpush.msra.mxu0 %v3883
    %3984 = vmatpush.msra.mxu0 %v3881
    %3985 = vmatpush.msra.mxu0 %v3879
    %3986 = vmatpush.msra.mxu0 %v3877
    %3987 = vmatpush.msra.mxu0 %v3875
    %3988 = vmatpush.msra.mxu0 %v3873
    %3989 = vmatpush.msra.mxu0 %v3871
    %3990 = vmatpush.msra.mxu0 %v3869
    %3991 = vmatpush.msra.mxu0 %v3867
    %3992 = vmatmul.f32.gmra.mxu0 %v3864
    %v3993 = vpop.f32.mrf.mxu0
    %v3994 = vadd.f32 %v3933, %v3993
    %3995 = vdwg.mxu0
    %3996 = vmatpush.msra.mxu0 %v3929
    %3997 = vmatpush.msra.mxu0 %v3927
    %3998 = vmatpush.msra.mxu0 %v3925
    %3999 = vmatpush.msra.mxu0 %v3923
    %4000 = vmatpush.msra.mxu0 %v3921
    %4001 = vmatpush.msra.mxu0 %v3919
    %4002 = vmatpush.msra.mxu0 %v3917
    %4003 = vmatpush.msra.mxu0 %v3915
    %4004 = vmatpush.msra.mxu0 %v3913
    %4005 = vmatpush.msra.mxu0 %v3911
    %4006 = vmatpush.msra.mxu0 %v3909
    %4007 = vmatpush.msra.mxu0 %v3907
    %4008 = vmatpush.msra.mxu0 %v3905
    %4009 = vmatpush.msra.mxu0 %v3903
    %4010 = vmatpush.msra.mxu0 %v3901
    %4011 = vmatpush.msra.mxu0 %v3899
    %4012 = vmatmul.f32.gmra.mxu0 %v3865
    %v4013 = vpop.f32.mrf.mxu0
    %v4014 = vadd.f32 %v3994, %v4013
    %4015 = vdwg.mxu0
    %v4016 = vmax.f32 %v3974, 0.0
    %v4017 = vmax.f32 %v4014, 0.0
    %v4018 = vld [vmem:[#allocation8] sm:$0xff]
    %v4019 = vld [vmem:[#allocation8 + $0x8] sm:$0xff]
    %v4020 = vld [vmem:[#allocation8 + $0x10] sm:$0xff]
    %v4021 = vld [vmem:[#allocation8 + $0x18] sm:$0xff]
    %v4022 = vld [vmem:[#allocation8 + $0x20] sm:$0xff]
    %v4023 = vld [vmem:[#allocation8 + $0x28] sm:$0xff]
    %v4024 = vld [vmem:[#allocation8 + $0x30] sm:$0xff]
    %v4025 = vld [vmem:[#allocation8 + $0x38] sm:$0xff]
    %v4026 = vld [vmem:[#allocation8 + $0x40] sm:$0xff]
    %v4027 = vld [vmem:[#allocation8 + $0x48] sm:$0xff]
    %v4028 = vld [vmem:[#allocation8 + $0x50] sm:$0xff]
    %v4029 = vld [vmem:[#allocation8 + $0x58] sm:$0xff]
    %v4030 = vld [vmem:[#allocation8 + $0x60] sm:$0xff]
    %v4031 = vld [vmem:[#allocation8 + $0x68] sm:$0xff]
    %v4032 = vld [vmem:[#allocation8 + $0x70] sm:$0xff]
    %v4033 = vld [vmem:[#allocation8 + $0x78] sm:$0xff]
    %v4034 = vld [vmem:[#allocation8 + $0x80] sm:$0xff]
    %v4035 = vld [vmem:[#allocation8 + $0x88] sm:$0xff]
    %v4036 = vld [vmem:[#allocation8 + $0x90] sm:$0xff]
    %v4037 = vld [vmem:[#allocation8 + $0x98] sm:$0xff]
    %v4038 = vld [vmem:[#allocation8 + $0xa0] sm:$0xff]
    %v4039 = vld [vmem:[#allocation8 + $0xa8] sm:$0xff]
    %v4040 = vld [vmem:[#allocation8 + $0xb0] sm:$0xff]
    %v4041 = vld [vmem:[#allocation8 + $0xb8] sm:$0xff]
    %v4042 = vld [vmem:[#allocation8 + $0xc0] sm:$0xff]
    %v4043 = vld [vmem:[#allocation8 + $0xc8] sm:$0xff]
    %v4044 = vld [vmem:[#allocation8 + $0xd0] sm:$0xff]
    %v4045 = vld [vmem:[#allocation8 + $0xd8] sm:$0xff]
    %v4046 = vld [vmem:[#allocation8 + $0xe0] sm:$0xff]
    %v4047 = vld [vmem:[#allocation8 + $0xe8] sm:$0xff]
    %v4048 = vld [vmem:[#allocation8 + $0xf0] sm:$0xff]
    %v4049 = vld [vmem:[#allocation8 + $0xf8] sm:$0xff]
    %v4050 = vld [vmem:[%s8] sm:$0x1]
    %v4052 = vperm.slane %v4050, 0
    %4054 = vmatpush.msra.mxu0 %v4033
    %4055 = vmatpush.msra.mxu0 %v4032
    %4056 = vmatpush.msra.mxu0 %v4031
    %4057 = vmatpush.msra.mxu0 %v4030
    %4058 = vmatpush.msra.mxu0 %v4029
    %4059 = vmatpush.msra.mxu0 %v4028
    %4060 = vmatpush.msra.mxu0 %v4027
    %4061 = vmatpush.msra.mxu0 %v4026
    %4062 = vmatpush.msra.mxu0 %v4025
    %4063 = vmatpush.msra.mxu0 %v4024
    %4064 = vmatpush.msra.mxu0 %v4023
    %4065 = vmatpush.msra.mxu0 %v4022
    %4066 = vmatpush.msra.mxu0 %v4021
    %4067 = vmatpush.msra.mxu0 %v4020
    %4068 = vmatpush.msra.mxu0 %v4019
    %4069 = vmatpush.msra.mxu0 %v4018
    %4070 = vmatmul.f32.gmra.mxu0 %v4016
    %v4071 = vpop.f32.mrf.mxu0
    %v4072 = vadd.f32 %v4052, %v4071
    %4073 = vdwg.mxu0
    %4074 = vmatpush.msra.mxu0 %v4049
    %4075 = vmatpush.msra.mxu0 %v4048
    %4076 = vmatpush.msra.mxu0 %v4047
    %4077 = vmatpush.msra.mxu0 %v4046
    %4078 = vmatpush.msra.mxu0 %v4045
    %4079 = vmatpush.msra.mxu0 %v4044
    %4080 = vmatpush.msra.mxu0 %v4043
    %4081 = vmatpush.msra.mxu0 %v4042
    %4082 = vmatpush.msra.mxu0 %v4041
    %4083 = vmatpush.msra.mxu0 %v4040
    %4084 = vmatpush.msra.mxu0 %v4039
    %4085 = vmatpush.msra.mxu0 %v4038
    %4086 = vmatpush.msra.mxu0 %v4037
    %4087 = vmatpush.msra.mxu0 %v4036
    %4088 = vmatpush.msra.mxu0 %v4035
    %4089 = vmatpush.msra.mxu0 %v4034
    %4090 = vmatmul.f32.gmra.mxu0 %v4017
    %v4091 = vpop.f32.mrf.mxu0
    %v4092 = vadd.f32 %v4072, %v4091
    %4093 = vdwg.mxu0
    %4094 = vst [vmem:[#allocation10] sm:$0xff] %v4092
    // Predicated region
    $region54: #{tpu_custom_call.1} parent=1 // pred_check
      _
    $region55: #{tpu_custom_call.1} parent=1 // pred_check_branch
      %4096 = sbr.rel (0) target = $region57
    $region56: #{tpu_custom_call.1} parent=1 // pred_region
      %4098 = vsyncadd [#allocation4], 0
      %s4100 = sshll.u32 [#allocation10], 4
      %s4101 = int_to_ptr.vmem [resolvable:$true] %s4100
      %s4102 = sshll.u32 %s9, 4
      %s4103 = int_to_ptr.hbm [resolvable:$true] %s4102
      %4105 = dma.vmem_to_hbm [thread:$0]  %s4101, 128, %s4103, [#allocation4]
    $region57: #{tpu_custom_call.1} parent=1 // pred_fallthru
      _
    // Predicated region
    $region58: #{tpu_custom_call.1} parent=1 // pred_check
      _
    $region59: #{tpu_custom_call.1} parent=1 // pred_check_branch
      %4107 = sbr.rel (0) target = $region61
    $region60: #{tpu_custom_call.1} parent=1 // pred_region
      %4109 = dma.done [#allocation4], 128
    $region61: #{tpu_custom_call.1} parent=1 // pred_fallthru
      _
    %4110 = vsyncpa [#allocation3], 1
    %4111 = vsyncpa [#allocation6], 1
    %4112 = vsyncpa [#allocation9], 1
    %4113 = vsyncpa [#allocation4], 1

</llo_original>
